<compile_context>
chip_gen: v7x
topology: tpu7x:2x2x1
jax: 0.10.0
libtpu: 0.0.40
codegen_flags: <defaults>
</compile_context>

<pallas_src>
import math
from functools import partial

import jax
import jax.numpy as jnp
from jax import lax
from jax.experimental import pallas as pl
from jax.experimental.pallas import tpu as pltpu


# ----------------------------------------------------------------------------
# Fused Pallas kernel: all LSTM layers + FC head in one call (no grid).
# ----------------------------------------------------------------------------
def _make_fused_kernel(num_layers):
    def kernel(*refs):
        it = iter(refs)
        x0_proj_ref = next(it)                       # (T, B, 4H) layer-0 proj (bias folded in)
        whh0_ref = next(it)                          # (H, 4H)
        upper_layers = []
        for _ in range(num_layers - 1):
            upper_layers.append((next(it), next(it), next(it)))  # w_ih_t, w_hh_t, bias
        w1_ref, b1_ref, w2_ref, b2_ref = next(it), next(it), next(it), next(it)
        out_ref = next(it)                           # (B, O_pad) lane-dense output
        hseq_scr = next(it)                          # (T, B, H)  hidden seq of current layer
        proj_scr = next(it)                          # (T, B, 4H) hoisted proj for layers >= 1

        T, B, _ = x0_proj_ref.shape
        H = whh0_ref.shape[0]

        def run_recurrence(whh_ref, proj_ref):
            w_hh = whh_ref[...]                      # hoist weight load out of the time loop

            def step(t, carry):
                h, c = carry
                # Only one matmul on the serial critical path (input proj was hoisted).
                gates = proj_ref[t] + jnp.dot(h, w_hh,
                                              preferred_element_type=jnp.float32)  # (B, 4H)
                i_g = jax.nn.sigmoid(gates[:, 0 * H:1 * H])      # PyTorch gate order i,f,g,o
                f_g = jax.nn.sigmoid(gates[:, 1 * H:2 * H])
                g_g = jnp.tanh(gates[:, 2 * H:3 * H])
                o_g = jax.nn.sigmoid(gates[:, 3 * H:4 * H])
                c_new = f_g * c + i_g * g_g
                h_new = o_g * jnp.tanh(c_new)
                hseq_scr[t] = h_new                  # feeds next layer's hoisted projection
                return (h_new, c_new)

            zeros = jnp.zeros((B, H), jnp.float32)   # h0 = c0 = 0, matching the module
            h_last, _ = lax.fori_loop(0, T, step, (zeros, zeros), unroll=True)
            return h_last

        # ---- layer 0: input projection was precomputed outside the kernel ----
        h_last = run_recurrence(whh0_ref, x0_proj_ref)

        # ---- layers 1..L-1: hoist input projection off the serial chain ----
        for wih_ref, whh_ref, b_ref in upper_layers:
            w_ih = wih_ref[...]
            bias = b_ref[...]
            for t in range(T):                       # static unroll: T independent MXU dots
                proj_scr[t] = jnp.dot(hseq_scr[t], w_ih,
                                      preferred_element_type=jnp.float32) + bias
            # TODO(synk): inter-layer dropout of nn.LSTM not applied (p=0.0 / eval mode).
            h_last = run_recurrence(whh_ref, proj_scr)

        # ---- FC head: fc1 -> relu -> (dropout = identity at eval) -> fc2 ----
        z = jnp.dot(h_last, w1_ref[...], preferred_element_type=jnp.float32) + b1_ref[...]
        z = jnp.maximum(z, 0.0)
        out_ref[...] = (jnp.dot(z, w2_ref[...], preferred_element_type=jnp.float32)
                        + b2_ref[...])

    return kernel


# ----------------------------------------------------------------------------
# Parameter init (matches PyTorch nn.LSTM / nn.Linear layouts, pre-transposed)
# ----------------------------------------------------------------------------
def init_params(key, n_dim, hidden_dim, fc_dim, output_dim, num_layers):
    params = {"lstm": []}
    k = 1.0 / math.sqrt(hidden_dim)
    keys = jax.random.split(key, num_layers * 4 + 4)
    idx = 0
    for layer in range(num_layers):
        in_dim = n_dim if layer == 0 else hidden_dim
        w_ih = jax.random.uniform(keys[idx], (4 * hidden_dim, in_dim), jnp.float32, -k, k); idx += 1
        w_hh = jax.random.uniform(keys[idx], (4 * hidden_dim, hidden_dim), jnp.float32, -k, k); idx += 1
        b_ih = jax.random.uniform(keys[idx], (4 * hidden_dim,), jnp.float32, -k, k); idx += 1
        b_hh = jax.random.uniform(keys[idx], (4 * hidden_dim,), jnp.float32, -k, k); idx += 1
        params["lstm"].append({
            "w_ih_t": w_ih.T,                               # (in_dim, 4H)
            "w_hh_t": w_hh.T,                               # (H, 4H)
            "bias": (b_ih + b_hh)[None, :],                 # (1, 4H)
        })
    k1 = 1.0 / math.sqrt(hidden_dim)
    params["fc1_w_t"] = jax.random.uniform(keys[idx], (fc_dim, hidden_dim), jnp.float32, -k1, k1).T; idx += 1
    params["fc1_b"] = jax.random.uniform(keys[idx], (fc_dim,), jnp.float32, -k1, k1)[None, :]; idx += 1
    k2 = 1.0 / math.sqrt(fc_dim)
    params["fc2_w_t"] = jax.random.uniform(keys[idx], (output_dim * n_dim, fc_dim), jnp.float32, -k2, k2).T; idx += 1
    params["fc2_b"] = jax.random.uniform(keys[idx], (output_dim * n_dim,), jnp.float32, -k2, k2)[None, :]; idx += 1
    return params


# ----------------------------------------------------------------------------
# Forward: XLA pre/post plumbing + single fused Pallas kernel
# ----------------------------------------------------------------------------
@partial(jax.jit, static_argnames=("n_dim",))
def lstm_forecaster_forward(params, x, n_dim):
    """x: (B, T, n_dim) batch-first, like PyTorch. Returns (B, output_dim, n_dim)."""
    B, T, _ = x.shape
    x = x.astype(jnp.float32)
    lstm_params = params["lstm"]
    num_layers = len(lstm_params)
    H = lstm_params[0]["w_hh_t"].shape[0]

    # Hoisted layer-0 input projection for ALL timesteps: one MXU-friendly batched
    # matmul in XLA instead of T tiny matmuls inside the serial recurrence.
    l0 = lstm_params[0]
    x0_proj = jnp.einsum("btd,dg->btg", x, l0["w_ih_t"]) + l0["bias"]     # (B, T, 4H)
    x0_proj = jnp.transpose(x0_proj, (1, 0, 2))                           # (T, B, 4H) time-major

    # Lane-dense head output: pad fc2 out-features up to a multiple of 128.
    O = params["fc2_b"].shape[-1]
    O_pad = max(128, ((O + 127) // 128) * 128)
    w2_p = jnp.pad(params["fc2_w_t"], ((0, 0), (0, O_pad - O)))
    b2_p = jnp.pad(params["fc2_b"], ((0, 0), (0, O_pad - O)))

    args = [x0_proj, l0["w_hh_t"]]
    for lp in lstm_params[1:]:
        args += [lp["w_ih_t"], lp["w_hh_t"], lp["bias"]]
    args += [params["fc1_w_t"], params["fc1_b"], w2_p, b2_p]

    out_pad = pl.pallas_call(
        _make_fused_kernel(num_layers),
        out_shape=jax.ShapeDtypeStruct((B, O_pad), jnp.float32),
        scratch_shapes=[
            pltpu.VMEM((T, B, H), jnp.float32),        # hidden sequence of current layer
            pltpu.VMEM((T, B, 4 * H), jnp.float32),    # hoisted input proj for layers >= 1
        ],
    )(*args)

    return out_pad[:, :O].reshape(B, -1, n_dim)


if __name__ == "__main__":
    # Small, module-consistent shapes
    n_dim = 4
    hidden_dim = 32
    fc_dim = 32
    output_dim = 4
    num_layers = 2
    batch = 2
    seq = 8

    key = jax.random.PRNGKey(0)
    pkey, xkey = jax.random.split(key)
    params = init_params(pkey, n_dim, hidden_dim, fc_dim, output_dim, num_layers)
    x = jax.random.normal(xkey, (batch, seq, n_dim), dtype=jnp.float32)

    out = lstm_forecaster_forward(params, x, n_dim)
    jax.block_until_ready(out)
    assert out.shape == (batch, output_dim, n_dim), out.shape
    print("KERNEL_OK")
</pallas_src>

<mosaic_0001>
module attributes {stable_mosaic.version = 11 : i64} {
  func.func @kernel(%arg0: memref<8x2x128xf32, #tpu.memory_space<vmem>>, %arg1: memref<32x128xf32, #tpu.memory_space<vmem>>, %arg2: memref<32x128xf32, #tpu.memory_space<vmem>>, %arg3: memref<32x128xf32, #tpu.memory_space<vmem>>, %arg4: memref<1x128xf32, #tpu.memory_space<vmem>>, %arg5: memref<32x32xf32, #tpu.memory_space<vmem>>, %arg6: memref<1x32xf32, #tpu.memory_space<vmem>>, %arg7: memref<32x128xf32, #tpu.memory_space<vmem>>, %arg8: memref<1x128xf32, #tpu.memory_space<vmem>>, %arg9: memref<2x128xf32, #tpu.memory_space<vmem>>, %arg10: memref<8x2x32xf32, #tpu.memory_space<vmem>>, %arg11: memref<8x2x128xf32, #tpu.memory_space<vmem>>) attributes {dimension_semantics = [], scalar_prefetch = 0 : i64, scratch_operands = 2 : i64, tpu.core_type = #tpu.core_type<tc>} {
    %c0 = arith.constant 0 : index
    %c0_0 = arith.constant 0 : index
    %0 = vector.load %arg1[%c0, %c0_0] : memref<32x128xf32, #tpu.memory_space<vmem>>, vector<32x128xf32>
    %cst = arith.constant 0.000000e+00 : f32
    %1 = vector.broadcast %cst : f32 to vector<2x32xf32>
    %c0_i32 = arith.constant 0 : i32
    %2 = arith.index_cast %c0_i32 : i32 to index
    %c0_1 = arith.constant 0 : index
    %c0_2 = arith.constant 0 : index
    %3 = vector.load %arg0[%2, %c0_1, %c0_2] : memref<8x2x128xf32, #tpu.memory_space<vmem>>, vector<1x2x128xf32>
    %4 = vector.shape_cast %3 : vector<1x2x128xf32> to vector<2x128xf32>
    %cst_3 = arith.constant dense<0.000000e+00> : vector<2x128xf32>
    %5 = tpu.matmul %1, %0, %cst_3 {dimension_numbers = #tpu.dot_dimension_numbers<[1], [0], [0], [1], [0, 0, 1, 1], [], []>} : vector<2x32xf32>, vector<32x128xf32>, vector<2x128xf32> -> vector<2x128xf32>
    %6 = arith.addf %4, %5 : vector<2x128xf32>
    %7 = vector.extract_strided_slice %6 {offsets = [0, 0], sizes = [2, 32], strides = [1, 1]} : vector<2x128xf32> to vector<2x32xf32>
    %8 = arith.negf %7 : vector<2x32xf32>
    %9 = math.exp %8 : vector<2x32xf32>
    %cst_4 = arith.constant 1.000000e+00 : f32
    %10 = vector.broadcast %cst_4 : f32 to vector<2x32xf32>
    %11 = arith.addf %10, %9 : vector<2x32xf32>
    %12 = arith.divf %10, %11 : vector<2x32xf32>
    %13 = vector.extract_strided_slice %6 {offsets = [0, 32], sizes = [2, 32], strides = [1, 1]} : vector<2x128xf32> to vector<2x32xf32>
    %14 = arith.negf %13 : vector<2x32xf32>
    %15 = math.exp %14 : vector<2x32xf32>
    %cst_5 = arith.constant 1.000000e+00 : f32
    %16 = vector.broadcast %cst_5 : f32 to vector<2x32xf32>
    %17 = arith.addf %16, %15 : vector<2x32xf32>
    %18 = arith.divf %16, %17 : vector<2x32xf32>
    %19 = vector.extract_strided_slice %6 {offsets = [0, 64], sizes = [2, 32], strides = [1, 1]} : vector<2x128xf32> to vector<2x32xf32>
    %20 = math.tanh %19 : vector<2x32xf32>
    %21 = vector.extract_strided_slice %6 {offsets = [0, 96], sizes = [2, 32], strides = [1, 1]} : vector<2x128xf32> to vector<2x32xf32>
    %22 = arith.negf %21 : vector<2x32xf32>
    %23 = math.exp %22 : vector<2x32xf32>
    %cst_6 = arith.constant 1.000000e+00 : f32
    %24 = vector.broadcast %cst_6 : f32 to vector<2x32xf32>
    %25 = arith.addf %24, %23 : vector<2x32xf32>
    %26 = arith.divf %24, %25 : vector<2x32xf32>
    %27 = arith.mulf %18, %1 : vector<2x32xf32>
    %28 = arith.mulf %12, %20 : vector<2x32xf32>
    %29 = arith.addf %27, %28 : vector<2x32xf32>
    %30 = math.tanh %29 : vector<2x32xf32>
    %31 = arith.mulf %26, %30 : vector<2x32xf32>
    %32 = arith.index_cast %c0_i32 : i32 to index
    %c0_7 = arith.constant 0 : index
    %c0_8 = arith.constant 0 : index
    %33 = vector.load %arg10[%32, %c0_7, %c0_8] : memref<8x2x32xf32, #tpu.memory_space<vmem>>, vector<1x2x32xf32>
    %34 = vector.shape_cast %33 : vector<1x2x32xf32> to vector<2x32xf32>
    %35 = vector.shape_cast %31 : vector<2x32xf32> to vector<1x2x32xf32>
    tpu.vector_store %arg10[%32, %c0_7, %c0_8], %35 {strides = array<i32>} : memref<8x2x32xf32, #tpu.memory_space<vmem>>, vector<1x2x32xf32>,
    %c1_i32 = arith.constant 1 : i32
    %36 = arith.index_cast %c1_i32 : i32 to index
    %c0_9 = arith.constant 0 : index
    %c0_10 = arith.constant 0 : index
    %37 = vector.load %arg0[%36, %c0_9, %c0_10] : memref<8x2x128xf32, #tpu.memory_space<vmem>>, vector<1x2x128xf32>
    %38 = vector.shape_cast %37 : vector<1x2x128xf32> to vector<2x128xf32>
    %cst_11 = arith.constant dense<0.000000e+00> : vector<2x128xf32>
    %39 = tpu.matmul %31, %0, %cst_11 {dimension_numbers = #tpu.dot_dimension_numbers<[1], [0], [0], [1], [0, 0, 1, 1], [], []>} : vector<2x32xf32>, vector<32x128xf32>, vector<2x128xf32> -> vector<2x128xf32>
    %40 = arith.addf %38, %39 : vector<2x128xf32>
    %41 = vector.extract_strided_slice %40 {offsets = [0, 0], sizes = [2, 32], strides = [1, 1]} : vector<2x128xf32> to vector<2x32xf32>
    %42 = arith.negf %41 : vector<2x32xf32>
    %43 = math.exp %42 : vector<2x32xf32>
    %cst_12 = arith.constant 1.000000e+00 : f32
    %44 = vector.broadcast %cst_12 : f32 to vector<2x32xf32>
    %45 = arith.addf %44, %43 : vector<2x32xf32>
    %46 = arith.divf %44, %45 : vector<2x32xf32>
    %47 = vector.extract_strided_slice %40 {offsets = [0, 32], sizes = [2, 32], strides = [1, 1]} : vector<2x128xf32> to vector<2x32xf32>
    %48 = arith.negf %47 : vector<2x32xf32>
    %49 = math.exp %48 : vector<2x32xf32>
    %cst_13 = arith.constant 1.000000e+00 : f32
    %50 = vector.broadcast %cst_13 : f32 to vector<2x32xf32>
    %51 = arith.addf %50, %49 : vector<2x32xf32>
    %52 = arith.divf %50, %51 : vector<2x32xf32>
    %53 = vector.extract_strided_slice %40 {offsets = [0, 64], sizes = [2, 32], strides = [1, 1]} : vector<2x128xf32> to vector<2x32xf32>
    %54 = math.tanh %53 : vector<2x32xf32>
    %55 = vector.extract_strided_slice %40 {offsets = [0, 96], sizes = [2, 32], strides = [1, 1]} : vector<2x128xf32> to vector<2x32xf32>
    %56 = arith.negf %55 : vector<2x32xf32>
    %57 = math.exp %56 : vector<2x32xf32>
    %cst_14 = arith.constant 1.000000e+00 : f32
    %58 = vector.broadcast %cst_14 : f32 to vector<2x32xf32>
    %59 = arith.addf %58, %57 : vector<2x32xf32>
    %60 = arith.divf %58, %59 : vector<2x32xf32>
    %61 = arith.mulf %52, %29 : vector<2x32xf32>
    %62 = arith.mulf %46, %54 : vector<2x32xf32>
    %63 = arith.addf %61, %62 : vector<2x32xf32>
    %64 = math.tanh %63 : vector<2x32xf32>
    %65 = arith.mulf %60, %64 : vector<2x32xf32>
    %66 = arith.index_cast %c1_i32 : i32 to index
    %c0_15 = arith.constant 0 : index
    %c0_16 = arith.constant 0 : index
    %67 = vector.load %arg10[%66, %c0_15, %c0_16] : memref<8x2x32xf32, #tpu.memory_space<vmem>>, vector<1x2x32xf32>
    %68 = vector.shape_cast %67 : vector<1x2x32xf32> to vector<2x32xf32>
    %69 = vector.shape_cast %65 : vector<2x32xf32> to vector<1x2x32xf32>
    tpu.vector_store %arg10[%66, %c0_15, %c0_16], %69 {strides = array<i32>} : memref<8x2x32xf32, #tpu.memory_space<vmem>>, vector<1x2x32xf32>,
    %c2_i32 = arith.constant 2 : i32
    %70 = arith.index_cast %c2_i32 : i32 to index
    %c0_17 = arith.constant 0 : index
    %c0_18 = arith.constant 0 : index
    %71 = vector.load %arg0[%70, %c0_17, %c0_18] : memref<8x2x128xf32, #tpu.memory_space<vmem>>, vector<1x2x128xf32>
    %72 = vector.shape_cast %71 : vector<1x2x128xf32> to vector<2x128xf32>
    %cst_19 = arith.constant dense<0.000000e+00> : vector<2x128xf32>
    %73 = tpu.matmul %65, %0, %cst_19 {dimension_numbers = #tpu.dot_dimension_numbers<[1], [0], [0], [1], [0, 0, 1, 1], [], []>} : vector<2x32xf32>, vector<32x128xf32>, vector<2x128xf32> -> vector<2x128xf32>
    %74 = arith.addf %72, %73 : vector<2x128xf32>
    %75 = vector.extract_strided_slice %74 {offsets = [0, 0], sizes = [2, 32], strides = [1, 1]} : vector<2x128xf32> to vector<2x32xf32>
    %76 = arith.negf %75 : vector<2x32xf32>
    %77 = math.exp %76 : vector<2x32xf32>
    %cst_20 = arith.constant 1.000000e+00 : f32
    %78 = vector.broadcast %cst_20 : f32 to vector<2x32xf32>
    %79 = arith.addf %78, %77 : vector<2x32xf32>
    %80 = arith.divf %78, %79 : vector<2x32xf32>
    %81 = vector.extract_strided_slice %74 {offsets = [0, 32], sizes = [2, 32], strides = [1, 1]} : vector<2x128xf32> to vector<2x32xf32>
    %82 = arith.negf %81 : vector<2x32xf32>
    %83 = math.exp %82 : vector<2x32xf32>
    %cst_21 = arith.constant 1.000000e+00 : f32
    %84 = vector.broadcast %cst_21 : f32 to vector<2x32xf32>
    %85 = arith.addf %84, %83 : vector<2x32xf32>
    %86 = arith.divf %84, %85 : vector<2x32xf32>
    %87 = vector.extract_strided_slice %74 {offsets = [0, 64], sizes = [2, 32], strides = [1, 1]} : vector<2x128xf32> to vector<2x32xf32>
    %88 = math.tanh %87 : vector<2x32xf32>
    %89 = vector.extract_strided_slice %74 {offsets = [0, 96], sizes = [2, 32], strides = [1, 1]} : vector<2x128xf32> to vector<2x32xf32>
    %90 = arith.negf %89 : vector<2x32xf32>
    %91 = math.exp %90 : vector<2x32xf32>
    %cst_22 = arith.constant 1.000000e+00 : f32
    %92 = vector.broadcast %cst_22 : f32 to vector<2x32xf32>
    %93 = arith.addf %92, %91 : vector<2x32xf32>
    %94 = arith.divf %92, %93 : vector<2x32xf32>
    %95 = arith.mulf %86, %63 : vector<2x32xf32>
    %96 = arith.mulf %80, %88 : vector<2x32xf32>
    %97 = arith.addf %95, %96 : vector<2x32xf32>
    %98 = math.tanh %97 : vector<2x32xf32>
    %99 = arith.mulf %94, %98 : vector<2x32xf32>
    %100 = arith.index_cast %c2_i32 : i32 to index
    %c0_23 = arith.constant 0 : index
    %c0_24 = arith.constant 0 : index
    %101 = vector.load %arg10[%100, %c0_23, %c0_24] : memref<8x2x32xf32, #tpu.memory_space<vmem>>, vector<1x2x32xf32>
    %102 = vector.shape_cast %101 : vector<1x2x32xf32> to vector<2x32xf32>
    %103 = vector.shape_cast %99 : vector<2x32xf32> to vector<1x2x32xf32>
    tpu.vector_store %arg10[%100, %c0_23, %c0_24], %103 {strides = array<i32>} : memref<8x2x32xf32, #tpu.memory_space<vmem>>, vector<1x2x32xf32>,
    %c3_i32 = arith.constant 3 : i32
    %104 = arith.index_cast %c3_i32 : i32 to index
    %c0_25 = arith.constant 0 : index
    %c0_26 = arith.constant 0 : index
    %105 = vector.load %arg0[%104, %c0_25, %c0_26] : memref<8x2x128xf32, #tpu.memory_space<vmem>>, vector<1x2x128xf32>
    %106 = vector.shape_cast %105 : vector<1x2x128xf32> to vector<2x128xf32>
    %cst_27 = arith.constant dense<0.000000e+00> : vector<2x128xf32>
    %107 = tpu.matmul %99, %0, %cst_27 {dimension_numbers = #tpu.dot_dimension_numbers<[1], [0], [0], [1], [0, 0, 1, 1], [], []>} : vector<2x32xf32>, vector<32x128xf32>, vector<2x128xf32> -> vector<2x128xf32>
    %108 = arith.addf %106, %107 : vector<2x128xf32>
    %109 = vector.extract_strided_slice %108 {offsets = [0, 0], sizes = [2, 32], strides = [1, 1]} : vector<2x128xf32> to vector<2x32xf32>
    %110 = arith.negf %109 : vector<2x32xf32>
    %111 = math.exp %110 : vector<2x32xf32>
    %cst_28 = arith.constant 1.000000e+00 : f32
    %112 = vector.broadcast %cst_28 : f32 to vector<2x32xf32>
    %113 = arith.addf %112, %111 : vector<2x32xf32>
    %114 = arith.divf %112, %113 : vector<2x32xf32>
    %115 = vector.extract_strided_slice %108 {offsets = [0, 32], sizes = [2, 32], strides = [1, 1]} : vector<2x128xf32> to vector<2x32xf32>
    %116 = arith.negf %115 : vector<2x32xf32>
    %117 = math.exp %116 : vector<2x32xf32>
    %cst_29 = arith.constant 1.000000e+00 : f32
    %118 = vector.broadcast %cst_29 : f32 to vector<2x32xf32>
    %119 = arith.addf %118, %117 : vector<2x32xf32>
    %120 = arith.divf %118, %119 : vector<2x32xf32>
    %121 = vector.extract_strided_slice %108 {offsets = [0, 64], sizes = [2, 32], strides = [1, 1]} : vector<2x128xf32> to vector<2x32xf32>
    %122 = math.tanh %121 : vector<2x32xf32>
    %123 = vector.extract_strided_slice %108 {offsets = [0, 96], sizes = [2, 32], strides = [1, 1]} : vector<2x128xf32> to vector<2x32xf32>
    %124 = arith.negf %123 : vector<2x32xf32>
    %125 = math.exp %124 : vector<2x32xf32>
    %cst_30 = arith.constant 1.000000e+00 : f32
    %126 = vector.broadcast %cst_30 : f32 to vector<2x32xf32>
    %127 = arith.addf %126, %125 : vector<2x32xf32>
    %128 = arith.divf %126, %127 : vector<2x32xf32>
    %129 = arith.mulf %120, %97 : vector<2x32xf32>
    %130 = arith.mulf %114, %122 : vector<2x32xf32>
    %131 = arith.addf %129, %130 : vector<2x32xf32>
    %132 = math.tanh %131 : vector<2x32xf32>
    %133 = arith.mulf %128, %132 : vector<2x32xf32>
    %134 = arith.index_cast %c3_i32 : i32 to index
    %c0_31 = arith.constant 0 : index
    %c0_32 = arith.constant 0 : index
    %135 = vector.load %arg10[%134, %c0_31, %c0_32] : memref<8x2x32xf32, #tpu.memory_space<vmem>>, vector<1x2x32xf32>
    %136 = vector.shape_cast %135 : vector<1x2x32xf32> to vector<2x32xf32>
    %137 = vector.shape_cast %133 : vector<2x32xf32> to vector<1x2x32xf32>
    tpu.vector_store %arg10[%134, %c0_31, %c0_32], %137 {strides = array<i32>} : memref<8x2x32xf32, #tpu.memory_space<vmem>>, vector<1x2x32xf32>,
    %c4_i32 = arith.constant 4 : i32
    %138 = arith.index_cast %c4_i32 : i32 to index
    %c0_33 = arith.constant 0 : index
    %c0_34 = arith.constant 0 : index
    %139 = vector.load %arg0[%138, %c0_33, %c0_34] : memref<8x2x128xf32, #tpu.memory_space<vmem>>, vector<1x2x128xf32>
    %140 = vector.shape_cast %139 : vector<1x2x128xf32> to vector<2x128xf32>
    %cst_35 = arith.constant dense<0.000000e+00> : vector<2x128xf32>
    %141 = tpu.matmul %133, %0, %cst_35 {dimension_numbers = #tpu.dot_dimension_numbers<[1], [0], [0], [1], [0, 0, 1, 1], [], []>} : vector<2x32xf32>, vector<32x128xf32>, vector<2x128xf32> -> vector<2x128xf32>
    %142 = arith.addf %140, %141 : vector<2x128xf32>
    %143 = vector.extract_strided_slice %142 {offsets = [0, 0], sizes = [2, 32], strides = [1, 1]} : vector<2x128xf32> to vector<2x32xf32>
    %144 = arith.negf %143 : vector<2x32xf32>
    %145 = math.exp %144 : vector<2x32xf32>
    %cst_36 = arith.constant 1.000000e+00 : f32
    %146 = vector.broadcast %cst_36 : f32 to vector<2x32xf32>
    %147 = arith.addf %146, %145 : vector<2x32xf32>
    %148 = arith.divf %146, %147 : vector<2x32xf32>
    %149 = vector.extract_strided_slice %142 {offsets = [0, 32], sizes = [2, 32], strides = [1, 1]} : vector<2x128xf32> to vector<2x32xf32>
    %150 = arith.negf %149 : vector<2x32xf32>
    %151 = math.exp %150 : vector<2x32xf32>
    %cst_37 = arith.constant 1.000000e+00 : f32
    %152 = vector.broadcast %cst_37 : f32 to vector<2x32xf32>
    %153 = arith.addf %152, %151 : vector<2x32xf32>
    %154 = arith.divf %152, %153 : vector<2x32xf32>
    %155 = vector.extract_strided_slice %142 {offsets = [0, 64], sizes = [2, 32], strides = [1, 1]} : vector<2x128xf32> to vector<2x32xf32>
    %156 = math.tanh %155 : vector<2x32xf32>
    %157 = vector.extract_strided_slice %142 {offsets = [0, 96], sizes = [2, 32], strides = [1, 1]} : vector<2x128xf32> to vector<2x32xf32>
    %158 = arith.negf %157 : vector<2x32xf32>
    %159 = math.exp %158 : vector<2x32xf32>
    %cst_38 = arith.constant 1.000000e+00 : f32
    %160 = vector.broadcast %cst_38 : f32 to vector<2x32xf32>
    %161 = arith.addf %160, %159 : vector<2x32xf32>
    %162 = arith.divf %160, %161 : vector<2x32xf32>
    %163 = arith.mulf %154, %131 : vector<2x32xf32>
    %164 = arith.mulf %148, %156 : vector<2x32xf32>
    %165 = arith.addf %163, %164 : vector<2x32xf32>
    %166 = math.tanh %165 : vector<2x32xf32>
    %167 = arith.mulf %162, %166 : vector<2x32xf32>
    %168 = arith.index_cast %c4_i32 : i32 to index
    %c0_39 = arith.constant 0 : index
    %c0_40 = arith.constant 0 : index
    %169 = vector.load %arg10[%168, %c0_39, %c0_40] : memref<8x2x32xf32, #tpu.memory_space<vmem>>, vector<1x2x32xf32>
    %170 = vector.shape_cast %169 : vector<1x2x32xf32> to vector<2x32xf32>
    %171 = vector.shape_cast %167 : vector<2x32xf32> to vector<1x2x32xf32>
    tpu.vector_store %arg10[%168, %c0_39, %c0_40], %171 {strides = array<i32>} : memref<8x2x32xf32, #tpu.memory_space<vmem>>, vector<1x2x32xf32>,
    %c5_i32 = arith.constant 5 : i32
    %172 = arith.index_cast %c5_i32 : i32 to index
    %c0_41 = arith.constant 0 : index
    %c0_42 = arith.constant 0 : index
    %173 = vector.load %arg0[%172, %c0_41, %c0_42] : memref<8x2x128xf32, #tpu.memory_space<vmem>>, vector<1x2x128xf32>
    %174 = vector.shape_cast %173 : vector<1x2x128xf32> to vector<2x128xf32>
    %cst_43 = arith.constant dense<0.000000e+00> : vector<2x128xf32>
    %175 = tpu.matmul %167, %0, %cst_43 {dimension_numbers = #tpu.dot_dimension_numbers<[1], [0], [0], [1], [0, 0, 1, 1], [], []>} : vector<2x32xf32>, vector<32x128xf32>, vector<2x128xf32> -> vector<2x128xf32>
    %176 = arith.addf %174, %175 : vector<2x128xf32>
    %177 = vector.extract_strided_slice %176 {offsets = [0, 0], sizes = [2, 32], strides = [1, 1]} : vector<2x128xf32> to vector<2x32xf32>
    %178 = arith.negf %177 : vector<2x32xf32>
    %179 = math.exp %178 : vector<2x32xf32>
    %cst_44 = arith.constant 1.000000e+00 : f32
    %180 = vector.broadcast %cst_44 : f32 to vector<2x32xf32>
    %181 = arith.addf %180, %179 : vector<2x32xf32>
    %182 = arith.divf %180, %181 : vector<2x32xf32>
    %183 = vector.extract_strided_slice %176 {offsets = [0, 32], sizes = [2, 32], strides = [1, 1]} : vector<2x128xf32> to vector<2x32xf32>
    %184 = arith.negf %183 : vector<2x32xf32>
    %185 = math.exp %184 : vector<2x32xf32>
    %cst_45 = arith.constant 1.000000e+00 : f32
    %186 = vector.broadcast %cst_45 : f32 to vector<2x32xf32>
    %187 = arith.addf %186, %185 : vector<2x32xf32>
    %188 = arith.divf %186, %187 : vector<2x32xf32>
    %189 = vector.extract_strided_slice %176 {offsets = [0, 64], sizes = [2, 32], strides = [1, 1]} : vector<2x128xf32> to vector<2x32xf32>
    %190 = math.tanh %189 : vector<2x32xf32>
    %191 = vector.extract_strided_slice %176 {offsets = [0, 96], sizes = [2, 32], strides = [1, 1]} : vector<2x128xf32> to vector<2x32xf32>
    %192 = arith.negf %191 : vector<2x32xf32>
    %193 = math.exp %192 : vector<2x32xf32>
    %cst_46 = arith.constant 1.000000e+00 : f32
    %194 = vector.broadcast %cst_46 : f32 to vector<2x32xf32>
    %195 = arith.addf %194, %193 : vector<2x32xf32>
    %196 = arith.divf %194, %195 : vector<2x32xf32>
    %197 = arith.mulf %188, %165 : vector<2x32xf32>
    %198 = arith.mulf %182, %190 : vector<2x32xf32>
    %199 = arith.addf %197, %198 : vector<2x32xf32>
    %200 = math.tanh %199 : vector<2x32xf32>
    %201 = arith.mulf %196, %200 : vector<2x32xf32>
    %202 = arith.index_cast %c5_i32 : i32 to index
    %c0_47 = arith.constant 0 : index
    %c0_48 = arith.constant 0 : index
    %203 = vector.load %arg10[%202, %c0_47, %c0_48] : memref<8x2x32xf32, #tpu.memory_space<vmem>>, vector<1x2x32xf32>
    %204 = vector.shape_cast %203 : vector<1x2x32xf32> to vector<2x32xf32>
    %205 = vector.shape_cast %201 : vector<2x32xf32> to vector<1x2x32xf32>
    tpu.vector_store %arg10[%202, %c0_47, %c0_48], %205 {strides = array<i32>} : memref<8x2x32xf32, #tpu.memory_space<vmem>>, vector<1x2x32xf32>,
    %c6_i32 = arith.constant 6 : i32
    %206 = arith.index_cast %c6_i32 : i32 to index
    %c0_49 = arith.constant 0 : index
    %c0_50 = arith.constant 0 : index
    %207 = vector.load %arg0[%206, %c0_49, %c0_50] : memref<8x2x128xf32, #tpu.memory_space<vmem>>, vector<1x2x128xf32>
    %208 = vector.shape_cast %207 : vector<1x2x128xf32> to vector<2x128xf32>
    %cst_51 = arith.constant dense<0.000000e+00> : vector<2x128xf32>
    %209 = tpu.matmul %201, %0, %cst_51 {dimension_numbers = #tpu.dot_dimension_numbers<[1], [0], [0], [1], [0, 0, 1, 1], [], []>} : vector<2x32xf32>, vector<32x128xf32>, vector<2x128xf32> -> vector<2x128xf32>
    %210 = arith.addf %208, %209 : vector<2x128xf32>
    %211 = vector.extract_strided_slice %210 {offsets = [0, 0], sizes = [2, 32], strides = [1, 1]} : vector<2x128xf32> to vector<2x32xf32>
    %212 = arith.negf %211 : vector<2x32xf32>
    %213 = math.exp %212 : vector<2x32xf32>
    %cst_52 = arith.constant 1.000000e+00 : f32
    %214 = vector.broadcast %cst_52 : f32 to vector<2x32xf32>
    %215 = arith.addf %214, %213 : vector<2x32xf32>
    %216 = arith.divf %214, %215 : vector<2x32xf32>
    %217 = vector.extract_strided_slice %210 {offsets = [0, 32], sizes = [2, 32], strides = [1, 1]} : vector<2x128xf32> to vector<2x32xf32>
    %218 = arith.negf %217 : vector<2x32xf32>
    %219 = math.exp %218 : vector<2x32xf32>
    %cst_53 = arith.constant 1.000000e+00 : f32
    %220 = vector.broadcast %cst_53 : f32 to vector<2x32xf32>
    %221 = arith.addf %220, %219 : vector<2x32xf32>
    %222 = arith.divf %220, %221 : vector<2x32xf32>
    %223 = vector.extract_strided_slice %210 {offsets = [0, 64], sizes = [2, 32], strides = [1, 1]} : vector<2x128xf32> to vector<2x32xf32>
    %224 = math.tanh %223 : vector<2x32xf32>
    %225 = vector.extract_strided_slice %210 {offsets = [0, 96], sizes = [2, 32], strides = [1, 1]} : vector<2x128xf32> to vector<2x32xf32>
    %226 = arith.negf %225 : vector<2x32xf32>
    %227 = math.exp %226 : vector<2x32xf32>
    %cst_54 = arith.constant 1.000000e+00 : f32
    %228 = vector.broadcast %cst_54 : f32 to vector<2x32xf32>
    %229 = arith.addf %228, %227 : vector<2x32xf32>
    %230 = arith.divf %228, %229 : vector<2x32xf32>
    %231 = arith.mulf %222, %199 : vector<2x32xf32>
    %232 = arith.mulf %216, %224 : vector<2x32xf32>
    %233 = arith.addf %231, %232 : vector<2x32xf32>
    %234 = math.tanh %233 : vector<2x32xf32>
    %235 = arith.mulf %230, %234 : vector<2x32xf32>
    %236 = arith.index_cast %c6_i32 : i32 to index
    %c0_55 = arith.constant 0 : index
    %c0_56 = arith.constant 0 : index
    %237 = vector.load %arg10[%236, %c0_55, %c0_56] : memref<8x2x32xf32, #tpu.memory_space<vmem>>, vector<1x2x32xf32>
    %238 = vector.shape_cast %237 : vector<1x2x32xf32> to vector<2x32xf32>
    %239 = vector.shape_cast %235 : vector<2x32xf32> to vector<1x2x32xf32>
    tpu.vector_store %arg10[%236, %c0_55, %c0_56], %239 {strides = array<i32>} : memref<8x2x32xf32, #tpu.memory_space<vmem>>, vector<1x2x32xf32>,
    %c7_i32 = arith.constant 7 : i32
    %240 = arith.index_cast %c7_i32 : i32 to index
    %c0_57 = arith.constant 0 : index
    %c0_58 = arith.constant 0 : index
    %241 = vector.load %arg0[%240, %c0_57, %c0_58] : memref<8x2x128xf32, #tpu.memory_space<vmem>>, vector<1x2x128xf32>
    %242 = vector.shape_cast %241 : vector<1x2x128xf32> to vector<2x128xf32>
    %cst_59 = arith.constant dense<0.000000e+00> : vector<2x128xf32>
    %243 = tpu.matmul %235, %0, %cst_59 {dimension_numbers = #tpu.dot_dimension_numbers<[1], [0], [0], [1], [0, 0, 1, 1], [], []>} : vector<2x32xf32>, vector<32x128xf32>, vector<2x128xf32> -> vector<2x128xf32>
    %244 = arith.addf %242, %243 : vector<2x128xf32>
    %245 = vector.extract_strided_slice %244 {offsets = [0, 0], sizes = [2, 32], strides = [1, 1]} : vector<2x128xf32> to vector<2x32xf32>
    %246 = arith.negf %245 : vector<2x32xf32>
    %247 = math.exp %246 : vector<2x32xf32>
    %cst_60 = arith.constant 1.000000e+00 : f32
    %248 = vector.broadcast %cst_60 : f32 to vector<2x32xf32>
    %249 = arith.addf %248, %247 : vector<2x32xf32>
    %250 = arith.divf %248, %249 : vector<2x32xf32>
    %251 = vector.extract_strided_slice %244 {offsets = [0, 32], sizes = [2, 32], strides = [1, 1]} : vector<2x128xf32> to vector<2x32xf32>
    %252 = arith.negf %251 : vector<2x32xf32>
    %253 = math.exp %252 : vector<2x32xf32>
    %cst_61 = arith.constant 1.000000e+00 : f32
    %254 = vector.broadcast %cst_61 : f32 to vector<2x32xf32>
    %255 = arith.addf %254, %253 : vector<2x32xf32>
    %256 = arith.divf %254, %255 : vector<2x32xf32>
    %257 = vector.extract_strided_slice %244 {offsets = [0, 64], sizes = [2, 32], strides = [1, 1]} : vector<2x128xf32> to vector<2x32xf32>
    %258 = math.tanh %257 : vector<2x32xf32>
    %259 = vector.extract_strided_slice %244 {offsets = [0, 96], sizes = [2, 32], strides = [1, 1]} : vector<2x128xf32> to vector<2x32xf32>
    %260 = arith.negf %259 : vector<2x32xf32>
    %261 = math.exp %260 : vector<2x32xf32>
    %cst_62 = arith.constant 1.000000e+00 : f32
    %262 = vector.broadcast %cst_62 : f32 to vector<2x32xf32>
    %263 = arith.addf %262, %261 : vector<2x32xf32>
    %264 = arith.divf %262, %263 : vector<2x32xf32>
    %265 = arith.mulf %256, %233 : vector<2x32xf32>
    %266 = arith.mulf %250, %258 : vector<2x32xf32>
    %267 = arith.addf %265, %266 : vector<2x32xf32>
    %268 = math.tanh %267 : vector<2x32xf32>
    %269 = arith.mulf %264, %268 : vector<2x32xf32>
    %270 = arith.index_cast %c7_i32 : i32 to index
    %c0_63 = arith.constant 0 : index
    %c0_64 = arith.constant 0 : index
    %271 = vector.load %arg10[%270, %c0_63, %c0_64] : memref<8x2x32xf32, #tpu.memory_space<vmem>>, vector<1x2x32xf32>
    %272 = vector.shape_cast %271 : vector<1x2x32xf32> to vector<2x32xf32>
    %273 = vector.shape_cast %269 : vector<2x32xf32> to vector<1x2x32xf32>
    tpu.vector_store %arg10[%270, %c0_63, %c0_64], %273 {strides = array<i32>} : memref<8x2x32xf32, #tpu.memory_space<vmem>>, vector<1x2x32xf32>,
    %c8_i32 = arith.constant 8 : i32
    %c0_65 = arith.constant 0 : index
    %c0_66 = arith.constant 0 : index
    %274 = vector.load %arg2[%c0_65, %c0_66] : memref<32x128xf32, #tpu.memory_space<vmem>>, vector<32x128xf32>
    %c0_67 = arith.constant 0 : index
    %c0_68 = arith.constant 0 : index
    %275 = vector.load %arg4[%c0_67, %c0_68] : memref<1x128xf32, #tpu.memory_space<vmem>>, vector<1x128xf32>
    %c0_69 = arith.constant 0 : index
    %c0_70 = arith.constant 0 : index
    %c0_71 = arith.constant 0 : index
    %276 = vector.load %arg10[%c0_69, %c0_70, %c0_71] : memref<8x2x32xf32, #tpu.memory_space<vmem>>, vector<1x2x32xf32>
    %277 = vector.shape_cast %276 : vector<1x2x32xf32> to vector<2x32xf32>
    %cst_72 = arith.constant dense<0.000000e+00> : vector<2x128xf32>
    %278 = tpu.matmul %277, %274, %cst_72 {dimension_numbers = #tpu.dot_dimension_numbers<[1], [0], [0], [1], [0, 0, 1, 1], [], []>} : vector<2x32xf32>, vector<32x128xf32>, vector<2x128xf32> -> vector<2x128xf32>
    %279 = vector.broadcast %275 : vector<1x128xf32> to vector<2x128xf32>
    %280 = arith.addf %278, %279 : vector<2x128xf32>
    %c0_73 = arith.constant 0 : index
    %c0_74 = arith.constant 0 : index
    %c0_75 = arith.constant 0 : index
    %281 = vector.load %arg11[%c0_73, %c0_74, %c0_75] : memref<8x2x128xf32, #tpu.memory_space<vmem>>, vector<1x2x128xf32>
    %282 = vector.shape_cast %281 : vector<1x2x128xf32> to vector<2x128xf32>
    %283 = vector.shape_cast %280 : vector<2x128xf32> to vector<1x2x128xf32>
    tpu.vector_store %arg11[%c0_73, %c0_74, %c0_75], %283 {strides = array<i32>} : memref<8x2x128xf32, #tpu.memory_space<vmem>>, vector<1x2x128xf32>,
    %c1 = arith.constant 1 : index
    %c0_76 = arith.constant 0 : index
    %c0_77 = arith.constant 0 : index
    %284 = vector.load %arg10[%c1, %c0_76, %c0_77] : memref<8x2x32xf32, #tpu.memory_space<vmem>>, vector<1x2x32xf32>
    %285 = vector.shape_cast %284 : vector<1x2x32xf32> to vector<2x32xf32>
    %cst_78 = arith.constant dense<0.000000e+00> : vector<2x128xf32>
    %286 = tpu.matmul %285, %274, %cst_78 {dimension_numbers = #tpu.dot_dimension_numbers<[1], [0], [0], [1], [0, 0, 1, 1], [], []>} : vector<2x32xf32>, vector<32x128xf32>, vector<2x128xf32> -> vector<2x128xf32>
    %287 = vector.broadcast %275 : vector<1x128xf32> to vector<2x128xf32>
    %288 = arith.addf %286, %287 : vector<2x128xf32>
    %c1_79 = arith.constant 1 : index
    %c0_80 = arith.constant 0 : index
    %c0_81 = arith.constant 0 : index
    %289 = vector.load %arg11[%c1_79, %c0_80, %c0_81] : memref<8x2x128xf32, #tpu.memory_space<vmem>>, vector<1x2x128xf32>
    %290 = vector.shape_cast %289 : vector<1x2x128xf32> to vector<2x128xf32>
    %291 = vector.shape_cast %288 : vector<2x128xf32> to vector<1x2x128xf32>
    tpu.vector_store %arg11[%c1_79, %c0_80, %c0_81], %291 {strides = array<i32>} : memref<8x2x128xf32, #tpu.memory_space<vmem>>, vector<1x2x128xf32>,
    %c2 = arith.constant 2 : index
    %c0_82 = arith.constant 0 : index
    %c0_83 = arith.constant 0 : index
    %292 = vector.load %arg10[%c2, %c0_82, %c0_83] : memref<8x2x32xf32, #tpu.memory_space<vmem>>, vector<1x2x32xf32>
    %293 = vector.shape_cast %292 : vector<1x2x32xf32> to vector<2x32xf32>
    %cst_84 = arith.constant dense<0.000000e+00> : vector<2x128xf32>
    %294 = tpu.matmul %293, %274, %cst_84 {dimension_numbers = #tpu.dot_dimension_numbers<[1], [0], [0], [1], [0, 0, 1, 1], [], []>} : vector<2x32xf32>, vector<32x128xf32>, vector<2x128xf32> -> vector<2x128xf32>
    %295 = vector.broadcast %275 : vector<1x128xf32> to vector<2x128xf32>
    %296 = arith.addf %294, %295 : vector<2x128xf32>
    %c2_85 = arith.constant 2 : index
    %c0_86 = arith.constant 0 : index
    %c0_87 = arith.constant 0 : index
    %297 = vector.load %arg11[%c2_85, %c0_86, %c0_87] : memref<8x2x128xf32, #tpu.memory_space<vmem>>, vector<1x2x128xf32>
    %298 = vector.shape_cast %297 : vector<1x2x128xf32> to vector<2x128xf32>
    %299 = vector.shape_cast %296 : vector<2x128xf32> to vector<1x2x128xf32>
    tpu.vector_store %arg11[%c2_85, %c0_86, %c0_87], %299 {strides = array<i32>} : memref<8x2x128xf32, #tpu.memory_space<vmem>>, vector<1x2x128xf32>,
    %c3 = arith.constant 3 : index
    %c0_88 = arith.constant 0 : index
    %c0_89 = arith.constant 0 : index
    %300 = vector.load %arg10[%c3, %c0_88, %c0_89] : memref<8x2x32xf32, #tpu.memory_space<vmem>>, vector<1x2x32xf32>
    %301 = vector.shape_cast %300 : vector<1x2x32xf32> to vector<2x32xf32>
    %cst_90 = arith.constant dense<0.000000e+00> : vector<2x128xf32>
    %302 = tpu.matmul %301, %274, %cst_90 {dimension_numbers = #tpu.dot_dimension_numbers<[1], [0], [0], [1], [0, 0, 1, 1], [], []>} : vector<2x32xf32>, vector<32x128xf32>, vector<2x128xf32> -> vector<2x128xf32>
    %303 = vector.broadcast %275 : vector<1x128xf32> to vector<2x128xf32>
    %304 = arith.addf %302, %303 : vector<2x128xf32>
    %c3_91 = arith.constant 3 : index
    %c0_92 = arith.constant 0 : index
    %c0_93 = arith.constant 0 : index
    %305 = vector.load %arg11[%c3_91, %c0_92, %c0_93] : memref<8x2x128xf32, #tpu.memory_space<vmem>>, vector<1x2x128xf32>
    %306 = vector.shape_cast %305 : vector<1x2x128xf32> to vector<2x128xf32>
    %307 = vector.shape_cast %304 : vector<2x128xf32> to vector<1x2x128xf32>
    tpu.vector_store %arg11[%c3_91, %c0_92, %c0_93], %307 {strides = array<i32>} : memref<8x2x128xf32, #tpu.memory_space<vmem>>, vector<1x2x128xf32>,
    %c4 = arith.constant 4 : index
    %c0_94 = arith.constant 0 : index
    %c0_95 = arith.constant 0 : index
    %308 = vector.load %arg10[%c4, %c0_94, %c0_95] : memref<8x2x32xf32, #tpu.memory_space<vmem>>, vector<1x2x32xf32>
    %309 = vector.shape_cast %308 : vector<1x2x32xf32> to vector<2x32xf32>
    %cst_96 = arith.constant dense<0.000000e+00> : vector<2x128xf32>
    %310 = tpu.matmul %309, %274, %cst_96 {dimension_numbers = #tpu.dot_dimension_numbers<[1], [0], [0], [1], [0, 0, 1, 1], [], []>} : vector<2x32xf32>, vector<32x128xf32>, vector<2x128xf32> -> vector<2x128xf32>
    %311 = vector.broadcast %275 : vector<1x128xf32> to vector<2x128xf32>
    %312 = arith.addf %310, %311 : vector<2x128xf32>
    %c4_97 = arith.constant 4 : index
    %c0_98 = arith.constant 0 : index
    %c0_99 = arith.constant 0 : index
    %313 = vector.load %arg11[%c4_97, %c0_98, %c0_99] : memref<8x2x128xf32, #tpu.memory_space<vmem>>, vector<1x2x128xf32>
    %314 = vector.shape_cast %313 : vector<1x2x128xf32> to vector<2x128xf32>
    %315 = vector.shape_cast %312 : vector<2x128xf32> to vector<1x2x128xf32>
    tpu.vector_store %arg11[%c4_97, %c0_98, %c0_99], %315 {strides = array<i32>} : memref<8x2x128xf32, #tpu.memory_space<vmem>>, vector<1x2x128xf32>,
    %c5 = arith.constant 5 : index
    %c0_100 = arith.constant 0 : index
    %c0_101 = arith.constant 0 : index
    %316 = vector.load %arg10[%c5, %c0_100, %c0_101] : memref<8x2x32xf32, #tpu.memory_space<vmem>>, vector<1x2x32xf32>
    %317 = vector.shape_cast %316 : vector<1x2x32xf32> to vector<2x32xf32>
    %cst_102 = arith.constant dense<0.000000e+00> : vector<2x128xf32>
    %318 = tpu.matmul %317, %274, %cst_102 {dimension_numbers = #tpu.dot_dimension_numbers<[1], [0], [0], [1], [0, 0, 1, 1], [], []>} : vector<2x32xf32>, vector<32x128xf32>, vector<2x128xf32> -> vector<2x128xf32>
    %319 = vector.broadcast %275 : vector<1x128xf32> to vector<2x128xf32>
    %320 = arith.addf %318, %319 : vector<2x128xf32>
    %c5_103 = arith.constant 5 : index
    %c0_104 = arith.constant 0 : index
    %c0_105 = arith.constant 0 : index
    %321 = vector.load %arg11[%c5_103, %c0_104, %c0_105] : memref<8x2x128xf32, #tpu.memory_space<vmem>>, vector<1x2x128xf32>
    %322 = vector.shape_cast %321 : vector<1x2x128xf32> to vector<2x128xf32>
    %323 = vector.shape_cast %320 : vector<2x128xf32> to vector<1x2x128xf32>
    tpu.vector_store %arg11[%c5_103, %c0_104, %c0_105], %323 {strides = array<i32>} : memref<8x2x128xf32, #tpu.memory_space<vmem>>, vector<1x2x128xf32>,
    %c6 = arith.constant 6 : index
    %c0_106 = arith.constant 0 : index
    %c0_107 = arith.constant 0 : index
    %324 = vector.load %arg10[%c6, %c0_106, %c0_107] : memref<8x2x32xf32, #tpu.memory_space<vmem>>, vector<1x2x32xf32>
    %325 = vector.shape_cast %324 : vector<1x2x32xf32> to vector<2x32xf32>
    %cst_108 = arith.constant dense<0.000000e+00> : vector<2x128xf32>
    %326 = tpu.matmul %325, %274, %cst_108 {dimension_numbers = #tpu.dot_dimension_numbers<[1], [0], [0], [1], [0, 0, 1, 1], [], []>} : vector<2x32xf32>, vector<32x128xf32>, vector<2x128xf32> -> vector<2x128xf32>
    %327 = vector.broadcast %275 : vector<1x128xf32> to vector<2x128xf32>
    %328 = arith.addf %326, %327 : vector<2x128xf32>
    %c6_109 = arith.constant 6 : index
    %c0_110 = arith.constant 0 : index
    %c0_111 = arith.constant 0 : index
    %329 = vector.load %arg11[%c6_109, %c0_110, %c0_111] : memref<8x2x128xf32, #tpu.memory_space<vmem>>, vector<1x2x128xf32>
    %330 = vector.shape_cast %329 : vector<1x2x128xf32> to vector<2x128xf32>
    %331 = vector.shape_cast %328 : vector<2x128xf32> to vector<1x2x128xf32>
    tpu.vector_store %arg11[%c6_109, %c0_110, %c0_111], %331 {strides = array<i32>} : memref<8x2x128xf32, #tpu.memory_space<vmem>>, vector<1x2x128xf32>,
    %c7 = arith.constant 7 : index
    %c0_112 = arith.constant 0 : index
    %c0_113 = arith.constant 0 : index
    %332 = vector.load %arg10[%c7, %c0_112, %c0_113] : memref<8x2x32xf32, #tpu.memory_space<vmem>>, vector<1x2x32xf32>
    %333 = vector.shape_cast %332 : vector<1x2x32xf32> to vector<2x32xf32>
    %cst_114 = arith.constant dense<0.000000e+00> : vector<2x128xf32>
    %334 = tpu.matmul %333, %274, %cst_114 {dimension_numbers = #tpu.dot_dimension_numbers<[1], [0], [0], [1], [0, 0, 1, 1], [], []>} : vector<2x32xf32>, vector<32x128xf32>, vector<2x128xf32> -> vector<2x128xf32>
    %335 = vector.broadcast %275 : vector<1x128xf32> to vector<2x128xf32>
    %336 = arith.addf %334, %335 : vector<2x128xf32>
    %c7_115 = arith.constant 7 : index
    %c0_116 = arith.constant 0 : index
    %c0_117 = arith.constant 0 : index
    %337 = vector.load %arg11[%c7_115, %c0_116, %c0_117] : memref<8x2x128xf32, #tpu.memory_space<vmem>>, vector<1x2x128xf32>
    %338 = vector.shape_cast %337 : vector<1x2x128xf32> to vector<2x128xf32>
    %339 = vector.shape_cast %336 : vector<2x128xf32> to vector<1x2x128xf32>
    tpu.vector_store %arg11[%c7_115, %c0_116, %c0_117], %339 {strides = array<i32>} : memref<8x2x128xf32, #tpu.memory_space<vmem>>, vector<1x2x128xf32>,
    %c0_118 = arith.constant 0 : index
    %c0_119 = arith.constant 0 : index
    %340 = vector.load %arg3[%c0_118, %c0_119] : memref<32x128xf32, #tpu.memory_space<vmem>>, vector<32x128xf32>
    %cst_120 = arith.constant 0.000000e+00 : f32
    %341 = vector.broadcast %cst_120 : f32 to vector<2x32xf32>
    %c0_i32_121 = arith.constant 0 : i32
    %342 = arith.index_cast %c0_i32_121 : i32 to index
    %c0_122 = arith.constant 0 : index
    %c0_123 = arith.constant 0 : index
    %343 = vector.load %arg11[%342, %c0_122, %c0_123] : memref<8x2x128xf32, #tpu.memory_space<vmem>>, vector<1x2x128xf32>
    %344 = vector.shape_cast %343 : vector<1x2x128xf32> to vector<2x128xf32>
    %cst_124 = arith.constant dense<0.000000e+00> : vector<2x128xf32>
    %345 = tpu.matmul %341, %340, %cst_124 {dimension_numbers = #tpu.dot_dimension_numbers<[1], [0], [0], [1], [0, 0, 1, 1], [], []>} : vector<2x32xf32>, vector<32x128xf32>, vector<2x128xf32> -> vector<2x128xf32>
    %346 = arith.addf %344, %345 : vector<2x128xf32>
    %347 = vector.extract_strided_slice %346 {offsets = [0, 0], sizes = [2, 32], strides = [1, 1]} : vector<2x128xf32> to vector<2x32xf32>
    %348 = arith.negf %347 : vector<2x32xf32>
    %349 = math.exp %348 : vector<2x32xf32>
    %cst_125 = arith.constant 1.000000e+00 : f32
    %350 = vector.broadcast %cst_125 : f32 to vector<2x32xf32>
    %351 = arith.addf %350, %349 : vector<2x32xf32>
    %352 = arith.divf %350, %351 : vector<2x32xf32>
    %353 = vector.extract_strided_slice %346 {offsets = [0, 32], sizes = [2, 32], strides = [1, 1]} : vector<2x128xf32> to vector<2x32xf32>
    %354 = arith.negf %353 : vector<2x32xf32>
    %355 = math.exp %354 : vector<2x32xf32>
    %cst_126 = arith.constant 1.000000e+00 : f32
    %356 = vector.broadcast %cst_126 : f32 to vector<2x32xf32>
    %357 = arith.addf %356, %355 : vector<2x32xf32>
    %358 = arith.divf %356, %357 : vector<2x32xf32>
    %359 = vector.extract_strided_slice %346 {offsets = [0, 64], sizes = [2, 32], strides = [1, 1]} : vector<2x128xf32> to vector<2x32xf32>
    %360 = math.tanh %359 : vector<2x32xf32>
    %361 = vector.extract_strided_slice %346 {offsets = [0, 96], sizes = [2, 32], strides = [1, 1]} : vector<2x128xf32> to vector<2x32xf32>
    %362 = arith.negf %361 : vector<2x32xf32>
    %363 = math.exp %362 : vector<2x32xf32>
    %cst_127 = arith.constant 1.000000e+00 : f32
    %364 = vector.broadcast %cst_127 : f32 to vector<2x32xf32>
    %365 = arith.addf %364, %363 : vector<2x32xf32>
    %366 = arith.divf %364, %365 : vector<2x32xf32>
    %367 = arith.mulf %358, %341 : vector<2x32xf32>
    %368 = arith.mulf %352, %360 : vector<2x32xf32>
    %369 = arith.addf %367, %368 : vector<2x32xf32>
    %370 = math.tanh %369 : vector<2x32xf32>
    %371 = arith.mulf %366, %370 : vector<2x32xf32>
    %372 = arith.index_cast %c0_i32_121 : i32 to index
    %c0_128 = arith.constant 0 : index
    %c0_129 = arith.constant 0 : index
    %373 = vector.load %arg10[%372, %c0_128, %c0_129] : memref<8x2x32xf32, #tpu.memory_space<vmem>>, vector<1x2x32xf32>
    %374 = vector.shape_cast %373 : vector<1x2x32xf32> to vector<2x32xf32>
    %375 = vector.shape_cast %371 : vector<2x32xf32> to vector<1x2x32xf32>
    tpu.vector_store %arg10[%372, %c0_128, %c0_129], %375 {strides = array<i32>} : memref<8x2x32xf32, #tpu.memory_space<vmem>>, vector<1x2x32xf32>,
    %c1_i32_130 = arith.constant 1 : i32
    %376 = arith.index_cast %c1_i32_130 : i32 to index
    %c0_131 = arith.constant 0 : index
    %c0_132 = arith.constant 0 : index
    %377 = vector.load %arg11[%376, %c0_131, %c0_132] : memref<8x2x128xf32, #tpu.memory_space<vmem>>, vector<1x2x128xf32>
    %378 = vector.shape_cast %377 : vector<1x2x128xf32> to vector<2x128xf32>
    %cst_133 = arith.constant dense<0.000000e+00> : vector<2x128xf32>
    %379 = tpu.matmul %371, %340, %cst_133 {dimension_numbers = #tpu.dot_dimension_numbers<[1], [0], [0], [1], [0, 0, 1, 1], [], []>} : vector<2x32xf32>, vector<32x128xf32>, vector<2x128xf32> -> vector<2x128xf32>
    %380 = arith.addf %378, %379 : vector<2x128xf32>
    %381 = vector.extract_strided_slice %380 {offsets = [0, 0], sizes = [2, 32], strides = [1, 1]} : vector<2x128xf32> to vector<2x32xf32>
    %382 = arith.negf %381 : vector<2x32xf32>
    %383 = math.exp %382 : vector<2x32xf32>
    %cst_134 = arith.constant 1.000000e+00 : f32
    %384 = vector.broadcast %cst_134 : f32 to vector<2x32xf32>
    %385 = arith.addf %384, %383 : vector<2x32xf32>
    %386 = arith.divf %384, %385 : vector<2x32xf32>
    %387 = vector.extract_strided_slice %380 {offsets = [0, 32], sizes = [2, 32], strides = [1, 1]} : vector<2x128xf32> to vector<2x32xf32>
    %388 = arith.negf %387 : vector<2x32xf32>
    %389 = math.exp %388 : vector<2x32xf32>
    %cst_135 = arith.constant 1.000000e+00 : f32
    %390 = vector.broadcast %cst_135 : f32 to vector<2x32xf32>
    %391 = arith.addf %390, %389 : vector<2x32xf32>
    %392 = arith.divf %390, %391 : vector<2x32xf32>
    %393 = vector.extract_strided_slice %380 {offsets = [0, 64], sizes = [2, 32], strides = [1, 1]} : vector<2x128xf32> to vector<2x32xf32>
    %394 = math.tanh %393 : vector<2x32xf32>
    %395 = vector.extract_strided_slice %380 {offsets = [0, 96], sizes = [2, 32], strides = [1, 1]} : vector<2x128xf32> to vector<2x32xf32>
    %396 = arith.negf %395 : vector<2x32xf32>
    %397 = math.exp %396 : vector<2x32xf32>
    %cst_136 = arith.constant 1.000000e+00 : f32
    %398 = vector.broadcast %cst_136 : f32 to vector<2x32xf32>
    %399 = arith.addf %398, %397 : vector<2x32xf32>
    %400 = arith.divf %398, %399 : vector<2x32xf32>
    %401 = arith.mulf %392, %369 : vector<2x32xf32>
    %402 = arith.mulf %386, %394 : vector<2x32xf32>
    %403 = arith.addf %401, %402 : vector<2x32xf32>
    %404 = math.tanh %403 : vector<2x32xf32>
    %405 = arith.mulf %400, %404 : vector<2x32xf32>
    %406 = arith.index_cast %c1_i32_130 : i32 to index
    %c0_137 = arith.constant 0 : index
    %c0_138 = arith.constant 0 : index
    %407 = vector.load %arg10[%406, %c0_137, %c0_138] : memref<8x2x32xf32, #tpu.memory_space<vmem>>, vector<1x2x32xf32>
    %408 = vector.shape_cast %407 : vector<1x2x32xf32> to vector<2x32xf32>
    %409 = vector.shape_cast %405 : vector<2x32xf32> to vector<1x2x32xf32>
    tpu.vector_store %arg10[%406, %c0_137, %c0_138], %409 {strides = array<i32>} : memref<8x2x32xf32, #tpu.memory_space<vmem>>, vector<1x2x32xf32>,
    %c2_i32_139 = arith.constant 2 : i32
    %410 = arith.index_cast %c2_i32_139 : i32 to index
    %c0_140 = arith.constant 0 : index
    %c0_141 = arith.constant 0 : index
    %411 = vector.load %arg11[%410, %c0_140, %c0_141] : memref<8x2x128xf32, #tpu.memory_space<vmem>>, vector<1x2x128xf32>
    %412 = vector.shape_cast %411 : vector<1x2x128xf32> to vector<2x128xf32>
    %cst_142 = arith.constant dense<0.000000e+00> : vector<2x128xf32>
    %413 = tpu.matmul %405, %340, %cst_142 {dimension_numbers = #tpu.dot_dimension_numbers<[1], [0], [0], [1], [0, 0, 1, 1], [], []>} : vector<2x32xf32>, vector<32x128xf32>, vector<2x128xf32> -> vector<2x128xf32>
    %414 = arith.addf %412, %413 : vector<2x128xf32>
    %415 = vector.extract_strided_slice %414 {offsets = [0, 0], sizes = [2, 32], strides = [1, 1]} : vector<2x128xf32> to vector<2x32xf32>
    %416 = arith.negf %415 : vector<2x32xf32>
    %417 = math.exp %416 : vector<2x32xf32>
    %cst_143 = arith.constant 1.000000e+00 : f32
    %418 = vector.broadcast %cst_143 : f32 to vector<2x32xf32>
    %419 = arith.addf %418, %417 : vector<2x32xf32>
    %420 = arith.divf %418, %419 : vector<2x32xf32>
    %421 = vector.extract_strided_slice %414 {offsets = [0, 32], sizes = [2, 32], strides = [1, 1]} : vector<2x128xf32> to vector<2x32xf32>
    %422 = arith.negf %421 : vector<2x32xf32>
    %423 = math.exp %422 : vector<2x32xf32>
    %cst_144 = arith.constant 1.000000e+00 : f32
    %424 = vector.broadcast %cst_144 : f32 to vector<2x32xf32>
    %425 = arith.addf %424, %423 : vector<2x32xf32>
    %426 = arith.divf %424, %425 : vector<2x32xf32>
    %427 = vector.extract_strided_slice %414 {offsets = [0, 64], sizes = [2, 32], strides = [1, 1]} : vector<2x128xf32> to vector<2x32xf32>
    %428 = math.tanh %427 : vector<2x32xf32>
    %429 = vector.extract_strided_slice %414 {offsets = [0, 96], sizes = [2, 32], strides = [1, 1]} : vector<2x128xf32> to vector<2x32xf32>
    %430 = arith.negf %429 : vector<2x32xf32>
    %431 = math.exp %430 : vector<2x32xf32>
    %cst_145 = arith.constant 1.000000e+00 : f32
    %432 = vector.broadcast %cst_145 : f32 to vector<2x32xf32>
    %433 = arith.addf %432, %431 : vector<2x32xf32>
    %434 = arith.divf %432, %433 : vector<2x32xf32>
    %435 = arith.mulf %426, %403 : vector<2x32xf32>
    %436 = arith.mulf %420, %428 : vector<2x32xf32>
    %437 = arith.addf %435, %436 : vector<2x32xf32>
    %438 = math.tanh %437 : vector<2x32xf32>
    %439 = arith.mulf %434, %438 : vector<2x32xf32>
    %440 = arith.index_cast %c2_i32_139 : i32 to index
    %c0_146 = arith.constant 0 : index
    %c0_147 = arith.constant 0 : index
    %441 = vector.load %arg10[%440, %c0_146, %c0_147] : memref<8x2x32xf32, #tpu.memory_space<vmem>>, vector<1x2x32xf32>
    %442 = vector.shape_cast %441 : vector<1x2x32xf32> to vector<2x32xf32>
    %443 = vector.shape_cast %439 : vector<2x32xf32> to vector<1x2x32xf32>
    tpu.vector_store %arg10[%440, %c0_146, %c0_147], %443 {strides = array<i32>} : memref<8x2x32xf32, #tpu.memory_space<vmem>>, vector<1x2x32xf32>,
    %c3_i32_148 = arith.constant 3 : i32
    %444 = arith.index_cast %c3_i32_148 : i32 to index
    %c0_149 = arith.constant 0 : index
    %c0_150 = arith.constant 0 : index
    %445 = vector.load %arg11[%444, %c0_149, %c0_150] : memref<8x2x128xf32, #tpu.memory_space<vmem>>, vector<1x2x128xf32>
    %446 = vector.shape_cast %445 : vector<1x2x128xf32> to vector<2x128xf32>
    %cst_151 = arith.constant dense<0.000000e+00> : vector<2x128xf32>
    %447 = tpu.matmul %439, %340, %cst_151 {dimension_numbers = #tpu.dot_dimension_numbers<[1], [0], [0], [1], [0, 0, 1, 1], [], []>} : vector<2x32xf32>, vector<32x128xf32>, vector<2x128xf32> -> vector<2x128xf32>
    %448 = arith.addf %446, %447 : vector<2x128xf32>
    %449 = vector.extract_strided_slice %448 {offsets = [0, 0], sizes = [2, 32], strides = [1, 1]} : vector<2x128xf32> to vector<2x32xf32>
    %450 = arith.negf %449 : vector<2x32xf32>
    %451 = math.exp %450 : vector<2x32xf32>
    %cst_152 = arith.constant 1.000000e+00 : f32
    %452 = vector.broadcast %cst_152 : f32 to vector<2x32xf32>
    %453 = arith.addf %452, %451 : vector<2x32xf32>
    %454 = arith.divf %452, %453 : vector<2x32xf32>
    %455 = vector.extract_strided_slice %448 {offsets = [0, 32], sizes = [2, 32], strides = [1, 1]} : vector<2x128xf32> to vector<2x32xf32>
    %456 = arith.negf %455 : vector<2x32xf32>
    %457 = math.exp %456 : vector<2x32xf32>
    %cst_153 = arith.constant 1.000000e+00 : f32
    %458 = vector.broadcast %cst_153 : f32 to vector<2x32xf32>
    %459 = arith.addf %458, %457 : vector<2x32xf32>
    %460 = arith.divf %458, %459 : vector<2x32xf32>
    %461 = vector.extract_strided_slice %448 {offsets = [0, 64], sizes = [2, 32], strides = [1, 1]} : vector<2x128xf32> to vector<2x32xf32>
    %462 = math.tanh %461 : vector<2x32xf32>
    %463 = vector.extract_strided_slice %448 {offsets = [0, 96], sizes = [2, 32], strides = [1, 1]} : vector<2x128xf32> to vector<2x32xf32>
    %464 = arith.negf %463 : vector<2x32xf32>
    %465 = math.exp %464 : vector<2x32xf32>
    %cst_154 = arith.constant 1.000000e+00 : f32
    %466 = vector.broadcast %cst_154 : f32 to vector<2x32xf32>
    %467 = arith.addf %466, %465 : vector<2x32xf32>
    %468 = arith.divf %466, %467 : vector<2x32xf32>
    %469 = arith.mulf %460, %437 : vector<2x32xf32>
    %470 = arith.mulf %454, %462 : vector<2x32xf32>
    %471 = arith.addf %469, %470 : vector<2x32xf32>
    %472 = math.tanh %471 : vector<2x32xf32>
    %473 = arith.mulf %468, %472 : vector<2x32xf32>
    %474 = arith.index_cast %c3_i32_148 : i32 to index
    %c0_155 = arith.constant 0 : index
    %c0_156 = arith.constant 0 : index
    %475 = vector.load %arg10[%474, %c0_155, %c0_156] : memref<8x2x32xf32, #tpu.memory_space<vmem>>, vector<1x2x32xf32>
    %476 = vector.shape_cast %475 : vector<1x2x32xf32> to vector<2x32xf32>
    %477 = vector.shape_cast %473 : vector<2x32xf32> to vector<1x2x32xf32>
    tpu.vector_store %arg10[%474, %c0_155, %c0_156], %477 {strides = array<i32>} : memref<8x2x32xf32, #tpu.memory_space<vmem>>, vector<1x2x32xf32>,
    %c4_i32_157 = arith.constant 4 : i32
    %478 = arith.index_cast %c4_i32_157 : i32 to index
    %c0_158 = arith.constant 0 : index
    %c0_159 = arith.constant 0 : index
    %479 = vector.load %arg11[%478, %c0_158, %c0_159] : memref<8x2x128xf32, #tpu.memory_space<vmem>>, vector<1x2x128xf32>
    %480 = vector.shape_cast %479 : vector<1x2x128xf32> to vector<2x128xf32>
    %cst_160 = arith.constant dense<0.000000e+00> : vector<2x128xf32>
    %481 = tpu.matmul %473, %340, %cst_160 {dimension_numbers = #tpu.dot_dimension_numbers<[1], [0], [0], [1], [0, 0, 1, 1], [], []>} : vector<2x32xf32>, vector<32x128xf32>, vector<2x128xf32> -> vector<2x128xf32>
    %482 = arith.addf %480, %481 : vector<2x128xf32>
    %483 = vector.extract_strided_slice %482 {offsets = [0, 0], sizes = [2, 32], strides = [1, 1]} : vector<2x128xf32> to vector<2x32xf32>
    %484 = arith.negf %483 : vector<2x32xf32>
    %485 = math.exp %484 : vector<2x32xf32>
    %cst_161 = arith.constant 1.000000e+00 : f32
    %486 = vector.broadcast %cst_161 : f32 to vector<2x32xf32>
    %487 = arith.addf %486, %485 : vector<2x32xf32>
    %488 = arith.divf %486, %487 : vector<2x32xf32>
    %489 = vector.extract_strided_slice %482 {offsets = [0, 32], sizes = [2, 32], strides = [1, 1]} : vector<2x128xf32> to vector<2x32xf32>
    %490 = arith.negf %489 : vector<2x32xf32>
    %491 = math.exp %490 : vector<2x32xf32>
    %cst_162 = arith.constant 1.000000e+00 : f32
    %492 = vector.broadcast %cst_162 : f32 to vector<2x32xf32>
    %493 = arith.addf %492, %491 : vector<2x32xf32>
    %494 = arith.divf %492, %493 : vector<2x32xf32>
    %495 = vector.extract_strided_slice %482 {offsets = [0, 64], sizes = [2, 32], strides = [1, 1]} : vector<2x128xf32> to vector<2x32xf32>
    %496 = math.tanh %495 : vector<2x32xf32>
    %497 = vector.extract_strided_slice %482 {offsets = [0, 96], sizes = [2, 32], strides = [1, 1]} : vector<2x128xf32> to vector<2x32xf32>
    %498 = arith.negf %497 : vector<2x32xf32>
    %499 = math.exp %498 : vector<2x32xf32>
    %cst_163 = arith.constant 1.000000e+00 : f32
    %500 = vector.broadcast %cst_163 : f32 to vector<2x32xf32>
    %501 = arith.addf %500, %499 : vector<2x32xf32>
    %502 = arith.divf %500, %501 : vector<2x32xf32>
    %503 = arith.mulf %494, %471 : vector<2x32xf32>
    %504 = arith.mulf %488, %496 : vector<2x32xf32>
    %505 = arith.addf %503, %504 : vector<2x32xf32>
    %506 = math.tanh %505 : vector<2x32xf32>
    %507 = arith.mulf %502, %506 : vector<2x32xf32>
    %508 = arith.index_cast %c4_i32_157 : i32 to index
    %c0_164 = arith.constant 0 : index
    %c0_165 = arith.constant 0 : index
    %509 = vector.load %arg10[%508, %c0_164, %c0_165] : memref<8x2x32xf32, #tpu.memory_space<vmem>>, vector<1x2x32xf32>
    %510 = vector.shape_cast %509 : vector<1x2x32xf32> to vector<2x32xf32>
    %511 = vector.shape_cast %507 : vector<2x32xf32> to vector<1x2x32xf32>
    tpu.vector_store %arg10[%508, %c0_164, %c0_165], %511 {strides = array<i32>} : memref<8x2x32xf32, #tpu.memory_space<vmem>>, vector<1x2x32xf32>,
    %c5_i32_166 = arith.constant 5 : i32
    %512 = arith.index_cast %c5_i32_166 : i32 to index
    %c0_167 = arith.constant 0 : index
    %c0_168 = arith.constant 0 : index
    %513 = vector.load %arg11[%512, %c0_167, %c0_168] : memref<8x2x128xf32, #tpu.memory_space<vmem>>, vector<1x2x128xf32>
    %514 = vector.shape_cast %513 : vector<1x2x128xf32> to vector<2x128xf32>
    %cst_169 = arith.constant dense<0.000000e+00> : vector<2x128xf32>
    %515 = tpu.matmul %507, %340, %cst_169 {dimension_numbers = #tpu.dot_dimension_numbers<[1], [0], [0], [1], [0, 0, 1, 1], [], []>} : vector<2x32xf32>, vector<32x128xf32>, vector<2x128xf32> -> vector<2x128xf32>
    %516 = arith.addf %514, %515 : vector<2x128xf32>
    %517 = vector.extract_strided_slice %516 {offsets = [0, 0], sizes = [2, 32], strides = [1, 1]} : vector<2x128xf32> to vector<2x32xf32>
    %518 = arith.negf %517 : vector<2x32xf32>
    %519 = math.exp %518 : vector<2x32xf32>
    %cst_170 = arith.constant 1.000000e+00 : f32
    %520 = vector.broadcast %cst_170 : f32 to vector<2x32xf32>
    %521 = arith.addf %520, %519 : vector<2x32xf32>
    %522 = arith.divf %520, %521 : vector<2x32xf32>
    %523 = vector.extract_strided_slice %516 {offsets = [0, 32], sizes = [2, 32], strides = [1, 1]} : vector<2x128xf32> to vector<2x32xf32>
    %524 = arith.negf %523 : vector<2x32xf32>
    %525 = math.exp %524 : vector<2x32xf32>
    %cst_171 = arith.constant 1.000000e+00 : f32
    %526 = vector.broadcast %cst_171 : f32 to vector<2x32xf32>
    %527 = arith.addf %526, %525 : vector<2x32xf32>
    %528 = arith.divf %526, %527 : vector<2x32xf32>
    %529 = vector.extract_strided_slice %516 {offsets = [0, 64], sizes = [2, 32], strides = [1, 1]} : vector<2x128xf32> to vector<2x32xf32>
    %530 = math.tanh %529 : vector<2x32xf32>
    %531 = vector.extract_strided_slice %516 {offsets = [0, 96], sizes = [2, 32], strides = [1, 1]} : vector<2x128xf32> to vector<2x32xf32>
    %532 = arith.negf %531 : vector<2x32xf32>
    %533 = math.exp %532 : vector<2x32xf32>
    %cst_172 = arith.constant 1.000000e+00 : f32
    %534 = vector.broadcast %cst_172 : f32 to vector<2x32xf32>
    %535 = arith.addf %534, %533 : vector<2x32xf32>
    %536 = arith.divf %534, %535 : vector<2x32xf32>
    %537 = arith.mulf %528, %505 : vector<2x32xf32>
    %538 = arith.mulf %522, %530 : vector<2x32xf32>
    %539 = arith.addf %537, %538 : vector<2x32xf32>
    %540 = math.tanh %539 : vector<2x32xf32>
    %541 = arith.mulf %536, %540 : vector<2x32xf32>
    %542 = arith.index_cast %c5_i32_166 : i32 to index
    %c0_173 = arith.constant 0 : index
    %c0_174 = arith.constant 0 : index
    %543 = vector.load %arg10[%542, %c0_173, %c0_174] : memref<8x2x32xf32, #tpu.memory_space<vmem>>, vector<1x2x32xf32>
    %544 = vector.shape_cast %543 : vector<1x2x32xf32> to vector<2x32xf32>
    %545 = vector.shape_cast %541 : vector<2x32xf32> to vector<1x2x32xf32>
    tpu.vector_store %arg10[%542, %c0_173, %c0_174], %545 {strides = array<i32>} : memref<8x2x32xf32, #tpu.memory_space<vmem>>, vector<1x2x32xf32>,
    %c6_i32_175 = arith.constant 6 : i32
    %546 = arith.index_cast %c6_i32_175 : i32 to index
    %c0_176 = arith.constant 0 : index
    %c0_177 = arith.constant 0 : index
    %547 = vector.load %arg11[%546, %c0_176, %c0_177] : memref<8x2x128xf32, #tpu.memory_space<vmem>>, vector<1x2x128xf32>
    %548 = vector.shape_cast %547 : vector<1x2x128xf32> to vector<2x128xf32>
    %cst_178 = arith.constant dense<0.000000e+00> : vector<2x128xf32>
    %549 = tpu.matmul %541, %340, %cst_178 {dimension_numbers = #tpu.dot_dimension_numbers<[1], [0], [0], [1], [0, 0, 1, 1], [], []>} : vector<2x32xf32>, vector<32x128xf32>, vector<2x128xf32> -> vector<2x128xf32>
    %550 = arith.addf %548, %549 : vector<2x128xf32>
    %551 = vector.extract_strided_slice %550 {offsets = [0, 0], sizes = [2, 32], strides = [1, 1]} : vector<2x128xf32> to vector<2x32xf32>
    %552 = arith.negf %551 : vector<2x32xf32>
    %553 = math.exp %552 : vector<2x32xf32>
    %cst_179 = arith.constant 1.000000e+00 : f32
    %554 = vector.broadcast %cst_179 : f32 to vector<2x32xf32>
    %555 = arith.addf %554, %553 : vector<2x32xf32>
    %556 = arith.divf %554, %555 : vector<2x32xf32>
    %557 = vector.extract_strided_slice %550 {offsets = [0, 32], sizes = [2, 32], strides = [1, 1]} : vector<2x128xf32> to vector<2x32xf32>
    %558 = arith.negf %557 : vector<2x32xf32>
    %559 = math.exp %558 : vector<2x32xf32>
    %cst_180 = arith.constant 1.000000e+00 : f32
    %560 = vector.broadcast %cst_180 : f32 to vector<2x32xf32>
    %561 = arith.addf %560, %559 : vector<2x32xf32>
    %562 = arith.divf %560, %561 : vector<2x32xf32>
    %563 = vector.extract_strided_slice %550 {offsets = [0, 64], sizes = [2, 32], strides = [1, 1]} : vector<2x128xf32> to vector<2x32xf32>
    %564 = math.tanh %563 : vector<2x32xf32>
    %565 = vector.extract_strided_slice %550 {offsets = [0, 96], sizes = [2, 32], strides = [1, 1]} : vector<2x128xf32> to vector<2x32xf32>
    %566 = arith.negf %565 : vector<2x32xf32>
    %567 = math.exp %566 : vector<2x32xf32>
    %cst_181 = arith.constant 1.000000e+00 : f32
    %568 = vector.broadcast %cst_181 : f32 to vector<2x32xf32>
    %569 = arith.addf %568, %567 : vector<2x32xf32>
    %570 = arith.divf %568, %569 : vector<2x32xf32>
    %571 = arith.mulf %562, %539 : vector<2x32xf32>
    %572 = arith.mulf %556, %564 : vector<2x32xf32>
    %573 = arith.addf %571, %572 : vector<2x32xf32>
    %574 = math.tanh %573 : vector<2x32xf32>
    %575 = arith.mulf %570, %574 : vector<2x32xf32>
    %576 = arith.index_cast %c6_i32_175 : i32 to index
    %c0_182 = arith.constant 0 : index
    %c0_183 = arith.constant 0 : index
    %577 = vector.load %arg10[%576, %c0_182, %c0_183] : memref<8x2x32xf32, #tpu.memory_space<vmem>>, vector<1x2x32xf32>
    %578 = vector.shape_cast %577 : vector<1x2x32xf32> to vector<2x32xf32>
    %579 = vector.shape_cast %575 : vector<2x32xf32> to vector<1x2x32xf32>
    tpu.vector_store %arg10[%576, %c0_182, %c0_183], %579 {strides = array<i32>} : memref<8x2x32xf32, #tpu.memory_space<vmem>>, vector<1x2x32xf32>,
    %c7_i32_184 = arith.constant 7 : i32
    %580 = arith.index_cast %c7_i32_184 : i32 to index
    %c0_185 = arith.constant 0 : index
    %c0_186 = arith.constant 0 : index
    %581 = vector.load %arg11[%580, %c0_185, %c0_186] : memref<8x2x128xf32, #tpu.memory_space<vmem>>, vector<1x2x128xf32>
    %582 = vector.shape_cast %581 : vector<1x2x128xf32> to vector<2x128xf32>
    %cst_187 = arith.constant dense<0.000000e+00> : vector<2x128xf32>
    %583 = tpu.matmul %575, %340, %cst_187 {dimension_numbers = #tpu.dot_dimension_numbers<[1], [0], [0], [1], [0, 0, 1, 1], [], []>} : vector<2x32xf32>, vector<32x128xf32>, vector<2x128xf32> -> vector<2x128xf32>
    %584 = arith.addf %582, %583 : vector<2x128xf32>
    %585 = vector.extract_strided_slice %584 {offsets = [0, 0], sizes = [2, 32], strides = [1, 1]} : vector<2x128xf32> to vector<2x32xf32>
    %586 = arith.negf %585 : vector<2x32xf32>
    %587 = math.exp %586 : vector<2x32xf32>
    %cst_188 = arith.constant 1.000000e+00 : f32
    %588 = vector.broadcast %cst_188 : f32 to vector<2x32xf32>
    %589 = arith.addf %588, %587 : vector<2x32xf32>
    %590 = arith.divf %588, %589 : vector<2x32xf32>
    %591 = vector.extract_strided_slice %584 {offsets = [0, 32], sizes = [2, 32], strides = [1, 1]} : vector<2x128xf32> to vector<2x32xf32>
    %592 = arith.negf %591 : vector<2x32xf32>
    %593 = math.exp %592 : vector<2x32xf32>
    %cst_189 = arith.constant 1.000000e+00 : f32
    %594 = vector.broadcast %cst_189 : f32 to vector<2x32xf32>
    %595 = arith.addf %594, %593 : vector<2x32xf32>
    %596 = arith.divf %594, %595 : vector<2x32xf32>
    %597 = vector.extract_strided_slice %584 {offsets = [0, 64], sizes = [2, 32], strides = [1, 1]} : vector<2x128xf32> to vector<2x32xf32>
    %598 = math.tanh %597 : vector<2x32xf32>
    %599 = vector.extract_strided_slice %584 {offsets = [0, 96], sizes = [2, 32], strides = [1, 1]} : vector<2x128xf32> to vector<2x32xf32>
    %600 = arith.negf %599 : vector<2x32xf32>
    %601 = math.exp %600 : vector<2x32xf32>
    %cst_190 = arith.constant 1.000000e+00 : f32
    %602 = vector.broadcast %cst_190 : f32 to vector<2x32xf32>
    %603 = arith.addf %602, %601 : vector<2x32xf32>
    %604 = arith.divf %602, %603 : vector<2x32xf32>
    %605 = arith.mulf %596, %573 : vector<2x32xf32>
    %606 = arith.mulf %590, %598 : vector<2x32xf32>
    %607 = arith.addf %605, %606 : vector<2x32xf32>
    %608 = math.tanh %607 : vector<2x32xf32>
    %609 = arith.mulf %604, %608 : vector<2x32xf32>
    %610 = arith.index_cast %c7_i32_184 : i32 to index
    %c0_191 = arith.constant 0 : index
    %c0_192 = arith.constant 0 : index
    %611 = vector.load %arg10[%610, %c0_191, %c0_192] : memref<8x2x32xf32, #tpu.memory_space<vmem>>, vector<1x2x32xf32>
    %612 = vector.shape_cast %611 : vector<1x2x32xf32> to vector<2x32xf32>
    %613 = vector.shape_cast %609 : vector<2x32xf32> to vector<1x2x32xf32>
    tpu.vector_store %arg10[%610, %c0_191, %c0_192], %613 {strides = array<i32>} : memref<8x2x32xf32, #tpu.memory_space<vmem>>, vector<1x2x32xf32>,
    %c8_i32_193 = arith.constant 8 : i32
    %c0_194 = arith.constant 0 : index
    %c0_195 = arith.constant 0 : index
    %614 = vector.load %arg5[%c0_194, %c0_195] : memref<32x32xf32, #tpu.memory_space<vmem>>, vector<32x32xf32>
    %cst_196 = arith.constant dense<0.000000e+00> : vector<2x32xf32>
    %615 = tpu.matmul %609, %614, %cst_196 {dimension_numbers = #tpu.dot_dimension_numbers<[1], [0], [0], [1], [0, 0, 1, 1], [], []>} : vector<2x32xf32>, vector<32x32xf32>, vector<2x32xf32> -> vector<2x32xf32>
    %c0_197 = arith.constant 0 : index
    %c0_198 = arith.constant 0 : index
    %616 = vector.load %arg6[%c0_197, %c0_198] : memref<1x32xf32, #tpu.memory_space<vmem>>, vector<1x32xf32>
    %617 = vector.broadcast %616 : vector<1x32xf32> to vector<2x32xf32>
    %618 = arith.addf %615, %617 : vector<2x32xf32>
    %cst_199 = arith.constant 0.000000e+00 : f32
    %619 = vector.broadcast %cst_199 : f32 to vector<2x32xf32>
    %620 = arith.maximumf %618, %619 : vector<2x32xf32>
    %c0_200 = arith.constant 0 : index
    %c0_201 = arith.constant 0 : index
    %621 = vector.load %arg7[%c0_200, %c0_201] : memref<32x128xf32, #tpu.memory_space<vmem>>, vector<32x128xf32>
    %cst_202 = arith.constant dense<0.000000e+00> : vector<2x128xf32>
    %622 = tpu.matmul %620, %621, %cst_202 {dimension_numbers = #tpu.dot_dimension_numbers<[1], [0], [0], [1], [0, 0, 1, 1], [], []>} : vector<2x32xf32>, vector<32x128xf32>, vector<2x128xf32> -> vector<2x128xf32>
    %c0_203 = arith.constant 0 : index
    %c0_204 = arith.constant 0 : index
    %623 = vector.load %arg8[%c0_203, %c0_204] : memref<1x128xf32, #tpu.memory_space<vmem>>, vector<1x128xf32>
    %624 = vector.broadcast %623 : vector<1x128xf32> to vector<2x128xf32>
    %625 = arith.addf %622, %624 : vector<2x128xf32>
    %c0_205 = arith.constant 0 : index
    %c0_206 = arith.constant 0 : index
    %626 = vector.load %arg9[%c0_205, %c0_206] : memref<2x128xf32, #tpu.memory_space<vmem>>, vector<2x128xf32>
    tpu.vector_store %arg9[%c0_205, %c0_206], %625 {strides = array<i32>} : memref<2x128xf32, #tpu.memory_space<vmem>>, vector<2x128xf32>,
    return
  }
}

</mosaic_0001>

<llo_original>
// kernel: lstm_forecaster_forward.1
$region0: #{lstm_forecaster_forward.1}
  #allocation0 [shape = 'u32[]', space=smem, size = 0x4, offset = 0x4, fixed_abs, tag = 'smem constant byte address 0x4 - core index']
  #allocation1 [shape = 'u32[144,128]{1,0:T(1,128)}', space=vmem, size = 0x12000, scoped, tag = 'internal scratch']
  #allocation2 [shape = 'f32[8,2,32]{2,1,0:T(2,128)}', space=vmem, size = 0x2000, scoped, tag = 'scratch operand']
  #allocation3 [shape = 'f32[8,2,128]{2,1,0:T(2,128)}', space=vmem, size = 0x2000, scoped, tag = 'scratch operand']
  %s0 = inlined_call_operand.vmem [shape: f32[8,2,128], index: 0, kind: input, shape index: {}]
  %s1 = inlined_call_operand.vmem [shape: f32[32,128], index: 1, kind: input, shape index: {}]
  %s2 = inlined_call_operand.vmem [shape: f32[32,128], index: 2, kind: input, shape index: {}]
  %s3 = inlined_call_operand.vmem [shape: f32[32,128], index: 3, kind: input, shape index: {}]
  %s4 = inlined_call_operand.vmem [shape: f32[1,128], index: 4, kind: input, shape index: {}]
  %s5 = inlined_call_operand.vmem [shape: f32[32,32], index: 5, kind: input, shape index: {}]
  %s6 = inlined_call_operand.vmem [shape: f32[1,32], index: 6, kind: input, shape index: {}]
  %s7 = inlined_call_operand.vmem [shape: f32[32,128], index: 7, kind: input, shape index: {}]
  %s8 = inlined_call_operand.vmem [shape: f32[1,128], index: 8, kind: input, shape index: {}]
  %s9 = inlined_call_operand.vmem [shape: f32[2,128], index: 9, kind: output, shape index: {}]
  %s10 = sld [smem:[#allocation0]]
  $region46: #{lstm_forecaster_forward.1} parent=0
    _
  %s12 = ssub.s32 1, %s10
  %s13 = scalar_select 0, %s12, %s10
  // Predicated region
  $region2: #{lstm_forecaster_forward.1} parent=0 // pred_check
    _
  $region3: #{lstm_forecaster_forward.1} parent=0 // pred_check_branch
    %15 = sbr.rel (0) target = $region5
  $region4: #{lstm_forecaster_forward.1} parent=0 // pred_region
    _
  $region5: #{lstm_forecaster_forward.1} parent=0 // pred_fallthru
    _
  // Predicated region
  $region6: #{lstm_forecaster_forward.1} parent=0 // pred_check
    _
  $region7: #{lstm_forecaster_forward.1} parent=0 // pred_check_branch
    %17 = sbr.rel (0) target = $region9
  $region8: #{lstm_forecaster_forward.1} parent=0 // pred_region
    _
  $region9: #{lstm_forecaster_forward.1} parent=0 // pred_fallthru
    _
  // Predicated region
  $region10: #{lstm_forecaster_forward.1} parent=0 // pred_check
    _
  $region11: #{lstm_forecaster_forward.1} parent=0 // pred_check_branch
    %19 = sbr.rel (0) target = $region13
  $region12: #{lstm_forecaster_forward.1} parent=0 // pred_region
    _
  $region13: #{lstm_forecaster_forward.1} parent=0 // pred_fallthru
    _
  // Predicated region
  $region14: #{lstm_forecaster_forward.1} parent=0 // pred_check
    _
  $region15: #{lstm_forecaster_forward.1} parent=0 // pred_check_branch
    %21 = sbr.rel (0) target = $region17
  $region16: #{lstm_forecaster_forward.1} parent=0 // pred_region
    _
  $region17: #{lstm_forecaster_forward.1} parent=0 // pred_fallthru
    _
  // Predicated region
  $region18: #{lstm_forecaster_forward.1} parent=0 // pred_check
    _
  $region19: #{lstm_forecaster_forward.1} parent=0 // pred_check_branch
    %23 = sbr.rel (0) target = $region21
  $region20: #{lstm_forecaster_forward.1} parent=0 // pred_region
    _
  $region21: #{lstm_forecaster_forward.1} parent=0 // pred_fallthru
    _
  // Predicated region
  $region22: #{lstm_forecaster_forward.1} parent=0 // pred_check
    _
  $region23: #{lstm_forecaster_forward.1} parent=0 // pred_check_branch
    %25 = sbr.rel (0) target = $region25
  $region24: #{lstm_forecaster_forward.1} parent=0 // pred_region
    _
  $region25: #{lstm_forecaster_forward.1} parent=0 // pred_fallthru
    _
  // Predicated region
  $region26: #{lstm_forecaster_forward.1} parent=0 // pred_check
    _
  $region27: #{lstm_forecaster_forward.1} parent=0 // pred_check_branch
    %27 = sbr.rel (0) target = $region29
  $region28: #{lstm_forecaster_forward.1} parent=0 // pred_region
    _
  $region29: #{lstm_forecaster_forward.1} parent=0 // pred_fallthru
    _
  // Predicated region
  $region30: #{lstm_forecaster_forward.1} parent=0 // pred_check
    _
  $region31: #{lstm_forecaster_forward.1} parent=0 // pred_check_branch
    %29 = sbr.rel (0) target = $region33
  $region32: #{lstm_forecaster_forward.1} parent=0 // pred_region
    _
  $region33: #{lstm_forecaster_forward.1} parent=0 // pred_fallthru
    _
  // Predicated region
  $region34: #{lstm_forecaster_forward.1} parent=0 // pred_check
    _
  $region35: #{lstm_forecaster_forward.1} parent=0 // pred_check_branch
    %31 = sbr.rel (0) target = $region37
  $region36: #{lstm_forecaster_forward.1} parent=0 // pred_region
    _
  $region37: #{lstm_forecaster_forward.1} parent=0 // pred_fallthru
    _
  %v32 = vld [vmem:[%s1] sm:$0xff]
  %v33 = vld [vmem:[%s1 + $0x8] sm:$0xff]
  %v34 = vld [vmem:[%s1 + $0x10] sm:$0xff]
  %v35 = vld [vmem:[%s1 + $0x18] sm:$0xff]
  %v36 = vld [vmem:[%s0] sm:$0x3]
  %vm37 = vcmask 261120
  %v39 = vsel %vm37, 0.0, 0
  %41 = vmatprep.subr.mxu0 0.0
  %42 = vmatpush1.msra.mxu0 %v32
  %43 = vmatprep.subr.mxu0 0.0
  %44 = vmatpush1.msra.mxu0 %v33
  %45 = vmatprep.subr.mxu0 0.0
  %46 = vmatpush1.msra.mxu0 %v34
  %47 = vmatprep.subr.mxu0 0.0
  %48 = vmatpush1.msra.mxu0 %v35
  %49 = vmatprep.subr.mxu0 0.0
  %50 = vmatpush1.msra.mxu0 0.0
  %51 = vmatprep.subr.mxu0 0.0
  %52 = vmatpush1.msra.mxu0 0.0
  %53 = vmatprep.subr.mxu0 0.0
  %54 = vmatpush1.msra.mxu0 0.0
  %55 = vmatprep.subr.mxu0 0.0
  %56 = vmatpush1.msra.mxu0 0.0
  %57 = vmatprep.subr.mxu0 0.0
  %58 = vmatpush1.msra.mxu0 0.0
  %59 = vmatprep.subr.mxu0 0.0
  %60 = vmatpush1.msra.mxu0 0.0
  %61 = vmatprep.subr.mxu0 0.0
  %62 = vmatpush1.msra.mxu0 0.0
  %63 = vmatprep.subr.mxu0 0.0
  %64 = vmatpush1.msra.mxu0 0.0
  %65 = vmatprep.subr.mxu0 0.0
  %66 = vmatpush1.msra.mxu0 0.0
  %67 = vmatprep.subr.mxu0 0.0
  %68 = vmatpush1.msra.mxu0 0.0
  %69 = vmatprep.subr.mxu0 0.0
  %70 = vmatpush1.msra.mxu0 0.0
  %71 = vmatprep.subr.mxu0 0.0
  %72 = vmatpush1.msra.mxu0 0.0
  %73 = vmatprep.subr.mxu0 0.0
  %74 = vmatpush1.msra.mxu0 0.0
  %75 = vmatprep.subr.mxu0 0.0
  %76 = vmatpush1.msra.mxu0 0.0
  %77 = vmatprep.subr.mxu0 0.0
  %78 = vmatpush1.msra.mxu0 0.0
  %79 = vmatprep.subr.mxu0 0.0
  %80 = vmatpush1.msra.mxu0 0.0
  %81 = vmatprep.subr.mxu0 0.0
  %82 = vmatpush1.msra.mxu0 0.0
  %83 = vmatprep.subr.mxu0 0.0
  %84 = vmatpush1.msra.mxu0 0.0
  %85 = vmatprep.subr.mxu0 0.0
  %86 = vmatpush1.msra.mxu0 0.0
  %87 = vmatprep.subr.mxu0 0.0
  %88 = vmatpush1.msra.mxu0 0.0
  %89 = vmatprep.subr.mxu0 0.0
  %90 = vmatpush1.msra.mxu0 0.0
  %91 = vmatprep.subr.mxu0 0.0
  %92 = vmatpush1.msra.mxu0 0.0
  %93 = vmatprep.subr.mxu0 0.0
  %94 = vmatpush1.msra.mxu0 0.0
  %95 = vmatprep.subr.mxu0 0.0
  %96 = vmatpush1.msra.mxu0 0.0
  %97 = vmatprep.subr.mxu0 0.0
  %98 = vmatpush1.msra.mxu0 0.0
  %99 = vmatprep.subr.mxu0 0.0
  %100 = vmatpush1.msra.mxu0 0.0
  %101 = vmatprep.subr.mxu0 0.0
  %102 = vmatpush1.msra.mxu0 0.0
  %103 = vmatprep.subr.mxu0 0.0
  %104 = vmatpush1.msra.mxu0 0.0
  %105 = vmatprep.mubr.f32.mxu0 0.0
  %106 = vmatmul.mubr.f32.gmra.mrb[0].mxu0 %v39
  %v107 = vpop.f32.mrb[0].mxu0
  %v108 = vadd.f32 0.0, %v107
  %v109 = vpop.f32.mrb[0].mxu0
  %110 = vdwg.mxu0
  %v111 = vadd.f32 %v36, %v108
  %v112 = vxor.u32 %v111, 2147483648
  %v113 = vmul.f32 %v112, 1.442695
  %v114 = vpow.pop %v113
  %v115 = vadd.f32 %v114, 1.0
  %v116 = vrcp.pop %v115
  %v117 = vmul.f32 1.0, %v116
  %v118 = vtanh.pop %v111
  %v119 = vmul.f32 %v117, 0.0
  %121 = vrot.lane.b32.xlu0 %v118, 64
  %v122 = vpop.permute.xlu0 %121
  %v124 = vmul.f32 %v117, %v122
  %126 = vrot.lane.b32.xlu0 %v124, 32
  %v127 = vpop.permute.xlu0 %126
  %v129 = vadd.f32 %v119, %v127
  %v130 = vtanh.pop %v129
  %132 = vrot.lane.b32.xlu0 %v130, 64
  %v133 = vpop.permute.xlu0 %132
  %v135 = vmul.f32 %v117, %v133
  %137 = vrot.lane.b32.xlu0 %v135, 32
  %v138 = vpop.permute.xlu0 %137
  %vm140 = vcmask 254976
  %141 = vst.msk [vmem:[#allocation2] sm:$0x3] %vm140, %v138
  %s142 = scalar_lea.vmem %s0, 2
  %v143 = vld [vmem:[%s142] sm:$0x3]
  %v144 = vsel %vm37, %v138, 0
  %146 = vmatprep.subr.mxu0 0.0
  %147 = vmatpush1.msra.mxu0 %v32
  %148 = vmatprep.subr.mxu0 0.0
  %149 = vmatpush1.msra.mxu0 %v33
  %150 = vmatprep.subr.mxu0 0.0
  %151 = vmatpush1.msra.mxu0 %v34
  %152 = vmatprep.subr.mxu0 0.0
  %153 = vmatpush1.msra.mxu0 %v35
  %154 = vmatprep.subr.mxu0 0.0
  %155 = vmatpush1.msra.mxu0 0.0
  %156 = vmatprep.subr.mxu0 0.0
  %157 = vmatpush1.msra.mxu0 0.0
  %158 = vmatprep.subr.mxu0 0.0
  %159 = vmatpush1.msra.mxu0 0.0
  %160 = vmatprep.subr.mxu0 0.0
  %161 = vmatpush1.msra.mxu0 0.0
  %162 = vmatprep.subr.mxu0 0.0
  %163 = vmatpush1.msra.mxu0 0.0
  %164 = vmatprep.subr.mxu0 0.0
  %165 = vmatpush1.msra.mxu0 0.0
  %166 = vmatprep.subr.mxu0 0.0
  %167 = vmatpush1.msra.mxu0 0.0
  %168 = vmatprep.subr.mxu0 0.0
  %169 = vmatpush1.msra.mxu0 0.0
  %170 = vmatprep.subr.mxu0 0.0
  %171 = vmatpush1.msra.mxu0 0.0
  %172 = vmatprep.subr.mxu0 0.0
  %173 = vmatpush1.msra.mxu0 0.0
  %174 = vmatprep.subr.mxu0 0.0
  %175 = vmatpush1.msra.mxu0 0.0
  %176 = vmatprep.subr.mxu0 0.0
  %177 = vmatpush1.msra.mxu0 0.0
  %178 = vmatprep.subr.mxu0 0.0
  %179 = vmatpush1.msra.mxu0 0.0
  %180 = vmatprep.subr.mxu0 0.0
  %181 = vmatpush1.msra.mxu0 0.0
  %182 = vmatprep.subr.mxu0 0.0
  %183 = vmatpush1.msra.mxu0 0.0
  %184 = vmatprep.subr.mxu0 0.0
  %185 = vmatpush1.msra.mxu0 0.0
  %186 = vmatprep.subr.mxu0 0.0
  %187 = vmatpush1.msra.mxu0 0.0
  %188 = vmatprep.subr.mxu0 0.0
  %189 = vmatpush1.msra.mxu0 0.0
  %190 = vmatprep.subr.mxu0 0.0
  %191 = vmatpush1.msra.mxu0 0.0
  %192 = vmatprep.subr.mxu0 0.0
  %193 = vmatpush1.msra.mxu0 0.0
  %194 = vmatprep.subr.mxu0 0.0
  %195 = vmatpush1.msra.mxu0 0.0
  %196 = vmatprep.subr.mxu0 0.0
  %197 = vmatpush1.msra.mxu0 0.0
  %198 = vmatprep.subr.mxu0 0.0
  %199 = vmatpush1.msra.mxu0 0.0
  %200 = vmatprep.subr.mxu0 0.0
  %201 = vmatpush1.msra.mxu0 0.0
  %202 = vmatprep.subr.mxu0 0.0
  %203 = vmatpush1.msra.mxu0 0.0
  %204 = vmatprep.subr.mxu0 0.0
  %205 = vmatpush1.msra.mxu0 0.0
  %206 = vmatprep.subr.mxu0 0.0
  %207 = vmatpush1.msra.mxu0 0.0
  %208 = vmatprep.subr.mxu0 0.0
  %209 = vmatpush1.msra.mxu0 0.0
  %210 = vmatprep.mubr.f32.mxu0 0.0
  %211 = vmatmul.mubr.f32.gmra.mrb[0].mxu0 %v144
  %v212 = vpop.f32.mrb[0].mxu0
  %v213 = vadd.f32 0.0, %v212
  %v214 = vpop.f32.mrb[0].mxu0
  %215 = vdwg.mxu0
  %v216 = vadd.f32 %v143, %v213
  %v217 = vxor.u32 %v216, 2147483648
  %v218 = vmul.f32 %v217, 1.442695
  %v219 = vpow.pop %v218
  %v220 = vadd.f32 %v219, 1.0
  %v221 = vrcp.pop %v220
  %v222 = vmul.f32 1.0, %v221
  %v223 = vtanh.pop %v216
  %v224 = vmul.f32 %v222, %v129
  %226 = vrot.lane.b32.xlu0 %v223, 64
  %v227 = vpop.permute.xlu0 %226
  %v229 = vmul.f32 %v222, %v227
  %231 = vrot.lane.b32.xlu0 %v229, 32
  %v232 = vpop.permute.xlu0 %231
  %v234 = vadd.f32 %v224, %v232
  %v235 = vtanh.pop %v234
  %237 = vrot.lane.b32.xlu0 %v235, 64
  %v238 = vpop.permute.xlu0 %237
  %v240 = vmul.f32 %v222, %v238
  %242 = vrot.lane.b32.xlu0 %v240, 32
  %v243 = vpop.permute.xlu0 %242
  %s245 = scalar_lea.vmem [#allocation2], 2
  %246 = vst.msk [vmem:[%s245] sm:$0x3] %vm140, %v243
  %s247 = scalar_lea.vmem %s0, 4
  %v248 = vld [vmem:[%s247] sm:$0x3]
  %v249 = vsel %vm37, %v243, 0
  %251 = vmatprep.subr.mxu0 0.0
  %252 = vmatpush1.msra.mxu0 %v32
  %253 = vmatprep.subr.mxu0 0.0
  %254 = vmatpush1.msra.mxu0 %v33
  %255 = vmatprep.subr.mxu0 0.0
  %256 = vmatpush1.msra.mxu0 %v34
  %257 = vmatprep.subr.mxu0 0.0
  %258 = vmatpush1.msra.mxu0 %v35
  %259 = vmatprep.subr.mxu0 0.0
  %260 = vmatpush1.msra.mxu0 0.0
  %261 = vmatprep.subr.mxu0 0.0
  %262 = vmatpush1.msra.mxu0 0.0
  %263 = vmatprep.subr.mxu0 0.0
  %264 = vmatpush1.msra.mxu0 0.0
  %265 = vmatprep.subr.mxu0 0.0
  %266 = vmatpush1.msra.mxu0 0.0
  %267 = vmatprep.subr.mxu0 0.0
  %268 = vmatpush1.msra.mxu0 0.0
  %269 = vmatprep.subr.mxu0 0.0
  %270 = vmatpush1.msra.mxu0 0.0
  %271 = vmatprep.subr.mxu0 0.0
  %272 = vmatpush1.msra.mxu0 0.0
  %273 = vmatprep.subr.mxu0 0.0
  %274 = vmatpush1.msra.mxu0 0.0
  %275 = vmatprep.subr.mxu0 0.0
  %276 = vmatpush1.msra.mxu0 0.0
  %277 = vmatprep.subr.mxu0 0.0
  %278 = vmatpush1.msra.mxu0 0.0
  %279 = vmatprep.subr.mxu0 0.0
  %280 = vmatpush1.msra.mxu0 0.0
  %281 = vmatprep.subr.mxu0 0.0
  %282 = vmatpush1.msra.mxu0 0.0
  %283 = vmatprep.subr.mxu0 0.0
  %284 = vmatpush1.msra.mxu0 0.0
  %285 = vmatprep.subr.mxu0 0.0
  %286 = vmatpush1.msra.mxu0 0.0
  %287 = vmatprep.subr.mxu0 0.0
  %288 = vmatpush1.msra.mxu0 0.0
  %289 = vmatprep.subr.mxu0 0.0
  %290 = vmatpush1.msra.mxu0 0.0
  %291 = vmatprep.subr.mxu0 0.0
  %292 = vmatpush1.msra.mxu0 0.0
  %293 = vmatprep.subr.mxu0 0.0
  %294 = vmatpush1.msra.mxu0 0.0
  %295 = vmatprep.subr.mxu0 0.0
  %296 = vmatpush1.msra.mxu0 0.0
  %297 = vmatprep.subr.mxu0 0.0
  %298 = vmatpush1.msra.mxu0 0.0
  %299 = vmatprep.subr.mxu0 0.0
  %300 = vmatpush1.msra.mxu0 0.0
  %301 = vmatprep.subr.mxu0 0.0
  %302 = vmatpush1.msra.mxu0 0.0
  %303 = vmatprep.subr.mxu0 0.0
  %304 = vmatpush1.msra.mxu0 0.0
  %305 = vmatprep.subr.mxu0 0.0
  %306 = vmatpush1.msra.mxu0 0.0
  %307 = vmatprep.subr.mxu0 0.0
  %308 = vmatpush1.msra.mxu0 0.0
  %309 = vmatprep.subr.mxu0 0.0
  %310 = vmatpush1.msra.mxu0 0.0
  %311 = vmatprep.subr.mxu0 0.0
  %312 = vmatpush1.msra.mxu0 0.0
  %313 = vmatprep.subr.mxu0 0.0
  %314 = vmatpush1.msra.mxu0 0.0
  %315 = vmatprep.mubr.f32.mxu0 0.0
  %316 = vmatmul.mubr.f32.gmra.mrb[0].mxu0 %v249
  %v317 = vpop.f32.mrb[0].mxu0
  %v318 = vadd.f32 0.0, %v317
  %v319 = vpop.f32.mrb[0].mxu0
  %320 = vdwg.mxu0
  %v321 = vadd.f32 %v248, %v318
  %v322 = vxor.u32 %v321, 2147483648
  %v323 = vmul.f32 %v322, 1.442695
  %v324 = vpow.pop %v323
  %v325 = vadd.f32 %v324, 1.0
  %v326 = vrcp.pop %v325
  %v327 = vmul.f32 1.0, %v326
  %v328 = vtanh.pop %v321
  %v329 = vmul.f32 %v327, %v234
  %331 = vrot.lane.b32.xlu0 %v328, 64
  %v332 = vpop.permute.xlu0 %331
  %v334 = vmul.f32 %v327, %v332
  %336 = vrot.lane.b32.xlu0 %v334, 32
  %v337 = vpop.permute.xlu0 %336
  %v339 = vadd.f32 %v329, %v337
  %v340 = vtanh.pop %v339
  %342 = vrot.lane.b32.xlu0 %v340, 64
  %v343 = vpop.permute.xlu0 %342
  %v345 = vmul.f32 %v327, %v343
  %347 = vrot.lane.b32.xlu0 %v345, 32
  %v348 = vpop.permute.xlu0 %347
  %s350 = scalar_lea.vmem [#allocation2], 4
  %351 = vst.msk [vmem:[%s350] sm:$0x3] %vm140, %v348
  %s352 = scalar_lea.vmem %s0, 6
  %v353 = vld [vmem:[%s352] sm:$0x3]
  %v354 = vsel %vm37, %v348, 0
  %356 = vmatprep.subr.mxu0 0.0
  %357 = vmatpush1.msra.mxu0 %v32
  %358 = vmatprep.subr.mxu0 0.0
  %359 = vmatpush1.msra.mxu0 %v33
  %360 = vmatprep.subr.mxu0 0.0
  %361 = vmatpush1.msra.mxu0 %v34
  %362 = vmatprep.subr.mxu0 0.0
  %363 = vmatpush1.msra.mxu0 %v35
  %364 = vmatprep.subr.mxu0 0.0
  %365 = vmatpush1.msra.mxu0 0.0
  %366 = vmatprep.subr.mxu0 0.0
  %367 = vmatpush1.msra.mxu0 0.0
  %368 = vmatprep.subr.mxu0 0.0
  %369 = vmatpush1.msra.mxu0 0.0
  %370 = vmatprep.subr.mxu0 0.0
  %371 = vmatpush1.msra.mxu0 0.0
  %372 = vmatprep.subr.mxu0 0.0
  %373 = vmatpush1.msra.mxu0 0.0
  %374 = vmatprep.subr.mxu0 0.0
  %375 = vmatpush1.msra.mxu0 0.0
  %376 = vmatprep.subr.mxu0 0.0
  %377 = vmatpush1.msra.mxu0 0.0
  %378 = vmatprep.subr.mxu0 0.0
  %379 = vmatpush1.msra.mxu0 0.0
  %380 = vmatprep.subr.mxu0 0.0
  %381 = vmatpush1.msra.mxu0 0.0
  %382 = vmatprep.subr.mxu0 0.0
  %383 = vmatpush1.msra.mxu0 0.0
  %384 = vmatprep.subr.mxu0 0.0
  %385 = vmatpush1.msra.mxu0 0.0
  %386 = vmatprep.subr.mxu0 0.0
  %387 = vmatpush1.msra.mxu0 0.0
  %388 = vmatprep.subr.mxu0 0.0
  %389 = vmatpush1.msra.mxu0 0.0
  %390 = vmatprep.subr.mxu0 0.0
  %391 = vmatpush1.msra.mxu0 0.0
  %392 = vmatprep.subr.mxu0 0.0
  %393 = vmatpush1.msra.mxu0 0.0
  %394 = vmatprep.subr.mxu0 0.0
  %395 = vmatpush1.msra.mxu0 0.0
  %396 = vmatprep.subr.mxu0 0.0
  %397 = vmatpush1.msra.mxu0 0.0
  %398 = vmatprep.subr.mxu0 0.0
  %399 = vmatpush1.msra.mxu0 0.0
  %400 = vmatprep.subr.mxu0 0.0
  %401 = vmatpush1.msra.mxu0 0.0
  %402 = vmatprep.subr.mxu0 0.0
  %403 = vmatpush1.msra.mxu0 0.0
  %404 = vmatprep.subr.mxu0 0.0
  %405 = vmatpush1.msra.mxu0 0.0
  %406 = vmatprep.subr.mxu0 0.0
  %407 = vmatpush1.msra.mxu0 0.0
  %408 = vmatprep.subr.mxu0 0.0
  %409 = vmatpush1.msra.mxu0 0.0
  %410 = vmatprep.subr.mxu0 0.0
  %411 = vmatpush1.msra.mxu0 0.0
  %412 = vmatprep.subr.mxu0 0.0
  %413 = vmatpush1.msra.mxu0 0.0
  %414 = vmatprep.subr.mxu0 0.0
  %415 = vmatpush1.msra.mxu0 0.0
  %416 = vmatprep.subr.mxu0 0.0
  %417 = vmatpush1.msra.mxu0 0.0
  %418 = vmatprep.subr.mxu0 0.0
  %419 = vmatpush1.msra.mxu0 0.0
  %420 = vmatprep.mubr.f32.mxu0 0.0
  %421 = vmatmul.mubr.f32.gmra.mrb[0].mxu0 %v354
  %v422 = vpop.f32.mrb[0].mxu0
  %v423 = vadd.f32 0.0, %v422
  %v424 = vpop.f32.mrb[0].mxu0
  %425 = vdwg.mxu0
  %v426 = vadd.f32 %v353, %v423
  %v427 = vxor.u32 %v426, 2147483648
  %v428 = vmul.f32 %v427, 1.442695
  %v429 = vpow.pop %v428
  %v430 = vadd.f32 %v429, 1.0
  %v431 = vrcp.pop %v430
  %v432 = vmul.f32 1.0, %v431
  %v433 = vtanh.pop %v426
  %v434 = vmul.f32 %v432, %v339
  %436 = vrot.lane.b32.xlu0 %v433, 64
  %v437 = vpop.permute.xlu0 %436
  %v439 = vmul.f32 %v432, %v437
  %441 = vrot.lane.b32.xlu0 %v439, 32
  %v442 = vpop.permute.xlu0 %441
  %v444 = vadd.f32 %v434, %v442
  %v445 = vtanh.pop %v444
  %447 = vrot.lane.b32.xlu0 %v445, 64
  %v448 = vpop.permute.xlu0 %447
  %v450 = vmul.f32 %v432, %v448
  %452 = vrot.lane.b32.xlu0 %v450, 32
  %v453 = vpop.permute.xlu0 %452
  %s455 = scalar_lea.vmem [#allocation2], 6
  %456 = vst.msk [vmem:[%s455] sm:$0x3] %vm140, %v453
  %s457 = scalar_lea.vmem %s0, 8
  %v458 = vld [vmem:[%s457] sm:$0x3]
  %v459 = vsel %vm37, %v453, 0
  %461 = vmatprep.subr.mxu0 0.0
  %462 = vmatpush1.msra.mxu0 %v32
  %463 = vmatprep.subr.mxu0 0.0
  %464 = vmatpush1.msra.mxu0 %v33
  %465 = vmatprep.subr.mxu0 0.0
  %466 = vmatpush1.msra.mxu0 %v34
  %467 = vmatprep.subr.mxu0 0.0
  %468 = vmatpush1.msra.mxu0 %v35
  %469 = vmatprep.subr.mxu0 0.0
  %470 = vmatpush1.msra.mxu0 0.0
  %471 = vmatprep.subr.mxu0 0.0
  %472 = vmatpush1.msra.mxu0 0.0
  %473 = vmatprep.subr.mxu0 0.0
  %474 = vmatpush1.msra.mxu0 0.0
  %475 = vmatprep.subr.mxu0 0.0
  %476 = vmatpush1.msra.mxu0 0.0
  %477 = vmatprep.subr.mxu0 0.0
  %478 = vmatpush1.msra.mxu0 0.0
  %479 = vmatprep.subr.mxu0 0.0
  %480 = vmatpush1.msra.mxu0 0.0
  %481 = vmatprep.subr.mxu0 0.0
  %482 = vmatpush1.msra.mxu0 0.0
  %483 = vmatprep.subr.mxu0 0.0
  %484 = vmatpush1.msra.mxu0 0.0
  %485 = vmatprep.subr.mxu0 0.0
  %486 = vmatpush1.msra.mxu0 0.0
  %487 = vmatprep.subr.mxu0 0.0
  %488 = vmatpush1.msra.mxu0 0.0
  %489 = vmatprep.subr.mxu0 0.0
  %490 = vmatpush1.msra.mxu0 0.0
  %491 = vmatprep.subr.mxu0 0.0
  %492 = vmatpush1.msra.mxu0 0.0
  %493 = vmatprep.subr.mxu0 0.0
  %494 = vmatpush1.msra.mxu0 0.0
  %495 = vmatprep.subr.mxu0 0.0
  %496 = vmatpush1.msra.mxu0 0.0
  %497 = vmatprep.subr.mxu0 0.0
  %498 = vmatpush1.msra.mxu0 0.0
  %499 = vmatprep.subr.mxu0 0.0
  %500 = vmatpush1.msra.mxu0 0.0
  %501 = vmatprep.subr.mxu0 0.0
  %502 = vmatpush1.msra.mxu0 0.0
  %503 = vmatprep.subr.mxu0 0.0
  %504 = vmatpush1.msra.mxu0 0.0
  %505 = vmatprep.subr.mxu0 0.0
  %506 = vmatpush1.msra.mxu0 0.0
  %507 = vmatprep.subr.mxu0 0.0
  %508 = vmatpush1.msra.mxu0 0.0
  %509 = vmatprep.subr.mxu0 0.0
  %510 = vmatpush1.msra.mxu0 0.0
  %511 = vmatprep.subr.mxu0 0.0
  %512 = vmatpush1.msra.mxu0 0.0
  %513 = vmatprep.subr.mxu0 0.0
  %514 = vmatpush1.msra.mxu0 0.0
  %515 = vmatprep.subr.mxu0 0.0
  %516 = vmatpush1.msra.mxu0 0.0
  %517 = vmatprep.subr.mxu0 0.0
  %518 = vmatpush1.msra.mxu0 0.0
  %519 = vmatprep.subr.mxu0 0.0
  %520 = vmatpush1.msra.mxu0 0.0
  %521 = vmatprep.subr.mxu0 0.0
  %522 = vmatpush1.msra.mxu0 0.0
  %523 = vmatprep.subr.mxu0 0.0
  %524 = vmatpush1.msra.mxu0 0.0
  %525 = vmatprep.mubr.f32.mxu0 0.0
  %526 = vmatmul.mubr.f32.gmra.mrb[0].mxu0 %v459
  %v527 = vpop.f32.mrb[0].mxu0
  %v528 = vadd.f32 0.0, %v527
  %v529 = vpop.f32.mrb[0].mxu0
  %530 = vdwg.mxu0
  %v531 = vadd.f32 %v458, %v528
  %v532 = vxor.u32 %v531, 2147483648
  %v533 = vmul.f32 %v532, 1.442695
  %v534 = vpow.pop %v533
  %v535 = vadd.f32 %v534, 1.0
  %v536 = vrcp.pop %v535
  %v537 = vmul.f32 1.0, %v536
  %v538 = vtanh.pop %v531
  %v539 = vmul.f32 %v537, %v444
  %541 = vrot.lane.b32.xlu0 %v538, 64
  %v542 = vpop.permute.xlu0 %541
  %v544 = vmul.f32 %v537, %v542
  %546 = vrot.lane.b32.xlu0 %v544, 32
  %v547 = vpop.permute.xlu0 %546
  %v549 = vadd.f32 %v539, %v547
  %v550 = vtanh.pop %v549
  %552 = vrot.lane.b32.xlu0 %v550, 64
  %v553 = vpop.permute.xlu0 %552
  %v555 = vmul.f32 %v537, %v553
  %557 = vrot.lane.b32.xlu0 %v555, 32
  %v558 = vpop.permute.xlu0 %557
  %s560 = scalar_lea.vmem [#allocation2], 8
  %561 = vst.msk [vmem:[%s560] sm:$0x3] %vm140, %v558
  %s562 = scalar_lea.vmem %s0, 10
  %v563 = vld [vmem:[%s562] sm:$0x3]
  %v564 = vsel %vm37, %v558, 0
  %566 = vmatprep.subr.mxu0 0.0
  %567 = vmatpush1.msra.mxu0 %v32
  %568 = vmatprep.subr.mxu0 0.0
  %569 = vmatpush1.msra.mxu0 %v33
  %570 = vmatprep.subr.mxu0 0.0
  %571 = vmatpush1.msra.mxu0 %v34
  %572 = vmatprep.subr.mxu0 0.0
  %573 = vmatpush1.msra.mxu0 %v35
  %574 = vmatprep.subr.mxu0 0.0
  %575 = vmatpush1.msra.mxu0 0.0
  %576 = vmatprep.subr.mxu0 0.0
  %577 = vmatpush1.msra.mxu0 0.0
  %578 = vmatprep.subr.mxu0 0.0
  %579 = vmatpush1.msra.mxu0 0.0
  %580 = vmatprep.subr.mxu0 0.0
  %581 = vmatpush1.msra.mxu0 0.0
  %582 = vmatprep.subr.mxu0 0.0
  %583 = vmatpush1.msra.mxu0 0.0
  %584 = vmatprep.subr.mxu0 0.0
  %585 = vmatpush1.msra.mxu0 0.0
  %586 = vmatprep.subr.mxu0 0.0
  %587 = vmatpush1.msra.mxu0 0.0
  %588 = vmatprep.subr.mxu0 0.0
  %589 = vmatpush1.msra.mxu0 0.0
  %590 = vmatprep.subr.mxu0 0.0
  %591 = vmatpush1.msra.mxu0 0.0
  %592 = vmatprep.subr.mxu0 0.0
  %593 = vmatpush1.msra.mxu0 0.0
  %594 = vmatprep.subr.mxu0 0.0
  %595 = vmatpush1.msra.mxu0 0.0
  %596 = vmatprep.subr.mxu0 0.0
  %597 = vmatpush1.msra.mxu0 0.0
  %598 = vmatprep.subr.mxu0 0.0
  %599 = vmatpush1.msra.mxu0 0.0
  %600 = vmatprep.subr.mxu0 0.0
  %601 = vmatpush1.msra.mxu0 0.0
  %602 = vmatprep.subr.mxu0 0.0
  %603 = vmatpush1.msra.mxu0 0.0
  %604 = vmatprep.subr.mxu0 0.0
  %605 = vmatpush1.msra.mxu0 0.0
  %606 = vmatprep.subr.mxu0 0.0
  %607 = vmatpush1.msra.mxu0 0.0
  %608 = vmatprep.subr.mxu0 0.0
  %609 = vmatpush1.msra.mxu0 0.0
  %610 = vmatprep.subr.mxu0 0.0
  %611 = vmatpush1.msra.mxu0 0.0
  %612 = vmatprep.subr.mxu0 0.0
  %613 = vmatpush1.msra.mxu0 0.0
  %614 = vmatprep.subr.mxu0 0.0
  %615 = vmatpush1.msra.mxu0 0.0
  %616 = vmatprep.subr.mxu0 0.0
  %617 = vmatpush1.msra.mxu0 0.0
  %618 = vmatprep.subr.mxu0 0.0
  %619 = vmatpush1.msra.mxu0 0.0
  %620 = vmatprep.subr.mxu0 0.0
  %621 = vmatpush1.msra.mxu0 0.0
  %622 = vmatprep.subr.mxu0 0.0
  %623 = vmatpush1.msra.mxu0 0.0
  %624 = vmatprep.subr.mxu0 0.0
  %625 = vmatpush1.msra.mxu0 0.0
  %626 = vmatprep.subr.mxu0 0.0
  %627 = vmatpush1.msra.mxu0 0.0
  %628 = vmatprep.subr.mxu0 0.0
  %629 = vmatpush1.msra.mxu0 0.0
  %630 = vmatprep.mubr.f32.mxu0 0.0
  %631 = vmatmul.mubr.f32.gmra.mrb[0].mxu0 %v564
  %v632 = vpop.f32.mrb[0].mxu0
  %v633 = vadd.f32 0.0, %v632
  %v634 = vpop.f32.mrb[0].mxu0
  %635 = vdwg.mxu0
  %v636 = vadd.f32 %v563, %v633
  %v637 = vxor.u32 %v636, 2147483648
  %v638 = vmul.f32 %v637, 1.442695
  %v639 = vpow.pop %v638
  %v640 = vadd.f32 %v639, 1.0
  %v641 = vrcp.pop %v640
  %v642 = vmul.f32 1.0, %v641
  %v643 = vtanh.pop %v636
  %v644 = vmul.f32 %v642, %v549
  %646 = vrot.lane.b32.xlu0 %v643, 64
  %v647 = vpop.permute.xlu0 %646
  %v649 = vmul.f32 %v642, %v647
  %651 = vrot.lane.b32.xlu0 %v649, 32
  %v652 = vpop.permute.xlu0 %651
  %v654 = vadd.f32 %v644, %v652
  %v655 = vtanh.pop %v654
  %657 = vrot.lane.b32.xlu0 %v655, 64
  %v658 = vpop.permute.xlu0 %657
  %v660 = vmul.f32 %v642, %v658
  %662 = vrot.lane.b32.xlu0 %v660, 32
  %v663 = vpop.permute.xlu0 %662
  %s665 = scalar_lea.vmem [#allocation2], 10
  %666 = vst.msk [vmem:[%s665] sm:$0x3] %vm140, %v663
  %s667 = scalar_lea.vmem %s0, 12
  %v668 = vld [vmem:[%s667] sm:$0x3]
  %v669 = vsel %vm37, %v663, 0
  %671 = vmatprep.subr.mxu0 0.0
  %672 = vmatpush1.msra.mxu0 %v32
  %673 = vmatprep.subr.mxu0 0.0
  %674 = vmatpush1.msra.mxu0 %v33
  %675 = vmatprep.subr.mxu0 0.0
  %676 = vmatpush1.msra.mxu0 %v34
  %677 = vmatprep.subr.mxu0 0.0
  %678 = vmatpush1.msra.mxu0 %v35
  %679 = vmatprep.subr.mxu0 0.0
  %680 = vmatpush1.msra.mxu0 0.0
  %681 = vmatprep.subr.mxu0 0.0
  %682 = vmatpush1.msra.mxu0 0.0
  %683 = vmatprep.subr.mxu0 0.0
  %684 = vmatpush1.msra.mxu0 0.0
  %685 = vmatprep.subr.mxu0 0.0
  %686 = vmatpush1.msra.mxu0 0.0
  %687 = vmatprep.subr.mxu0 0.0
  %688 = vmatpush1.msra.mxu0 0.0
  %689 = vmatprep.subr.mxu0 0.0
  %690 = vmatpush1.msra.mxu0 0.0
  %691 = vmatprep.subr.mxu0 0.0
  %692 = vmatpush1.msra.mxu0 0.0
  %693 = vmatprep.subr.mxu0 0.0
  %694 = vmatpush1.msra.mxu0 0.0
  %695 = vmatprep.subr.mxu0 0.0
  %696 = vmatpush1.msra.mxu0 0.0
  %697 = vmatprep.subr.mxu0 0.0
  %698 = vmatpush1.msra.mxu0 0.0
  %699 = vmatprep.subr.mxu0 0.0
  %700 = vmatpush1.msra.mxu0 0.0
  %701 = vmatprep.subr.mxu0 0.0
  %702 = vmatpush1.msra.mxu0 0.0
  %703 = vmatprep.subr.mxu0 0.0
  %704 = vmatpush1.msra.mxu0 0.0
  %705 = vmatprep.subr.mxu0 0.0
  %706 = vmatpush1.msra.mxu0 0.0
  %707 = vmatprep.subr.mxu0 0.0
  %708 = vmatpush1.msra.mxu0 0.0
  %709 = vmatprep.subr.mxu0 0.0
  %710 = vmatpush1.msra.mxu0 0.0
  %711 = vmatprep.subr.mxu0 0.0
  %712 = vmatpush1.msra.mxu0 0.0
  %713 = vmatprep.subr.mxu0 0.0
  %714 = vmatpush1.msra.mxu0 0.0
  %715 = vmatprep.subr.mxu0 0.0
  %716 = vmatpush1.msra.mxu0 0.0
  %717 = vmatprep.subr.mxu0 0.0
  %718 = vmatpush1.msra.mxu0 0.0
  %719 = vmatprep.subr.mxu0 0.0
  %720 = vmatpush1.msra.mxu0 0.0
  %721 = vmatprep.subr.mxu0 0.0
  %722 = vmatpush1.msra.mxu0 0.0
  %723 = vmatprep.subr.mxu0 0.0
  %724 = vmatpush1.msra.mxu0 0.0
  %725 = vmatprep.subr.mxu0 0.0
  %726 = vmatpush1.msra.mxu0 0.0
  %727 = vmatprep.subr.mxu0 0.0
  %728 = vmatpush1.msra.mxu0 0.0
  %729 = vmatprep.subr.mxu0 0.0
  %730 = vmatpush1.msra.mxu0 0.0
  %731 = vmatprep.subr.mxu0 0.0
  %732 = vmatpush1.msra.mxu0 0.0
  %733 = vmatprep.subr.mxu0 0.0
  %734 = vmatpush1.msra.mxu0 0.0
  %735 = vmatprep.mubr.f32.mxu0 0.0
  %736 = vmatmul.mubr.f32.gmra.mrb[0].mxu0 %v669
  %v737 = vpop.f32.mrb[0].mxu0
  %v738 = vadd.f32 0.0, %v737
  %v739 = vpop.f32.mrb[0].mxu0
  %740 = vdwg.mxu0
  %v741 = vadd.f32 %v668, %v738
  %v742 = vxor.u32 %v741, 2147483648
  %v743 = vmul.f32 %v742, 1.442695
  %v744 = vpow.pop %v743
  %v745 = vadd.f32 %v744, 1.0
  %v746 = vrcp.pop %v745
  %v747 = vmul.f32 1.0, %v746
  %v748 = vtanh.pop %v741
  %v749 = vmul.f32 %v747, %v654
  %751 = vrot.lane.b32.xlu0 %v748, 64
  %v752 = vpop.permute.xlu0 %751
  %v754 = vmul.f32 %v747, %v752
  %756 = vrot.lane.b32.xlu0 %v754, 32
  %v757 = vpop.permute.xlu0 %756
  %v759 = vadd.f32 %v749, %v757
  %v760 = vtanh.pop %v759
  %762 = vrot.lane.b32.xlu0 %v760, 64
  %v763 = vpop.permute.xlu0 %762
  %v765 = vmul.f32 %v747, %v763
  %767 = vrot.lane.b32.xlu0 %v765, 32
  %v768 = vpop.permute.xlu0 %767
  %s770 = scalar_lea.vmem [#allocation2], 12
  %771 = vst.msk [vmem:[%s770] sm:$0x3] %vm140, %v768
  %s772 = scalar_lea.vmem %s0, 14
  %v773 = vld [vmem:[%s772] sm:$0x3]
  %v774 = vsel %vm37, %v768, 0
  %776 = vmatprep.subr.mxu0 0.0
  %777 = vmatpush1.msra.mxu0 %v32
  %778 = vmatprep.subr.mxu0 0.0
  %779 = vmatpush1.msra.mxu0 %v33
  %780 = vmatprep.subr.mxu0 0.0
  %781 = vmatpush1.msra.mxu0 %v34
  %782 = vmatprep.subr.mxu0 0.0
  %783 = vmatpush1.msra.mxu0 %v35
  %784 = vmatprep.subr.mxu0 0.0
  %785 = vmatpush1.msra.mxu0 0.0
  %786 = vmatprep.subr.mxu0 0.0
  %787 = vmatpush1.msra.mxu0 0.0
  %788 = vmatprep.subr.mxu0 0.0
  %789 = vmatpush1.msra.mxu0 0.0
  %790 = vmatprep.subr.mxu0 0.0
  %791 = vmatpush1.msra.mxu0 0.0
  %792 = vmatprep.subr.mxu0 0.0
  %793 = vmatpush1.msra.mxu0 0.0
  %794 = vmatprep.subr.mxu0 0.0
  %795 = vmatpush1.msra.mxu0 0.0
  %796 = vmatprep.subr.mxu0 0.0
  %797 = vmatpush1.msra.mxu0 0.0
  %798 = vmatprep.subr.mxu0 0.0
  %799 = vmatpush1.msra.mxu0 0.0
  %800 = vmatprep.subr.mxu0 0.0
  %801 = vmatpush1.msra.mxu0 0.0
  %802 = vmatprep.subr.mxu0 0.0
  %803 = vmatpush1.msra.mxu0 0.0
  %804 = vmatprep.subr.mxu0 0.0
  %805 = vmatpush1.msra.mxu0 0.0
  %806 = vmatprep.subr.mxu0 0.0
  %807 = vmatpush1.msra.mxu0 0.0
  %808 = vmatprep.subr.mxu0 0.0
  %809 = vmatpush1.msra.mxu0 0.0
  %810 = vmatprep.subr.mxu0 0.0
  %811 = vmatpush1.msra.mxu0 0.0
  %812 = vmatprep.subr.mxu0 0.0
  %813 = vmatpush1.msra.mxu0 0.0
  %814 = vmatprep.subr.mxu0 0.0
  %815 = vmatpush1.msra.mxu0 0.0
  %816 = vmatprep.subr.mxu0 0.0
  %817 = vmatpush1.msra.mxu0 0.0
  %818 = vmatprep.subr.mxu0 0.0
  %819 = vmatpush1.msra.mxu0 0.0
  %820 = vmatprep.subr.mxu0 0.0
  %821 = vmatpush1.msra.mxu0 0.0
  %822 = vmatprep.subr.mxu0 0.0
  %823 = vmatpush1.msra.mxu0 0.0
  %824 = vmatprep.subr.mxu0 0.0
  %825 = vmatpush1.msra.mxu0 0.0
  %826 = vmatprep.subr.mxu0 0.0
  %827 = vmatpush1.msra.mxu0 0.0
  %828 = vmatprep.subr.mxu0 0.0
  %829 = vmatpush1.msra.mxu0 0.0
  %830 = vmatprep.subr.mxu0 0.0
  %831 = vmatpush1.msra.mxu0 0.0
  %832 = vmatprep.subr.mxu0 0.0
  %833 = vmatpush1.msra.mxu0 0.0
  %834 = vmatprep.subr.mxu0 0.0
  %835 = vmatpush1.msra.mxu0 0.0
  %836 = vmatprep.subr.mxu0 0.0
  %837 = vmatpush1.msra.mxu0 0.0
  %838 = vmatprep.subr.mxu0 0.0
  %839 = vmatpush1.msra.mxu0 0.0
  %840 = vmatprep.mubr.f32.mxu0 0.0
  %841 = vmatmul.mubr.f32.gmra.mrb[0].mxu0 %v774
  %v842 = vpop.f32.mrb[0].mxu0
  %v843 = vadd.f32 0.0, %v842
  %v844 = vpop.f32.mrb[0].mxu0
  %845 = vdwg.mxu0
  %v846 = vadd.f32 %v773, %v843
  %v847 = vxor.u32 %v846, 2147483648
  %v848 = vmul.f32 %v847, 1.442695
  %v849 = vpow.pop %v848
  %v850 = vadd.f32 %v849, 1.0
  %v851 = vrcp.pop %v850
  %v852 = vmul.f32 1.0, %v851
  %v853 = vtanh.pop %v846
  %v854 = vmul.f32 %v852, %v759
  %856 = vrot.lane.b32.xlu0 %v853, 64
  %v857 = vpop.permute.xlu0 %856
  %v859 = vmul.f32 %v852, %v857
  %861 = vrot.lane.b32.xlu0 %v859, 32
  %v862 = vpop.permute.xlu0 %861
  %v864 = vadd.f32 %v854, %v862
  %v865 = vtanh.pop %v864
  %867 = vrot.lane.b32.xlu0 %v865, 64
  %v868 = vpop.permute.xlu0 %867
  %v870 = vmul.f32 %v852, %v868
  %872 = vrot.lane.b32.xlu0 %v870, 32
  %v873 = vpop.permute.xlu0 %872
  %s875 = scalar_lea.vmem [#allocation2], 14
  %876 = vst.msk [vmem:[%s875] sm:$0x3] %vm140, %v873
  %v877 = vld [vmem:[%s2] sm:$0xff]
  %v878 = vld [vmem:[%s2 + $0x8] sm:$0xff]
  %v879 = vld [vmem:[%s2 + $0x10] sm:$0xff]
  %v880 = vld [vmem:[%s2 + $0x18] sm:$0xff]
  %v881 = vld [vmem:[%s4] sm:$0x1]
  %v882 = vld [vmem:[#allocation2] sm:$0x3]
  %v884 = vlaneseq
  %v885 = vshrl.u32 %v884, 7
  %v886 = vsub.s32 0, %v885
  %v887 = vrot.slane %v881, %v886
  %v890 = vsel %vm37, %v882, 0
  %892 = vmatprep.subr.mxu0 0.0
  %893 = vmatpush1.msra.mxu0 %v877
  %894 = vmatprep.subr.mxu0 0.0
  %895 = vmatpush1.msra.mxu0 %v878
  %896 = vmatprep.subr.mxu0 0.0
  %897 = vmatpush1.msra.mxu0 %v879
  %898 = vmatprep.subr.mxu0 0.0
  %899 = vmatpush1.msra.mxu0 %v880
  %900 = vmatprep.subr.mxu0 0.0
  %901 = vmatpush1.msra.mxu0 0.0
  %902 = vmatprep.subr.mxu0 0.0
  %903 = vmatpush1.msra.mxu0 0.0
  %904 = vmatprep.subr.mxu0 0.0
  %905 = vmatpush1.msra.mxu0 0.0
  %906 = vmatprep.subr.mxu0 0.0
  %907 = vmatpush1.msra.mxu0 0.0
  %908 = vmatprep.subr.mxu0 0.0
  %909 = vmatpush1.msra.mxu0 0.0
  %910 = vmatprep.subr.mxu0 0.0
  %911 = vmatpush1.msra.mxu0 0.0
  %912 = vmatprep.subr.mxu0 0.0
  %913 = vmatpush1.msra.mxu0 0.0
  %914 = vmatprep.subr.mxu0 0.0
  %915 = vmatpush1.msra.mxu0 0.0
  %916 = vmatprep.subr.mxu0 0.0
  %917 = vmatpush1.msra.mxu0 0.0
  %918 = vmatprep.subr.mxu0 0.0
  %919 = vmatpush1.msra.mxu0 0.0
  %920 = vmatprep.subr.mxu0 0.0
  %921 = vmatpush1.msra.mxu0 0.0
  %922 = vmatprep.subr.mxu0 0.0
  %923 = vmatpush1.msra.mxu0 0.0
  %924 = vmatprep.subr.mxu0 0.0
  %925 = vmatpush1.msra.mxu0 0.0
  %926 = vmatprep.subr.mxu0 0.0
  %927 = vmatpush1.msra.mxu0 0.0
  %928 = vmatprep.subr.mxu0 0.0
  %929 = vmatpush1.msra.mxu0 0.0
  %930 = vmatprep.subr.mxu0 0.0
  %931 = vmatpush1.msra.mxu0 0.0
  %932 = vmatprep.subr.mxu0 0.0
  %933 = vmatpush1.msra.mxu0 0.0
  %934 = vmatprep.subr.mxu0 0.0
  %935 = vmatpush1.msra.mxu0 0.0
  %936 = vmatprep.subr.mxu0 0.0
  %937 = vmatpush1.msra.mxu0 0.0
  %938 = vmatprep.subr.mxu0 0.0
  %939 = vmatpush1.msra.mxu0 0.0
  %940 = vmatprep.subr.mxu0 0.0
  %941 = vmatpush1.msra.mxu0 0.0
  %942 = vmatprep.subr.mxu0 0.0
  %943 = vmatpush1.msra.mxu0 0.0
  %944 = vmatprep.subr.mxu0 0.0
  %945 = vmatpush1.msra.mxu0 0.0
  %946 = vmatprep.subr.mxu0 0.0
  %947 = vmatpush1.msra.mxu0 0.0
  %948 = vmatprep.subr.mxu0 0.0
  %949 = vmatpush1.msra.mxu0 0.0
  %950 = vmatprep.subr.mxu0 0.0
  %951 = vmatpush1.msra.mxu0 0.0
  %952 = vmatprep.subr.mxu0 0.0
  %953 = vmatpush1.msra.mxu0 0.0
  %954 = vmatprep.subr.mxu0 0.0
  %955 = vmatpush1.msra.mxu0 0.0
  %956 = vmatprep.mubr.f32.mxu0 0.0
  %957 = vmatmul.mubr.f32.gmra.mrb[0].mxu0 %v890
  %v958 = vpop.f32.mrb[0].mxu0
  %v959 = vadd.f32 %v887, %v958
  %v960 = vpop.f32.mrb[0].mxu0
  %961 = vdwg.mxu0
  %962 = vst [vmem:[#allocation3] sm:$0x3] %v959
  %v963 = vld [vmem:[%s245] sm:$0x3]
  %v965 = vsel %vm37, %v963, 0
  %967 = vmatprep.subr.mxu0 0.0
  %968 = vmatpush1.msra.mxu0 %v877
  %969 = vmatprep.subr.mxu0 0.0
  %970 = vmatpush1.msra.mxu0 %v878
  %971 = vmatprep.subr.mxu0 0.0
  %972 = vmatpush1.msra.mxu0 %v879
  %973 = vmatprep.subr.mxu0 0.0
  %974 = vmatpush1.msra.mxu0 %v880
  %975 = vmatprep.subr.mxu0 0.0
  %976 = vmatpush1.msra.mxu0 0.0
  %977 = vmatprep.subr.mxu0 0.0
  %978 = vmatpush1.msra.mxu0 0.0
  %979 = vmatprep.subr.mxu0 0.0
  %980 = vmatpush1.msra.mxu0 0.0
  %981 = vmatprep.subr.mxu0 0.0
  %982 = vmatpush1.msra.mxu0 0.0
  %983 = vmatprep.subr.mxu0 0.0
  %984 = vmatpush1.msra.mxu0 0.0
  %985 = vmatprep.subr.mxu0 0.0
  %986 = vmatpush1.msra.mxu0 0.0
  %987 = vmatprep.subr.mxu0 0.0
  %988 = vmatpush1.msra.mxu0 0.0
  %989 = vmatprep.subr.mxu0 0.0
  %990 = vmatpush1.msra.mxu0 0.0
  %991 = vmatprep.subr.mxu0 0.0
  %992 = vmatpush1.msra.mxu0 0.0
  %993 = vmatprep.subr.mxu0 0.0
  %994 = vmatpush1.msra.mxu0 0.0
  %995 = vmatprep.subr.mxu0 0.0
  %996 = vmatpush1.msra.mxu0 0.0
  %997 = vmatprep.subr.mxu0 0.0
  %998 = vmatpush1.msra.mxu0 0.0
  %999 = vmatprep.subr.mxu0 0.0
  %1000 = vmatpush1.msra.mxu0 0.0
  %1001 = vmatprep.subr.mxu0 0.0
  %1002 = vmatpush1.msra.mxu0 0.0
  %1003 = vmatprep.subr.mxu0 0.0
  %1004 = vmatpush1.msra.mxu0 0.0
  %1005 = vmatprep.subr.mxu0 0.0
  %1006 = vmatpush1.msra.mxu0 0.0
  %1007 = vmatprep.subr.mxu0 0.0
  %1008 = vmatpush1.msra.mxu0 0.0
  %1009 = vmatprep.subr.mxu0 0.0
  %1010 = vmatpush1.msra.mxu0 0.0
  %1011 = vmatprep.subr.mxu0 0.0
  %1012 = vmatpush1.msra.mxu0 0.0
  %1013 = vmatprep.subr.mxu0 0.0
  %1014 = vmatpush1.msra.mxu0 0.0
  %1015 = vmatprep.subr.mxu0 0.0
  %1016 = vmatpush1.msra.mxu0 0.0
  %1017 = vmatprep.subr.mxu0 0.0
  %1018 = vmatpush1.msra.mxu0 0.0
  %1019 = vmatprep.subr.mxu0 0.0
  %1020 = vmatpush1.msra.mxu0 0.0
  %1021 = vmatprep.subr.mxu0 0.0
  %1022 = vmatpush1.msra.mxu0 0.0
  %1023 = vmatprep.subr.mxu0 0.0
  %1024 = vmatpush1.msra.mxu0 0.0
  %1025 = vmatprep.subr.mxu0 0.0
  %1026 = vmatpush1.msra.mxu0 0.0
  %1027 = vmatprep.subr.mxu0 0.0
  %1028 = vmatpush1.msra.mxu0 0.0
  %1029 = vmatprep.subr.mxu0 0.0
  %1030 = vmatpush1.msra.mxu0 0.0
  %1031 = vmatprep.mubr.f32.mxu0 0.0
  %1032 = vmatmul.mubr.f32.gmra.mrb[0].mxu0 %v965
  %v1033 = vpop.f32.mrb[0].mxu0
  %v1034 = vadd.f32 %v887, %v1033
  %v1035 = vpop.f32.mrb[0].mxu0
  %1036 = vdwg.mxu0
  %s1037 = scalar_lea.vmem [#allocation3], 2
  %1038 = vst [vmem:[%s1037] sm:$0x3] %v1034
  %v1039 = vld [vmem:[%s350] sm:$0x3]
  %v1041 = vsel %vm37, %v1039, 0
  %1043 = vmatprep.subr.mxu0 0.0
  %1044 = vmatpush1.msra.mxu0 %v877
  %1045 = vmatprep.subr.mxu0 0.0
  %1046 = vmatpush1.msra.mxu0 %v878
  %1047 = vmatprep.subr.mxu0 0.0
  %1048 = vmatpush1.msra.mxu0 %v879
  %1049 = vmatprep.subr.mxu0 0.0
  %1050 = vmatpush1.msra.mxu0 %v880
  %1051 = vmatprep.subr.mxu0 0.0
  %1052 = vmatpush1.msra.mxu0 0.0
  %1053 = vmatprep.subr.mxu0 0.0
  %1054 = vmatpush1.msra.mxu0 0.0
  %1055 = vmatprep.subr.mxu0 0.0
  %1056 = vmatpush1.msra.mxu0 0.0
  %1057 = vmatprep.subr.mxu0 0.0
  %1058 = vmatpush1.msra.mxu0 0.0
  %1059 = vmatprep.subr.mxu0 0.0
  %1060 = vmatpush1.msra.mxu0 0.0
  %1061 = vmatprep.subr.mxu0 0.0
  %1062 = vmatpush1.msra.mxu0 0.0
  %1063 = vmatprep.subr.mxu0 0.0
  %1064 = vmatpush1.msra.mxu0 0.0
  %1065 = vmatprep.subr.mxu0 0.0
  %1066 = vmatpush1.msra.mxu0 0.0
  %1067 = vmatprep.subr.mxu0 0.0
  %1068 = vmatpush1.msra.mxu0 0.0
  %1069 = vmatprep.subr.mxu0 0.0
  %1070 = vmatpush1.msra.mxu0 0.0
  %1071 = vmatprep.subr.mxu0 0.0
  %1072 = vmatpush1.msra.mxu0 0.0
  %1073 = vmatprep.subr.mxu0 0.0
  %1074 = vmatpush1.msra.mxu0 0.0
  %1075 = vmatprep.subr.mxu0 0.0
  %1076 = vmatpush1.msra.mxu0 0.0
  %1077 = vmatprep.subr.mxu0 0.0
  %1078 = vmatpush1.msra.mxu0 0.0
  %1079 = vmatprep.subr.mxu0 0.0
  %1080 = vmatpush1.msra.mxu0 0.0
  %1081 = vmatprep.subr.mxu0 0.0
  %1082 = vmatpush1.msra.mxu0 0.0
  %1083 = vmatprep.subr.mxu0 0.0
  %1084 = vmatpush1.msra.mxu0 0.0
  %1085 = vmatprep.subr.mxu0 0.0
  %1086 = vmatpush1.msra.mxu0 0.0
  %1087 = vmatprep.subr.mxu0 0.0
  %1088 = vmatpush1.msra.mxu0 0.0
  %1089 = vmatprep.subr.mxu0 0.0
  %1090 = vmatpush1.msra.mxu0 0.0
  %1091 = vmatprep.subr.mxu0 0.0
  %1092 = vmatpush1.msra.mxu0 0.0
  %1093 = vmatprep.subr.mxu0 0.0
  %1094 = vmatpush1.msra.mxu0 0.0
  %1095 = vmatprep.subr.mxu0 0.0
  %1096 = vmatpush1.msra.mxu0 0.0
  %1097 = vmatprep.subr.mxu0 0.0
  %1098 = vmatpush1.msra.mxu0 0.0
  %1099 = vmatprep.subr.mxu0 0.0
  %1100 = vmatpush1.msra.mxu0 0.0
  %1101 = vmatprep.subr.mxu0 0.0
  %1102 = vmatpush1.msra.mxu0 0.0
  %1103 = vmatprep.subr.mxu0 0.0
  %1104 = vmatpush1.msra.mxu0 0.0
  %1105 = vmatprep.subr.mxu0 0.0
  %1106 = vmatpush1.msra.mxu0 0.0
  %1107 = vmatprep.mubr.f32.mxu0 0.0
  %1108 = vmatmul.mubr.f32.gmra.mrb[0].mxu0 %v1041
  %v1109 = vpop.f32.mrb[0].mxu0
  %v1110 = vadd.f32 %v887, %v1109
  %v1111 = vpop.f32.mrb[0].mxu0
  %1112 = vdwg.mxu0
  %s1113 = scalar_lea.vmem [#allocation3], 4
  %1114 = vst [vmem:[%s1113] sm:$0x3] %v1110
  %v1115 = vld [vmem:[%s455] sm:$0x3]
  %v1117 = vsel %vm37, %v1115, 0
  %1119 = vmatprep.subr.mxu0 0.0
  %1120 = vmatpush1.msra.mxu0 %v877
  %1121 = vmatprep.subr.mxu0 0.0
  %1122 = vmatpush1.msra.mxu0 %v878
  %1123 = vmatprep.subr.mxu0 0.0
  %1124 = vmatpush1.msra.mxu0 %v879
  %1125 = vmatprep.subr.mxu0 0.0
  %1126 = vmatpush1.msra.mxu0 %v880
  %1127 = vmatprep.subr.mxu0 0.0
  %1128 = vmatpush1.msra.mxu0 0.0
  %1129 = vmatprep.subr.mxu0 0.0
  %1130 = vmatpush1.msra.mxu0 0.0
  %1131 = vmatprep.subr.mxu0 0.0
  %1132 = vmatpush1.msra.mxu0 0.0
  %1133 = vmatprep.subr.mxu0 0.0
  %1134 = vmatpush1.msra.mxu0 0.0
  %1135 = vmatprep.subr.mxu0 0.0
  %1136 = vmatpush1.msra.mxu0 0.0
  %1137 = vmatprep.subr.mxu0 0.0
  %1138 = vmatpush1.msra.mxu0 0.0
  %1139 = vmatprep.subr.mxu0 0.0
  %1140 = vmatpush1.msra.mxu0 0.0
  %1141 = vmatprep.subr.mxu0 0.0
  %1142 = vmatpush1.msra.mxu0 0.0
  %1143 = vmatprep.subr.mxu0 0.0
  %1144 = vmatpush1.msra.mxu0 0.0
  %1145 = vmatprep.subr.mxu0 0.0
  %1146 = vmatpush1.msra.mxu0 0.0
  %1147 = vmatprep.subr.mxu0 0.0
  %1148 = vmatpush1.msra.mxu0 0.0
  %1149 = vmatprep.subr.mxu0 0.0
  %1150 = vmatpush1.msra.mxu0 0.0
  %1151 = vmatprep.subr.mxu0 0.0
  %1152 = vmatpush1.msra.mxu0 0.0
  %1153 = vmatprep.subr.mxu0 0.0
  %1154 = vmatpush1.msra.mxu0 0.0
  %1155 = vmatprep.subr.mxu0 0.0
  %1156 = vmatpush1.msra.mxu0 0.0
  %1157 = vmatprep.subr.mxu0 0.0
  %1158 = vmatpush1.msra.mxu0 0.0
  %1159 = vmatprep.subr.mxu0 0.0
  %1160 = vmatpush1.msra.mxu0 0.0
  %1161 = vmatprep.subr.mxu0 0.0
  %1162 = vmatpush1.msra.mxu0 0.0
  %1163 = vmatprep.subr.mxu0 0.0
  %1164 = vmatpush1.msra.mxu0 0.0
  %1165 = vmatprep.subr.mxu0 0.0
  %1166 = vmatpush1.msra.mxu0 0.0
  %1167 = vmatprep.subr.mxu0 0.0
  %1168 = vmatpush1.msra.mxu0 0.0
  %1169 = vmatprep.subr.mxu0 0.0
  %1170 = vmatpush1.msra.mxu0 0.0
  %1171 = vmatprep.subr.mxu0 0.0
  %1172 = vmatpush1.msra.mxu0 0.0
  %1173 = vmatprep.subr.mxu0 0.0
  %1174 = vmatpush1.msra.mxu0 0.0
  %1175 = vmatprep.subr.mxu0 0.0
  %1176 = vmatpush1.msra.mxu0 0.0
  %1177 = vmatprep.subr.mxu0 0.0
  %1178 = vmatpush1.msra.mxu0 0.0
  %1179 = vmatprep.subr.mxu0 0.0
  %1180 = vmatpush1.msra.mxu0 0.0
  %1181 = vmatprep.subr.mxu0 0.0
  %1182 = vmatpush1.msra.mxu0 0.0
  %1183 = vmatprep.mubr.f32.mxu0 0.0
  %1184 = vmatmul.mubr.f32.gmra.mrb[0].mxu0 %v1117
  %v1185 = vpop.f32.mrb[0].mxu0
  %v1186 = vadd.f32 %v887, %v1185
  %v1187 = vpop.f32.mrb[0].mxu0
  %1188 = vdwg.mxu0
  %s1189 = scalar_lea.vmem [#allocation3], 6
  %1190 = vst [vmem:[%s1189] sm:$0x3] %v1186
  %v1191 = vld [vmem:[%s560] sm:$0x3]
  %v1193 = vsel %vm37, %v1191, 0
  %1195 = vmatprep.subr.mxu0 0.0
  %1196 = vmatpush1.msra.mxu0 %v877
  %1197 = vmatprep.subr.mxu0 0.0
  %1198 = vmatpush1.msra.mxu0 %v878
  %1199 = vmatprep.subr.mxu0 0.0
  %1200 = vmatpush1.msra.mxu0 %v879
  %1201 = vmatprep.subr.mxu0 0.0
  %1202 = vmatpush1.msra.mxu0 %v880
  %1203 = vmatprep.subr.mxu0 0.0
  %1204 = vmatpush1.msra.mxu0 0.0
  %1205 = vmatprep.subr.mxu0 0.0
  %1206 = vmatpush1.msra.mxu0 0.0
  %1207 = vmatprep.subr.mxu0 0.0
  %1208 = vmatpush1.msra.mxu0 0.0
  %1209 = vmatprep.subr.mxu0 0.0
  %1210 = vmatpush1.msra.mxu0 0.0
  %1211 = vmatprep.subr.mxu0 0.0
  %1212 = vmatpush1.msra.mxu0 0.0
  %1213 = vmatprep.subr.mxu0 0.0
  %1214 = vmatpush1.msra.mxu0 0.0
  %1215 = vmatprep.subr.mxu0 0.0
  %1216 = vmatpush1.msra.mxu0 0.0
  %1217 = vmatprep.subr.mxu0 0.0
  %1218 = vmatpush1.msra.mxu0 0.0
  %1219 = vmatprep.subr.mxu0 0.0
  %1220 = vmatpush1.msra.mxu0 0.0
  %1221 = vmatprep.subr.mxu0 0.0
  %1222 = vmatpush1.msra.mxu0 0.0
  %1223 = vmatprep.subr.mxu0 0.0
  %1224 = vmatpush1.msra.mxu0 0.0
  %1225 = vmatprep.subr.mxu0 0.0
  %1226 = vmatpush1.msra.mxu0 0.0
  %1227 = vmatprep.subr.mxu0 0.0
  %1228 = vmatpush1.msra.mxu0 0.0
  %1229 = vmatprep.subr.mxu0 0.0
  %1230 = vmatpush1.msra.mxu0 0.0
  %1231 = vmatprep.subr.mxu0 0.0
  %1232 = vmatpush1.msra.mxu0 0.0
  %1233 = vmatprep.subr.mxu0 0.0
  %1234 = vmatpush1.msra.mxu0 0.0
  %1235 = vmatprep.subr.mxu0 0.0
  %1236 = vmatpush1.msra.mxu0 0.0
  %1237 = vmatprep.subr.mxu0 0.0
  %1238 = vmatpush1.msra.mxu0 0.0
  %1239 = vmatprep.subr.mxu0 0.0
  %1240 = vmatpush1.msra.mxu0 0.0
  %1241 = vmatprep.subr.mxu0 0.0
  %1242 = vmatpush1.msra.mxu0 0.0
  %1243 = vmatprep.subr.mxu0 0.0
  %1244 = vmatpush1.msra.mxu0 0.0
  %1245 = vmatprep.subr.mxu0 0.0
  %1246 = vmatpush1.msra.mxu0 0.0
  %1247 = vmatprep.subr.mxu0 0.0
  %1248 = vmatpush1.msra.mxu0 0.0
  %1249 = vmatprep.subr.mxu0 0.0
  %1250 = vmatpush1.msra.mxu0 0.0
  %1251 = vmatprep.subr.mxu0 0.0
  %1252 = vmatpush1.msra.mxu0 0.0
  %1253 = vmatprep.subr.mxu0 0.0
  %1254 = vmatpush1.msra.mxu0 0.0
  %1255 = vmatprep.subr.mxu0 0.0
  %1256 = vmatpush1.msra.mxu0 0.0
  %1257 = vmatprep.subr.mxu0 0.0
  %1258 = vmatpush1.msra.mxu0 0.0
  %1259 = vmatprep.mubr.f32.mxu0 0.0
  %1260 = vmatmul.mubr.f32.gmra.mrb[0].mxu0 %v1193
  %v1261 = vpop.f32.mrb[0].mxu0
  %v1262 = vadd.f32 %v887, %v1261
  %v1263 = vpop.f32.mrb[0].mxu0
  %1264 = vdwg.mxu0
  %s1265 = scalar_lea.vmem [#allocation3], 8
  %1266 = vst [vmem:[%s1265] sm:$0x3] %v1262
  %v1267 = vld [vmem:[%s665] sm:$0x3]
  %v1269 = vsel %vm37, %v1267, 0
  %1271 = vmatprep.subr.mxu0 0.0
  %1272 = vmatpush1.msra.mxu0 %v877
  %1273 = vmatprep.subr.mxu0 0.0
  %1274 = vmatpush1.msra.mxu0 %v878
  %1275 = vmatprep.subr.mxu0 0.0
  %1276 = vmatpush1.msra.mxu0 %v879
  %1277 = vmatprep.subr.mxu0 0.0
  %1278 = vmatpush1.msra.mxu0 %v880
  %1279 = vmatprep.subr.mxu0 0.0
  %1280 = vmatpush1.msra.mxu0 0.0
  %1281 = vmatprep.subr.mxu0 0.0
  %1282 = vmatpush1.msra.mxu0 0.0
  %1283 = vmatprep.subr.mxu0 0.0
  %1284 = vmatpush1.msra.mxu0 0.0
  %1285 = vmatprep.subr.mxu0 0.0
  %1286 = vmatpush1.msra.mxu0 0.0
  %1287 = vmatprep.subr.mxu0 0.0
  %1288 = vmatpush1.msra.mxu0 0.0
  %1289 = vmatprep.subr.mxu0 0.0
  %1290 = vmatpush1.msra.mxu0 0.0
  %1291 = vmatprep.subr.mxu0 0.0
  %1292 = vmatpush1.msra.mxu0 0.0
  %1293 = vmatprep.subr.mxu0 0.0
  %1294 = vmatpush1.msra.mxu0 0.0
  %1295 = vmatprep.subr.mxu0 0.0
  %1296 = vmatpush1.msra.mxu0 0.0
  %1297 = vmatprep.subr.mxu0 0.0
  %1298 = vmatpush1.msra.mxu0 0.0
  %1299 = vmatprep.subr.mxu0 0.0
  %1300 = vmatpush1.msra.mxu0 0.0
  %1301 = vmatprep.subr.mxu0 0.0
  %1302 = vmatpush1.msra.mxu0 0.0
  %1303 = vmatprep.subr.mxu0 0.0
  %1304 = vmatpush1.msra.mxu0 0.0
  %1305 = vmatprep.subr.mxu0 0.0
  %1306 = vmatpush1.msra.mxu0 0.0
  %1307 = vmatprep.subr.mxu0 0.0
  %1308 = vmatpush1.msra.mxu0 0.0
  %1309 = vmatprep.subr.mxu0 0.0
  %1310 = vmatpush1.msra.mxu0 0.0
  %1311 = vmatprep.subr.mxu0 0.0
  %1312 = vmatpush1.msra.mxu0 0.0
  %1313 = vmatprep.subr.mxu0 0.0
  %1314 = vmatpush1.msra.mxu0 0.0
  %1315 = vmatprep.subr.mxu0 0.0
  %1316 = vmatpush1.msra.mxu0 0.0
  %1317 = vmatprep.subr.mxu0 0.0
  %1318 = vmatpush1.msra.mxu0 0.0
  %1319 = vmatprep.subr.mxu0 0.0
  %1320 = vmatpush1.msra.mxu0 0.0
  %1321 = vmatprep.subr.mxu0 0.0
  %1322 = vmatpush1.msra.mxu0 0.0
  %1323 = vmatprep.subr.mxu0 0.0
  %1324 = vmatpush1.msra.mxu0 0.0
  %1325 = vmatprep.subr.mxu0 0.0
  %1326 = vmatpush1.msra.mxu0 0.0
  %1327 = vmatprep.subr.mxu0 0.0
  %1328 = vmatpush1.msra.mxu0 0.0
  %1329 = vmatprep.subr.mxu0 0.0
  %1330 = vmatpush1.msra.mxu0 0.0
  %1331 = vmatprep.subr.mxu0 0.0
  %1332 = vmatpush1.msra.mxu0 0.0
  %1333 = vmatprep.subr.mxu0 0.0
  %1334 = vmatpush1.msra.mxu0 0.0
  %1335 = vmatprep.mubr.f32.mxu0 0.0
  %1336 = vmatmul.mubr.f32.gmra.mrb[0].mxu0 %v1269
  %v1337 = vpop.f32.mrb[0].mxu0
  %v1338 = vadd.f32 %v887, %v1337
  %v1339 = vpop.f32.mrb[0].mxu0
  %1340 = vdwg.mxu0
  %s1341 = scalar_lea.vmem [#allocation3], 10
  %1342 = vst [vmem:[%s1341] sm:$0x3] %v1338
  %v1343 = vld [vmem:[%s770] sm:$0x3]
  %v1345 = vsel %vm37, %v1343, 0
  %1347 = vmatprep.subr.mxu0 0.0
  %1348 = vmatpush1.msra.mxu0 %v877
  %1349 = vmatprep.subr.mxu0 0.0
  %1350 = vmatpush1.msra.mxu0 %v878
  %1351 = vmatprep.subr.mxu0 0.0
  %1352 = vmatpush1.msra.mxu0 %v879
  %1353 = vmatprep.subr.mxu0 0.0
  %1354 = vmatpush1.msra.mxu0 %v880
  %1355 = vmatprep.subr.mxu0 0.0
  %1356 = vmatpush1.msra.mxu0 0.0
  %1357 = vmatprep.subr.mxu0 0.0
  %1358 = vmatpush1.msra.mxu0 0.0
  %1359 = vmatprep.subr.mxu0 0.0
  %1360 = vmatpush1.msra.mxu0 0.0
  %1361 = vmatprep.subr.mxu0 0.0
  %1362 = vmatpush1.msra.mxu0 0.0
  %1363 = vmatprep.subr.mxu0 0.0
  %1364 = vmatpush1.msra.mxu0 0.0
  %1365 = vmatprep.subr.mxu0 0.0
  %1366 = vmatpush1.msra.mxu0 0.0
  %1367 = vmatprep.subr.mxu0 0.0
  %1368 = vmatpush1.msra.mxu0 0.0
  %1369 = vmatprep.subr.mxu0 0.0
  %1370 = vmatpush1.msra.mxu0 0.0
  %1371 = vmatprep.subr.mxu0 0.0
  %1372 = vmatpush1.msra.mxu0 0.0
  %1373 = vmatprep.subr.mxu0 0.0
  %1374 = vmatpush1.msra.mxu0 0.0
  %1375 = vmatprep.subr.mxu0 0.0
  %1376 = vmatpush1.msra.mxu0 0.0
  %1377 = vmatprep.subr.mxu0 0.0
  %1378 = vmatpush1.msra.mxu0 0.0
  %1379 = vmatprep.subr.mxu0 0.0
  %1380 = vmatpush1.msra.mxu0 0.0
  %1381 = vmatprep.subr.mxu0 0.0
  %1382 = vmatpush1.msra.mxu0 0.0
  %1383 = vmatprep.subr.mxu0 0.0
  %1384 = vmatpush1.msra.mxu0 0.0
  %1385 = vmatprep.subr.mxu0 0.0
  %1386 = vmatpush1.msra.mxu0 0.0
  %1387 = vmatprep.subr.mxu0 0.0
  %1388 = vmatpush1.msra.mxu0 0.0
  %1389 = vmatprep.subr.mxu0 0.0
  %1390 = vmatpush1.msra.mxu0 0.0
  %1391 = vmatprep.subr.mxu0 0.0
  %1392 = vmatpush1.msra.mxu0 0.0
  %1393 = vmatprep.subr.mxu0 0.0
  %1394 = vmatpush1.msra.mxu0 0.0
  %1395 = vmatprep.subr.mxu0 0.0
  %1396 = vmatpush1.msra.mxu0 0.0
  %1397 = vmatprep.subr.mxu0 0.0
  %1398 = vmatpush1.msra.mxu0 0.0
  %1399 = vmatprep.subr.mxu0 0.0
  %1400 = vmatpush1.msra.mxu0 0.0
  %1401 = vmatprep.subr.mxu0 0.0
  %1402 = vmatpush1.msra.mxu0 0.0
  %1403 = vmatprep.subr.mxu0 0.0
  %1404 = vmatpush1.msra.mxu0 0.0
  %1405 = vmatprep.subr.mxu0 0.0
  %1406 = vmatpush1.msra.mxu0 0.0
  %1407 = vmatprep.subr.mxu0 0.0
  %1408 = vmatpush1.msra.mxu0 0.0
  %1409 = vmatprep.subr.mxu0 0.0
  %1410 = vmatpush1.msra.mxu0 0.0
  %1411 = vmatprep.mubr.f32.mxu0 0.0
  %1412 = vmatmul.mubr.f32.gmra.mrb[0].mxu0 %v1345
  %v1413 = vpop.f32.mrb[0].mxu0
  %v1414 = vadd.f32 %v887, %v1413
  %v1415 = vpop.f32.mrb[0].mxu0
  %1416 = vdwg.mxu0
  %s1417 = scalar_lea.vmem [#allocation3], 12
  %1418 = vst [vmem:[%s1417] sm:$0x3] %v1414
  %v1419 = vld [vmem:[%s875] sm:$0x3]
  %v1421 = vsel %vm37, %v1419, 0
  %1423 = vmatprep.subr.mxu0 0.0
  %1424 = vmatpush1.msra.mxu0 %v877
  %1425 = vmatprep.subr.mxu0 0.0
  %1426 = vmatpush1.msra.mxu0 %v878
  %1427 = vmatprep.subr.mxu0 0.0
  %1428 = vmatpush1.msra.mxu0 %v879
  %1429 = vmatprep.subr.mxu0 0.0
  %1430 = vmatpush1.msra.mxu0 %v880
  %1431 = vmatprep.subr.mxu0 0.0
  %1432 = vmatpush1.msra.mxu0 0.0
  %1433 = vmatprep.subr.mxu0 0.0
  %1434 = vmatpush1.msra.mxu0 0.0
  %1435 = vmatprep.subr.mxu0 0.0
  %1436 = vmatpush1.msra.mxu0 0.0
  %1437 = vmatprep.subr.mxu0 0.0
  %1438 = vmatpush1.msra.mxu0 0.0
  %1439 = vmatprep.subr.mxu0 0.0
  %1440 = vmatpush1.msra.mxu0 0.0
  %1441 = vmatprep.subr.mxu0 0.0
  %1442 = vmatpush1.msra.mxu0 0.0
  %1443 = vmatprep.subr.mxu0 0.0
  %1444 = vmatpush1.msra.mxu0 0.0
  %1445 = vmatprep.subr.mxu0 0.0
  %1446 = vmatpush1.msra.mxu0 0.0
  %1447 = vmatprep.subr.mxu0 0.0
  %1448 = vmatpush1.msra.mxu0 0.0
  %1449 = vmatprep.subr.mxu0 0.0
  %1450 = vmatpush1.msra.mxu0 0.0
  %1451 = vmatprep.subr.mxu0 0.0
  %1452 = vmatpush1.msra.mxu0 0.0
  %1453 = vmatprep.subr.mxu0 0.0
  %1454 = vmatpush1.msra.mxu0 0.0
  %1455 = vmatprep.subr.mxu0 0.0
  %1456 = vmatpush1.msra.mxu0 0.0
  %1457 = vmatprep.subr.mxu0 0.0
  %1458 = vmatpush1.msra.mxu0 0.0
  %1459 = vmatprep.subr.mxu0 0.0
  %1460 = vmatpush1.msra.mxu0 0.0
  %1461 = vmatprep.subr.mxu0 0.0
  %1462 = vmatpush1.msra.mxu0 0.0
  %1463 = vmatprep.subr.mxu0 0.0
  %1464 = vmatpush1.msra.mxu0 0.0
  %1465 = vmatprep.subr.mxu0 0.0
  %1466 = vmatpush1.msra.mxu0 0.0
  %1467 = vmatprep.subr.mxu0 0.0
  %1468 = vmatpush1.msra.mxu0 0.0
  %1469 = vmatprep.subr.mxu0 0.0
  %1470 = vmatpush1.msra.mxu0 0.0
  %1471 = vmatprep.subr.mxu0 0.0
  %1472 = vmatpush1.msra.mxu0 0.0
  %1473 = vmatprep.subr.mxu0 0.0
  %1474 = vmatpush1.msra.mxu0 0.0
  %1475 = vmatprep.subr.mxu0 0.0
  %1476 = vmatpush1.msra.mxu0 0.0
  %1477 = vmatprep.subr.mxu0 0.0
  %1478 = vmatpush1.msra.mxu0 0.0
  %1479 = vmatprep.subr.mxu0 0.0
  %1480 = vmatpush1.msra.mxu0 0.0
  %1481 = vmatprep.subr.mxu0 0.0
  %1482 = vmatpush1.msra.mxu0 0.0
  %1483 = vmatprep.subr.mxu0 0.0
  %1484 = vmatpush1.msra.mxu0 0.0
  %1485 = vmatprep.subr.mxu0 0.0
  %1486 = vmatpush1.msra.mxu0 0.0
  %1487 = vmatprep.mubr.f32.mxu0 0.0
  %1488 = vmatmul.mubr.f32.gmra.mrb[0].mxu0 %v1421
  %v1489 = vpop.f32.mrb[0].mxu0
  %v1490 = vadd.f32 %v887, %v1489
  %v1491 = vpop.f32.mrb[0].mxu0
  %1492 = vdwg.mxu0
  %s1493 = scalar_lea.vmem [#allocation3], 14
  %1494 = vst [vmem:[%s1493] sm:$0x3] %v1490
  %v1495 = vld [vmem:[%s3] sm:$0xff]
  %v1496 = vld [vmem:[%s3 + $0x8] sm:$0xff]
  %v1497 = vld [vmem:[%s3 + $0x10] sm:$0xff]
  %v1498 = vld [vmem:[%s3 + $0x18] sm:$0xff]
  %v1499 = vld [vmem:[#allocation3] sm:$0x3]
  %1500 = vmatprep.subr.mxu0 0.0
  %1501 = vmatpush1.msra.mxu0 %v1495
  %1502 = vmatprep.subr.mxu0 0.0
  %1503 = vmatpush1.msra.mxu0 %v1496
  %1504 = vmatprep.subr.mxu0 0.0
  %1505 = vmatpush1.msra.mxu0 %v1497
  %1506 = vmatprep.subr.mxu0 0.0
  %1507 = vmatpush1.msra.mxu0 %v1498
  %1508 = vmatprep.subr.mxu0 0.0
  %1509 = vmatpush1.msra.mxu0 0.0
  %1510 = vmatprep.subr.mxu0 0.0
  %1511 = vmatpush1.msra.mxu0 0.0
  %1512 = vmatprep.subr.mxu0 0.0
  %1513 = vmatpush1.msra.mxu0 0.0
  %1514 = vmatprep.subr.mxu0 0.0
  %1515 = vmatpush1.msra.mxu0 0.0
  %1516 = vmatprep.subr.mxu0 0.0
  %1517 = vmatpush1.msra.mxu0 0.0
  %1518 = vmatprep.subr.mxu0 0.0
  %1519 = vmatpush1.msra.mxu0 0.0
  %1520 = vmatprep.subr.mxu0 0.0
  %1521 = vmatpush1.msra.mxu0 0.0
  %1522 = vmatprep.subr.mxu0 0.0
  %1523 = vmatpush1.msra.mxu0 0.0
  %1524 = vmatprep.subr.mxu0 0.0
  %1525 = vmatpush1.msra.mxu0 0.0
  %1526 = vmatprep.subr.mxu0 0.0
  %1527 = vmatpush1.msra.mxu0 0.0
  %1528 = vmatprep.subr.mxu0 0.0
  %1529 = vmatpush1.msra.mxu0 0.0
  %1530 = vmatprep.subr.mxu0 0.0
  %1531 = vmatpush1.msra.mxu0 0.0
  %1532 = vmatprep.subr.mxu0 0.0
  %1533 = vmatpush1.msra.mxu0 0.0
  %1534 = vmatprep.subr.mxu0 0.0
  %1535 = vmatpush1.msra.mxu0 0.0
  %1536 = vmatprep.subr.mxu0 0.0
  %1537 = vmatpush1.msra.mxu0 0.0
  %1538 = vmatprep.subr.mxu0 0.0
  %1539 = vmatpush1.msra.mxu0 0.0
  %1540 = vmatprep.subr.mxu0 0.0
  %1541 = vmatpush1.msra.mxu0 0.0
  %1542 = vmatprep.subr.mxu0 0.0
  %1543 = vmatpush1.msra.mxu0 0.0
  %1544 = vmatprep.subr.mxu0 0.0
  %1545 = vmatpush1.msra.mxu0 0.0
  %1546 = vmatprep.subr.mxu0 0.0
  %1547 = vmatpush1.msra.mxu0 0.0
  %1548 = vmatprep.subr.mxu0 0.0
  %1549 = vmatpush1.msra.mxu0 0.0
  %1550 = vmatprep.subr.mxu0 0.0
  %1551 = vmatpush1.msra.mxu0 0.0
  %1552 = vmatprep.subr.mxu0 0.0
  %1553 = vmatpush1.msra.mxu0 0.0
  %1554 = vmatprep.subr.mxu0 0.0
  %1555 = vmatpush1.msra.mxu0 0.0
  %1556 = vmatprep.subr.mxu0 0.0
  %1557 = vmatpush1.msra.mxu0 0.0
  %1558 = vmatprep.subr.mxu0 0.0
  %1559 = vmatpush1.msra.mxu0 0.0
  %1560 = vmatprep.subr.mxu0 0.0
  %1561 = vmatpush1.msra.mxu0 0.0
  %1562 = vmatprep.subr.mxu0 0.0
  %1563 = vmatpush1.msra.mxu0 0.0
  %1564 = vmatprep.mubr.f32.mxu0 0.0
  %1565 = vmatmul.mubr.f32.gmra.mrb[0].mxu0 %v39
  %v1566 = vpop.f32.mrb[0].mxu0
  %v1567 = vadd.f32 0.0, %v1566
  %v1568 = vpop.f32.mrb[0].mxu0
  %1569 = vdwg.mxu0
  %v1570 = vadd.f32 %v1499, %v1567
  %v1571 = vxor.u32 %v1570, 2147483648
  %v1572 = vmul.f32 %v1571, 1.442695
  %v1573 = vpow.pop %v1572
  %v1574 = vadd.f32 %v1573, 1.0
  %v1575 = vrcp.pop %v1574
  %v1576 = vmul.f32 1.0, %v1575
  %v1577 = vtanh.pop %v1570
  %v1578 = vmul.f32 %v1576, 0.0
  %1580 = vrot.lane.b32.xlu0 %v1577, 64
  %v1581 = vpop.permute.xlu0 %1580
  %v1583 = vmul.f32 %v1576, %v1581
  %1585 = vrot.lane.b32.xlu0 %v1583, 32
  %v1586 = vpop.permute.xlu0 %1585
  %v1588 = vadd.f32 %v1578, %v1586
  %v1589 = vtanh.pop %v1588
  %1591 = vrot.lane.b32.xlu0 %v1589, 64
  %v1592 = vpop.permute.xlu0 %1591
  %v1594 = vmul.f32 %v1576, %v1592
  %1596 = vrot.lane.b32.xlu0 %v1594, 32
  %v1597 = vpop.permute.xlu0 %1596
  %1599 = vst.msk [vmem:[#allocation2] sm:$0x3] %vm140, %v1597
  %v1600 = vld [vmem:[%s1037] sm:$0x3]
  %v1601 = vsel %vm37, %v1597, 0
  %1603 = vmatprep.subr.mxu0 0.0
  %1604 = vmatpush1.msra.mxu0 %v1495
  %1605 = vmatprep.subr.mxu0 0.0
  %1606 = vmatpush1.msra.mxu0 %v1496
  %1607 = vmatprep.subr.mxu0 0.0
  %1608 = vmatpush1.msra.mxu0 %v1497
  %1609 = vmatprep.subr.mxu0 0.0
  %1610 = vmatpush1.msra.mxu0 %v1498
  %1611 = vmatprep.subr.mxu0 0.0
  %1612 = vmatpush1.msra.mxu0 0.0
  %1613 = vmatprep.subr.mxu0 0.0
  %1614 = vmatpush1.msra.mxu0 0.0
  %1615 = vmatprep.subr.mxu0 0.0
  %1616 = vmatpush1.msra.mxu0 0.0
  %1617 = vmatprep.subr.mxu0 0.0
  %1618 = vmatpush1.msra.mxu0 0.0
  %1619 = vmatprep.subr.mxu0 0.0
  %1620 = vmatpush1.msra.mxu0 0.0
  %1621 = vmatprep.subr.mxu0 0.0
  %1622 = vmatpush1.msra.mxu0 0.0
  %1623 = vmatprep.subr.mxu0 0.0
  %1624 = vmatpush1.msra.mxu0 0.0
  %1625 = vmatprep.subr.mxu0 0.0
  %1626 = vmatpush1.msra.mxu0 0.0
  %1627 = vmatprep.subr.mxu0 0.0
  %1628 = vmatpush1.msra.mxu0 0.0
  %1629 = vmatprep.subr.mxu0 0.0
  %1630 = vmatpush1.msra.mxu0 0.0
  %1631 = vmatprep.subr.mxu0 0.0
  %1632 = vmatpush1.msra.mxu0 0.0
  %1633 = vmatprep.subr.mxu0 0.0
  %1634 = vmatpush1.msra.mxu0 0.0
  %1635 = vmatprep.subr.mxu0 0.0
  %1636 = vmatpush1.msra.mxu0 0.0
  %1637 = vmatprep.subr.mxu0 0.0
  %1638 = vmatpush1.msra.mxu0 0.0
  %1639 = vmatprep.subr.mxu0 0.0
  %1640 = vmatpush1.msra.mxu0 0.0
  %1641 = vmatprep.subr.mxu0 0.0
  %1642 = vmatpush1.msra.mxu0 0.0
  %1643 = vmatprep.subr.mxu0 0.0
  %1644 = vmatpush1.msra.mxu0 0.0
  %1645 = vmatprep.subr.mxu0 0.0
  %1646 = vmatpush1.msra.mxu0 0.0
  %1647 = vmatprep.subr.mxu0 0.0
  %1648 = vmatpush1.msra.mxu0 0.0
  %1649 = vmatprep.subr.mxu0 0.0
  %1650 = vmatpush1.msra.mxu0 0.0
  %1651 = vmatprep.subr.mxu0 0.0
  %1652 = vmatpush1.msra.mxu0 0.0
  %1653 = vmatprep.subr.mxu0 0.0
  %1654 = vmatpush1.msra.mxu0 0.0
  %1655 = vmatprep.subr.mxu0 0.0
  %1656 = vmatpush1.msra.mxu0 0.0
  %1657 = vmatprep.subr.mxu0 0.0
  %1658 = vmatpush1.msra.mxu0 0.0
  %1659 = vmatprep.subr.mxu0 0.0
  %1660 = vmatpush1.msra.mxu0 0.0
  %1661 = vmatprep.subr.mxu0 0.0
  %1662 = vmatpush1.msra.mxu0 0.0
  %1663 = vmatprep.subr.mxu0 0.0
  %1664 = vmatpush1.msra.mxu0 0.0
  %1665 = vmatprep.subr.mxu0 0.0
  %1666 = vmatpush1.msra.mxu0 0.0
  %1667 = vmatprep.mubr.f32.mxu0 0.0
  %1668 = vmatmul.mubr.f32.gmra.mrb[0].mxu0 %v1601
  %v1669 = vpop.f32.mrb[0].mxu0
  %v1670 = vadd.f32 0.0, %v1669
  %v1671 = vpop.f32.mrb[0].mxu0
  %1672 = vdwg.mxu0
  %v1673 = vadd.f32 %v1600, %v1670
  %v1674 = vxor.u32 %v1673, 2147483648
  %v1675 = vmul.f32 %v1674, 1.442695
  %v1676 = vpow.pop %v1675
  %v1677 = vadd.f32 %v1676, 1.0
  %v1678 = vrcp.pop %v1677
  %v1679 = vmul.f32 1.0, %v1678
  %v1680 = vtanh.pop %v1673
  %v1681 = vmul.f32 %v1679, %v1588
  %1683 = vrot.lane.b32.xlu0 %v1680, 64
  %v1684 = vpop.permute.xlu0 %1683
  %v1686 = vmul.f32 %v1679, %v1684
  %1688 = vrot.lane.b32.xlu0 %v1686, 32
  %v1689 = vpop.permute.xlu0 %1688
  %v1691 = vadd.f32 %v1681, %v1689
  %v1692 = vtanh.pop %v1691
  %1694 = vrot.lane.b32.xlu0 %v1692, 64
  %v1695 = vpop.permute.xlu0 %1694
  %v1697 = vmul.f32 %v1679, %v1695
  %1699 = vrot.lane.b32.xlu0 %v1697, 32
  %v1700 = vpop.permute.xlu0 %1699
  %1702 = vst.msk [vmem:[%s245] sm:$0x3] %vm140, %v1700
  %v1703 = vld [vmem:[%s1113] sm:$0x3]
  %v1704 = vsel %vm37, %v1700, 0
  %1706 = vmatprep.subr.mxu0 0.0
  %1707 = vmatpush1.msra.mxu0 %v1495
  %1708 = vmatprep.subr.mxu0 0.0
  %1709 = vmatpush1.msra.mxu0 %v1496
  %1710 = vmatprep.subr.mxu0 0.0
  %1711 = vmatpush1.msra.mxu0 %v1497
  %1712 = vmatprep.subr.mxu0 0.0
  %1713 = vmatpush1.msra.mxu0 %v1498
  %1714 = vmatprep.subr.mxu0 0.0
  %1715 = vmatpush1.msra.mxu0 0.0
  %1716 = vmatprep.subr.mxu0 0.0
  %1717 = vmatpush1.msra.mxu0 0.0
  %1718 = vmatprep.subr.mxu0 0.0
  %1719 = vmatpush1.msra.mxu0 0.0
  %1720 = vmatprep.subr.mxu0 0.0
  %1721 = vmatpush1.msra.mxu0 0.0
  %1722 = vmatprep.subr.mxu0 0.0
  %1723 = vmatpush1.msra.mxu0 0.0
  %1724 = vmatprep.subr.mxu0 0.0
  %1725 = vmatpush1.msra.mxu0 0.0
  %1726 = vmatprep.subr.mxu0 0.0
  %1727 = vmatpush1.msra.mxu0 0.0
  %1728 = vmatprep.subr.mxu0 0.0
  %1729 = vmatpush1.msra.mxu0 0.0
  %1730 = vmatprep.subr.mxu0 0.0
  %1731 = vmatpush1.msra.mxu0 0.0
  %1732 = vmatprep.subr.mxu0 0.0
  %1733 = vmatpush1.msra.mxu0 0.0
  %1734 = vmatprep.subr.mxu0 0.0
  %1735 = vmatpush1.msra.mxu0 0.0
  %1736 = vmatprep.subr.mxu0 0.0
  %1737 = vmatpush1.msra.mxu0 0.0
  %1738 = vmatprep.subr.mxu0 0.0
  %1739 = vmatpush1.msra.mxu0 0.0
  %1740 = vmatprep.subr.mxu0 0.0
  %1741 = vmatpush1.msra.mxu0 0.0
  %1742 = vmatprep.subr.mxu0 0.0
  %1743 = vmatpush1.msra.mxu0 0.0
  %1744 = vmatprep.subr.mxu0 0.0
  %1745 = vmatpush1.msra.mxu0 0.0
  %1746 = vmatprep.subr.mxu0 0.0
  %1747 = vmatpush1.msra.mxu0 0.0
  %1748 = vmatprep.subr.mxu0 0.0
  %1749 = vmatpush1.msra.mxu0 0.0
  %1750 = vmatprep.subr.mxu0 0.0
  %1751 = vmatpush1.msra.mxu0 0.0
  %1752 = vmatprep.subr.mxu0 0.0
  %1753 = vmatpush1.msra.mxu0 0.0
  %1754 = vmatprep.subr.mxu0 0.0
  %1755 = vmatpush1.msra.mxu0 0.0
  %1756 = vmatprep.subr.mxu0 0.0
  %1757 = vmatpush1.msra.mxu0 0.0
  %1758 = vmatprep.subr.mxu0 0.0
  %1759 = vmatpush1.msra.mxu0 0.0
  %1760 = vmatprep.subr.mxu0 0.0
  %1761 = vmatpush1.msra.mxu0 0.0
  %1762 = vmatprep.subr.mxu0 0.0
  %1763 = vmatpush1.msra.mxu0 0.0
  %1764 = vmatprep.subr.mxu0 0.0
  %1765 = vmatpush1.msra.mxu0 0.0
  %1766 = vmatprep.subr.mxu0 0.0
  %1767 = vmatpush1.msra.mxu0 0.0
  %1768 = vmatprep.subr.mxu0 0.0
  %1769 = vmatpush1.msra.mxu0 0.0
  %1770 = vmatprep.mubr.f32.mxu0 0.0
  %1771 = vmatmul.mubr.f32.gmra.mrb[0].mxu0 %v1704
  %v1772 = vpop.f32.mrb[0].mxu0
  %v1773 = vadd.f32 0.0, %v1772
  %v1774 = vpop.f32.mrb[0].mxu0
  %1775 = vdwg.mxu0
  %v1776 = vadd.f32 %v1703, %v1773
  %v1777 = vxor.u32 %v1776, 2147483648
  %v1778 = vmul.f32 %v1777, 1.442695
  %v1779 = vpow.pop %v1778
  %v1780 = vadd.f32 %v1779, 1.0
  %v1781 = vrcp.pop %v1780
  %v1782 = vmul.f32 1.0, %v1781
  %v1783 = vtanh.pop %v1776
  %v1784 = vmul.f32 %v1782, %v1691
  %1786 = vrot.lane.b32.xlu0 %v1783, 64
  %v1787 = vpop.permute.xlu0 %1786
  %v1789 = vmul.f32 %v1782, %v1787
  %1791 = vrot.lane.b32.xlu0 %v1789, 32
  %v1792 = vpop.permute.xlu0 %1791
  %v1794 = vadd.f32 %v1784, %v1792
  %v1795 = vtanh.pop %v1794
  %1797 = vrot.lane.b32.xlu0 %v1795, 64
  %v1798 = vpop.permute.xlu0 %1797
  %v1800 = vmul.f32 %v1782, %v1798
  %1802 = vrot.lane.b32.xlu0 %v1800, 32
  %v1803 = vpop.permute.xlu0 %1802
  %1805 = vst.msk [vmem:[%s350] sm:$0x3] %vm140, %v1803
  %v1806 = vld [vmem:[%s1189] sm:$0x3]
  %v1807 = vsel %vm37, %v1803, 0
  %1809 = vmatprep.subr.mxu0 0.0
  %1810 = vmatpush1.msra.mxu0 %v1495
  %1811 = vmatprep.subr.mxu0 0.0
  %1812 = vmatpush1.msra.mxu0 %v1496
  %1813 = vmatprep.subr.mxu0 0.0
  %1814 = vmatpush1.msra.mxu0 %v1497
  %1815 = vmatprep.subr.mxu0 0.0
  %1816 = vmatpush1.msra.mxu0 %v1498
  %1817 = vmatprep.subr.mxu0 0.0
  %1818 = vmatpush1.msra.mxu0 0.0
  %1819 = vmatprep.subr.mxu0 0.0
  %1820 = vmatpush1.msra.mxu0 0.0
  %1821 = vmatprep.subr.mxu0 0.0
  %1822 = vmatpush1.msra.mxu0 0.0
  %1823 = vmatprep.subr.mxu0 0.0
  %1824 = vmatpush1.msra.mxu0 0.0
  %1825 = vmatprep.subr.mxu0 0.0
  %1826 = vmatpush1.msra.mxu0 0.0
  %1827 = vmatprep.subr.mxu0 0.0
  %1828 = vmatpush1.msra.mxu0 0.0
  %1829 = vmatprep.subr.mxu0 0.0
  %1830 = vmatpush1.msra.mxu0 0.0
  %1831 = vmatprep.subr.mxu0 0.0
  %1832 = vmatpush1.msra.mxu0 0.0
  %1833 = vmatprep.subr.mxu0 0.0
  %1834 = vmatpush1.msra.mxu0 0.0
  %1835 = vmatprep.subr.mxu0 0.0
  %1836 = vmatpush1.msra.mxu0 0.0
  %1837 = vmatprep.subr.mxu0 0.0
  %1838 = vmatpush1.msra.mxu0 0.0
  %1839 = vmatprep.subr.mxu0 0.0
  %1840 = vmatpush1.msra.mxu0 0.0
  %1841 = vmatprep.subr.mxu0 0.0
  %1842 = vmatpush1.msra.mxu0 0.0
  %1843 = vmatprep.subr.mxu0 0.0
  %1844 = vmatpush1.msra.mxu0 0.0
  %1845 = vmatprep.subr.mxu0 0.0
  %1846 = vmatpush1.msra.mxu0 0.0
  %1847 = vmatprep.subr.mxu0 0.0
  %1848 = vmatpush1.msra.mxu0 0.0
  %1849 = vmatprep.subr.mxu0 0.0
  %1850 = vmatpush1.msra.mxu0 0.0
  %1851 = vmatprep.subr.mxu0 0.0
  %1852 = vmatpush1.msra.mxu0 0.0
  %1853 = vmatprep.subr.mxu0 0.0
  %1854 = vmatpush1.msra.mxu0 0.0
  %1855 = vmatprep.subr.mxu0 0.0
  %1856 = vmatpush1.msra.mxu0 0.0
  %1857 = vmatprep.subr.mxu0 0.0
  %1858 = vmatpush1.msra.mxu0 0.0
  %1859 = vmatprep.subr.mxu0 0.0
  %1860 = vmatpush1.msra.mxu0 0.0
  %1861 = vmatprep.subr.mxu0 0.0
  %1862 = vmatpush1.msra.mxu0 0.0
  %1863 = vmatprep.subr.mxu0 0.0
  %1864 = vmatpush1.msra.mxu0 0.0
  %1865 = vmatprep.subr.mxu0 0.0
  %1866 = vmatpush1.msra.mxu0 0.0
  %1867 = vmatprep.subr.mxu0 0.0
  %1868 = vmatpush1.msra.mxu0 0.0
  %1869 = vmatprep.subr.mxu0 0.0
  %1870 = vmatpush1.msra.mxu0 0.0
  %1871 = vmatprep.subr.mxu0 0.0
  %1872 = vmatpush1.msra.mxu0 0.0
  %1873 = vmatprep.mubr.f32.mxu0 0.0
  %1874 = vmatmul.mubr.f32.gmra.mrb[0].mxu0 %v1807
  %v1875 = vpop.f32.mrb[0].mxu0
  %v1876 = vadd.f32 0.0, %v1875
  %v1877 = vpop.f32.mrb[0].mxu0
  %1878 = vdwg.mxu0
  %v1879 = vadd.f32 %v1806, %v1876
  %v1880 = vxor.u32 %v1879, 2147483648
  %v1881 = vmul.f32 %v1880, 1.442695
  %v1882 = vpow.pop %v1881
  %v1883 = vadd.f32 %v1882, 1.0
  %v1884 = vrcp.pop %v1883
  %v1885 = vmul.f32 1.0, %v1884
  %v1886 = vtanh.pop %v1879
  %v1887 = vmul.f32 %v1885, %v1794
  %1889 = vrot.lane.b32.xlu0 %v1886, 64
  %v1890 = vpop.permute.xlu0 %1889
  %v1892 = vmul.f32 %v1885, %v1890
  %1894 = vrot.lane.b32.xlu0 %v1892, 32
  %v1895 = vpop.permute.xlu0 %1894
  %v1897 = vadd.f32 %v1887, %v1895
  %v1898 = vtanh.pop %v1897
  %1900 = vrot.lane.b32.xlu0 %v1898, 64
  %v1901 = vpop.permute.xlu0 %1900
  %v1903 = vmul.f32 %v1885, %v1901
  %1905 = vrot.lane.b32.xlu0 %v1903, 32
  %v1906 = vpop.permute.xlu0 %1905
  %1908 = vst.msk [vmem:[%s455] sm:$0x3] %vm140, %v1906
  %v1909 = vld [vmem:[%s1265] sm:$0x3]
  %v1910 = vsel %vm37, %v1906, 0
  %1912 = vmatprep.subr.mxu0 0.0
  %1913 = vmatpush1.msra.mxu0 %v1495
  %1914 = vmatprep.subr.mxu0 0.0
  %1915 = vmatpush1.msra.mxu0 %v1496
  %1916 = vmatprep.subr.mxu0 0.0
  %1917 = vmatpush1.msra.mxu0 %v1497
  %1918 = vmatprep.subr.mxu0 0.0
  %1919 = vmatpush1.msra.mxu0 %v1498
  %1920 = vmatprep.subr.mxu0 0.0
  %1921 = vmatpush1.msra.mxu0 0.0
  %1922 = vmatprep.subr.mxu0 0.0
  %1923 = vmatpush1.msra.mxu0 0.0
  %1924 = vmatprep.subr.mxu0 0.0
  %1925 = vmatpush1.msra.mxu0 0.0
  %1926 = vmatprep.subr.mxu0 0.0
  %1927 = vmatpush1.msra.mxu0 0.0
  %1928 = vmatprep.subr.mxu0 0.0
  %1929 = vmatpush1.msra.mxu0 0.0
  %1930 = vmatprep.subr.mxu0 0.0
  %1931 = vmatpush1.msra.mxu0 0.0
  %1932 = vmatprep.subr.mxu0 0.0
  %1933 = vmatpush1.msra.mxu0 0.0
  %1934 = vmatprep.subr.mxu0 0.0
  %1935 = vmatpush1.msra.mxu0 0.0
  %1936 = vmatprep.subr.mxu0 0.0
  %1937 = vmatpush1.msra.mxu0 0.0
  %1938 = vmatprep.subr.mxu0 0.0
  %1939 = vmatpush1.msra.mxu0 0.0
  %1940 = vmatprep.subr.mxu0 0.0
  %1941 = vmatpush1.msra.mxu0 0.0
  %1942 = vmatprep.subr.mxu0 0.0
  %1943 = vmatpush1.msra.mxu0 0.0
  %1944 = vmatprep.subr.mxu0 0.0
  %1945 = vmatpush1.msra.mxu0 0.0
  %1946 = vmatprep.subr.mxu0 0.0
  %1947 = vmatpush1.msra.mxu0 0.0
  %1948 = vmatprep.subr.mxu0 0.0
  %1949 = vmatpush1.msra.mxu0 0.0
  %1950 = vmatprep.subr.mxu0 0.0
  %1951 = vmatpush1.msra.mxu0 0.0
  %1952 = vmatprep.subr.mxu0 0.0
  %1953 = vmatpush1.msra.mxu0 0.0
  %1954 = vmatprep.subr.mxu0 0.0
  %1955 = vmatpush1.msra.mxu0 0.0
  %1956 = vmatprep.subr.mxu0 0.0
  %1957 = vmatpush1.msra.mxu0 0.0
  %1958 = vmatprep.subr.mxu0 0.0
  %1959 = vmatpush1.msra.mxu0 0.0
  %1960 = vmatprep.subr.mxu0 0.0
  %1961 = vmatpush1.msra.mxu0 0.0
  %1962 = vmatprep.subr.mxu0 0.0
  %1963 = vmatpush1.msra.mxu0 0.0
  %1964 = vmatprep.subr.mxu0 0.0
  %1965 = vmatpush1.msra.mxu0 0.0
  %1966 = vmatprep.subr.mxu0 0.0
  %1967 = vmatpush1.msra.mxu0 0.0
  %1968 = vmatprep.subr.mxu0 0.0
  %1969 = vmatpush1.msra.mxu0 0.0
  %1970 = vmatprep.subr.mxu0 0.0
  %1971 = vmatpush1.msra.mxu0 0.0
  %1972 = vmatprep.subr.mxu0 0.0
  %1973 = vmatpush1.msra.mxu0 0.0
  %1974 = vmatprep.subr.mxu0 0.0
  %1975 = vmatpush1.msra.mxu0 0.0
  %1976 = vmatprep.mubr.f32.mxu0 0.0
  %1977 = vmatmul.mubr.f32.gmra.mrb[0].mxu0 %v1910
  %v1978 = vpop.f32.mrb[0].mxu0
  %v1979 = vadd.f32 0.0, %v1978
  %v1980 = vpop.f32.mrb[0].mxu0
  %1981 = vdwg.mxu0
  %v1982 = vadd.f32 %v1909, %v1979
  %v1983 = vxor.u32 %v1982, 2147483648
  %v1984 = vmul.f32 %v1983, 1.442695
  %v1985 = vpow.pop %v1984
  %v1986 = vadd.f32 %v1985, 1.0
  %v1987 = vrcp.pop %v1986
  %v1988 = vmul.f32 1.0, %v1987
  %v1989 = vtanh.pop %v1982
  %v1990 = vmul.f32 %v1988, %v1897
  %1992 = vrot.lane.b32.xlu0 %v1989, 64
  %v1993 = vpop.permute.xlu0 %1992
  %v1995 = vmul.f32 %v1988, %v1993
  %1997 = vrot.lane.b32.xlu0 %v1995, 32
  %v1998 = vpop.permute.xlu0 %1997
  %v2000 = vadd.f32 %v1990, %v1998
  %v2001 = vtanh.pop %v2000
  %2003 = vrot.lane.b32.xlu0 %v2001, 64
  %v2004 = vpop.permute.xlu0 %2003
  %v2006 = vmul.f32 %v1988, %v2004
  %2008 = vrot.lane.b32.xlu0 %v2006, 32
  %v2009 = vpop.permute.xlu0 %2008
  %2011 = vst.msk [vmem:[%s560] sm:$0x3] %vm140, %v2009
  %v2012 = vld [vmem:[%s1341] sm:$0x3]
  %v2013 = vsel %vm37, %v2009, 0
  %2015 = vmatprep.subr.mxu0 0.0
  %2016 = vmatpush1.msra.mxu0 %v1495
  %2017 = vmatprep.subr.mxu0 0.0
  %2018 = vmatpush1.msra.mxu0 %v1496
  %2019 = vmatprep.subr.mxu0 0.0
  %2020 = vmatpush1.msra.mxu0 %v1497
  %2021 = vmatprep.subr.mxu0 0.0
  %2022 = vmatpush1.msra.mxu0 %v1498
  %2023 = vmatprep.subr.mxu0 0.0
  %2024 = vmatpush1.msra.mxu0 0.0
  %2025 = vmatprep.subr.mxu0 0.0
  %2026 = vmatpush1.msra.mxu0 0.0
  %2027 = vmatprep.subr.mxu0 0.0
  %2028 = vmatpush1.msra.mxu0 0.0
  %2029 = vmatprep.subr.mxu0 0.0
  %2030 = vmatpush1.msra.mxu0 0.0
  %2031 = vmatprep.subr.mxu0 0.0
  %2032 = vmatpush1.msra.mxu0 0.0
  %2033 = vmatprep.subr.mxu0 0.0
  %2034 = vmatpush1.msra.mxu0 0.0
  %2035 = vmatprep.subr.mxu0 0.0
  %2036 = vmatpush1.msra.mxu0 0.0
  %2037 = vmatprep.subr.mxu0 0.0
  %2038 = vmatpush1.msra.mxu0 0.0
  %2039 = vmatprep.subr.mxu0 0.0
  %2040 = vmatpush1.msra.mxu0 0.0
  %2041 = vmatprep.subr.mxu0 0.0
  %2042 = vmatpush1.msra.mxu0 0.0
  %2043 = vmatprep.subr.mxu0 0.0
  %2044 = vmatpush1.msra.mxu0 0.0
  %2045 = vmatprep.subr.mxu0 0.0
  %2046 = vmatpush1.msra.mxu0 0.0
  %2047 = vmatprep.subr.mxu0 0.0
  %2048 = vmatpush1.msra.mxu0 0.0
  %2049 = vmatprep.subr.mxu0 0.0
  %2050 = vmatpush1.msra.mxu0 0.0
  %2051 = vmatprep.subr.mxu0 0.0
  %2052 = vmatpush1.msra.mxu0 0.0
  %2053 = vmatprep.subr.mxu0 0.0
  %2054 = vmatpush1.msra.mxu0 0.0
  %2055 = vmatprep.subr.mxu0 0.0
  %2056 = vmatpush1.msra.mxu0 0.0
  %2057 = vmatprep.subr.mxu0 0.0
  %2058 = vmatpush1.msra.mxu0 0.0
  %2059 = vmatprep.subr.mxu0 0.0
  %2060 = vmatpush1.msra.mxu0 0.0
  %2061 = vmatprep.subr.mxu0 0.0
  %2062 = vmatpush1.msra.mxu0 0.0
  %2063 = vmatprep.subr.mxu0 0.0
  %2064 = vmatpush1.msra.mxu0 0.0
  %2065 = vmatprep.subr.mxu0 0.0
  %2066 = vmatpush1.msra.mxu0 0.0
  %2067 = vmatprep.subr.mxu0 0.0
  %2068 = vmatpush1.msra.mxu0 0.0
  %2069 = vmatprep.subr.mxu0 0.0
  %2070 = vmatpush1.msra.mxu0 0.0
  %2071 = vmatprep.subr.mxu0 0.0
  %2072 = vmatpush1.msra.mxu0 0.0
  %2073 = vmatprep.subr.mxu0 0.0
  %2074 = vmatpush1.msra.mxu0 0.0
  %2075 = vmatprep.subr.mxu0 0.0
  %2076 = vmatpush1.msra.mxu0 0.0
  %2077 = vmatprep.subr.mxu0 0.0
  %2078 = vmatpush1.msra.mxu0 0.0
  %2079 = vmatprep.mubr.f32.mxu0 0.0
  %2080 = vmatmul.mubr.f32.gmra.mrb[0].mxu0 %v2013
  %v2081 = vpop.f32.mrb[0].mxu0
  %v2082 = vadd.f32 0.0, %v2081
  %v2083 = vpop.f32.mrb[0].mxu0
  %2084 = vdwg.mxu0
  %v2085 = vadd.f32 %v2012, %v2082
  %v2086 = vxor.u32 %v2085, 2147483648
  %v2087 = vmul.f32 %v2086, 1.442695
  %v2088 = vpow.pop %v2087
  %v2089 = vadd.f32 %v2088, 1.0
  %v2090 = vrcp.pop %v2089
  %v2091 = vmul.f32 1.0, %v2090
  %v2092 = vtanh.pop %v2085
  %v2093 = vmul.f32 %v2091, %v2000
  %2095 = vrot.lane.b32.xlu0 %v2092, 64
  %v2096 = vpop.permute.xlu0 %2095
  %v2098 = vmul.f32 %v2091, %v2096
  %2100 = vrot.lane.b32.xlu0 %v2098, 32
  %v2101 = vpop.permute.xlu0 %2100
  %v2103 = vadd.f32 %v2093, %v2101
  %v2104 = vtanh.pop %v2103
  %2106 = vrot.lane.b32.xlu0 %v2104, 64
  %v2107 = vpop.permute.xlu0 %2106
  %v2109 = vmul.f32 %v2091, %v2107
  %2111 = vrot.lane.b32.xlu0 %v2109, 32
  %v2112 = vpop.permute.xlu0 %2111
  %2114 = vst.msk [vmem:[%s665] sm:$0x3] %vm140, %v2112
  %v2115 = vld [vmem:[%s1417] sm:$0x3]
  %v2116 = vsel %vm37, %v2112, 0
  %2118 = vmatprep.subr.mxu0 0.0
  %2119 = vmatpush1.msra.mxu0 %v1495
  %2120 = vmatprep.subr.mxu0 0.0
  %2121 = vmatpush1.msra.mxu0 %v1496
  %2122 = vmatprep.subr.mxu0 0.0
  %2123 = vmatpush1.msra.mxu0 %v1497
  %2124 = vmatprep.subr.mxu0 0.0
  %2125 = vmatpush1.msra.mxu0 %v1498
  %2126 = vmatprep.subr.mxu0 0.0
  %2127 = vmatpush1.msra.mxu0 0.0
  %2128 = vmatprep.subr.mxu0 0.0
  %2129 = vmatpush1.msra.mxu0 0.0
  %2130 = vmatprep.subr.mxu0 0.0
  %2131 = vmatpush1.msra.mxu0 0.0
  %2132 = vmatprep.subr.mxu0 0.0
  %2133 = vmatpush1.msra.mxu0 0.0
  %2134 = vmatprep.subr.mxu0 0.0
  %2135 = vmatpush1.msra.mxu0 0.0
  %2136 = vmatprep.subr.mxu0 0.0
  %2137 = vmatpush1.msra.mxu0 0.0
  %2138 = vmatprep.subr.mxu0 0.0
  %2139 = vmatpush1.msra.mxu0 0.0
  %2140 = vmatprep.subr.mxu0 0.0
  %2141 = vmatpush1.msra.mxu0 0.0
  %2142 = vmatprep.subr.mxu0 0.0
  %2143 = vmatpush1.msra.mxu0 0.0
  %2144 = vmatprep.subr.mxu0 0.0
  %2145 = vmatpush1.msra.mxu0 0.0
  %2146 = vmatprep.subr.mxu0 0.0
  %2147 = vmatpush1.msra.mxu0 0.0
  %2148 = vmatprep.subr.mxu0 0.0
  %2149 = vmatpush1.msra.mxu0 0.0
  %2150 = vmatprep.subr.mxu0 0.0
  %2151 = vmatpush1.msra.mxu0 0.0
  %2152 = vmatprep.subr.mxu0 0.0
  %2153 = vmatpush1.msra.mxu0 0.0
  %2154 = vmatprep.subr.mxu0 0.0
  %2155 = vmatpush1.msra.mxu0 0.0
  %2156 = vmatprep.subr.mxu0 0.0
  %2157 = vmatpush1.msra.mxu0 0.0
  %2158 = vmatprep.subr.mxu0 0.0
  %2159 = vmatpush1.msra.mxu0 0.0
  %2160 = vmatprep.subr.mxu0 0.0
  %2161 = vmatpush1.msra.mxu0 0.0
  %2162 = vmatprep.subr.mxu0 0.0
  %2163 = vmatpush1.msra.mxu0 0.0
  %2164 = vmatprep.subr.mxu0 0.0
  %2165 = vmatpush1.msra.mxu0 0.0
  %2166 = vmatprep.subr.mxu0 0.0
  %2167 = vmatpush1.msra.mxu0 0.0
  %2168 = vmatprep.subr.mxu0 0.0
  %2169 = vmatpush1.msra.mxu0 0.0
  %2170 = vmatprep.subr.mxu0 0.0
  %2171 = vmatpush1.msra.mxu0 0.0
  %2172 = vmatprep.subr.mxu0 0.0
  %2173 = vmatpush1.msra.mxu0 0.0
  %2174 = vmatprep.subr.mxu0 0.0
  %2175 = vmatpush1.msra.mxu0 0.0
  %2176 = vmatprep.subr.mxu0 0.0
  %2177 = vmatpush1.msra.mxu0 0.0
  %2178 = vmatprep.subr.mxu0 0.0
  %2179 = vmatpush1.msra.mxu0 0.0
  %2180 = vmatprep.subr.mxu0 0.0
  %2181 = vmatpush1.msra.mxu0 0.0
  %2182 = vmatprep.mubr.f32.mxu0 0.0
  %2183 = vmatmul.mubr.f32.gmra.mrb[0].mxu0 %v2116
  %v2184 = vpop.f32.mrb[0].mxu0
  %v2185 = vadd.f32 0.0, %v2184
  %v2186 = vpop.f32.mrb[0].mxu0
  %2187 = vdwg.mxu0
  %v2188 = vadd.f32 %v2115, %v2185
  %v2189 = vxor.u32 %v2188, 2147483648
  %v2190 = vmul.f32 %v2189, 1.442695
  %v2191 = vpow.pop %v2190
  %v2192 = vadd.f32 %v2191, 1.0
  %v2193 = vrcp.pop %v2192
  %v2194 = vmul.f32 1.0, %v2193
  %v2195 = vtanh.pop %v2188
  %v2196 = vmul.f32 %v2194, %v2103
  %2198 = vrot.lane.b32.xlu0 %v2195, 64
  %v2199 = vpop.permute.xlu0 %2198
  %v2201 = vmul.f32 %v2194, %v2199
  %2203 = vrot.lane.b32.xlu0 %v2201, 32
  %v2204 = vpop.permute.xlu0 %2203
  %v2206 = vadd.f32 %v2196, %v2204
  %v2207 = vtanh.pop %v2206
  %2209 = vrot.lane.b32.xlu0 %v2207, 64
  %v2210 = vpop.permute.xlu0 %2209
  %v2212 = vmul.f32 %v2194, %v2210
  %2214 = vrot.lane.b32.xlu0 %v2212, 32
  %v2215 = vpop.permute.xlu0 %2214
  %2217 = vst.msk [vmem:[%s770] sm:$0x3] %vm140, %v2215
  %v2218 = vld [vmem:[%s1493] sm:$0x3]
  %v2219 = vsel %vm37, %v2215, 0
  %2221 = vmatprep.subr.mxu0 0.0
  %2222 = vmatpush1.msra.mxu0 %v1495
  %2223 = vmatprep.subr.mxu0 0.0
  %2224 = vmatpush1.msra.mxu0 %v1496
  %2225 = vmatprep.subr.mxu0 0.0
  %2226 = vmatpush1.msra.mxu0 %v1497
  %2227 = vmatprep.subr.mxu0 0.0
  %2228 = vmatpush1.msra.mxu0 %v1498
  %2229 = vmatprep.subr.mxu0 0.0
  %2230 = vmatpush1.msra.mxu0 0.0
  %2231 = vmatprep.subr.mxu0 0.0
  %2232 = vmatpush1.msra.mxu0 0.0
  %2233 = vmatprep.subr.mxu0 0.0
  %2234 = vmatpush1.msra.mxu0 0.0
  %2235 = vmatprep.subr.mxu0 0.0
  %2236 = vmatpush1.msra.mxu0 0.0
  %2237 = vmatprep.subr.mxu0 0.0
  %2238 = vmatpush1.msra.mxu0 0.0
  %2239 = vmatprep.subr.mxu0 0.0
  %2240 = vmatpush1.msra.mxu0 0.0
  %2241 = vmatprep.subr.mxu0 0.0
  %2242 = vmatpush1.msra.mxu0 0.0
  %2243 = vmatprep.subr.mxu0 0.0
  %2244 = vmatpush1.msra.mxu0 0.0
  %2245 = vmatprep.subr.mxu0 0.0
  %2246 = vmatpush1.msra.mxu0 0.0
  %2247 = vmatprep.subr.mxu0 0.0
  %2248 = vmatpush1.msra.mxu0 0.0
  %2249 = vmatprep.subr.mxu0 0.0
  %2250 = vmatpush1.msra.mxu0 0.0
  %2251 = vmatprep.subr.mxu0 0.0
  %2252 = vmatpush1.msra.mxu0 0.0
  %2253 = vmatprep.subr.mxu0 0.0
  %2254 = vmatpush1.msra.mxu0 0.0
  %2255 = vmatprep.subr.mxu0 0.0
  %2256 = vmatpush1.msra.mxu0 0.0
  %2257 = vmatprep.subr.mxu0 0.0
  %2258 = vmatpush1.msra.mxu0 0.0
  %2259 = vmatprep.subr.mxu0 0.0
  %2260 = vmatpush1.msra.mxu0 0.0
  %2261 = vmatprep.subr.mxu0 0.0
  %2262 = vmatpush1.msra.mxu0 0.0
  %2263 = vmatprep.subr.mxu0 0.0
  %2264 = vmatpush1.msra.mxu0 0.0
  %2265 = vmatprep.subr.mxu0 0.0
  %2266 = vmatpush1.msra.mxu0 0.0
  %2267 = vmatprep.subr.mxu0 0.0
  %2268 = vmatpush1.msra.mxu0 0.0
  %2269 = vmatprep.subr.mxu0 0.0
  %2270 = vmatpush1.msra.mxu0 0.0
  %2271 = vmatprep.subr.mxu0 0.0
  %2272 = vmatpush1.msra.mxu0 0.0
  %2273 = vmatprep.subr.mxu0 0.0
  %2274 = vmatpush1.msra.mxu0 0.0
  %2275 = vmatprep.subr.mxu0 0.0
  %2276 = vmatpush1.msra.mxu0 0.0
  %2277 = vmatprep.subr.mxu0 0.0
  %2278 = vmatpush1.msra.mxu0 0.0
  %2279 = vmatprep.subr.mxu0 0.0
  %2280 = vmatpush1.msra.mxu0 0.0
  %2281 = vmatprep.subr.mxu0 0.0
  %2282 = vmatpush1.msra.mxu0 0.0
  %2283 = vmatprep.subr.mxu0 0.0
  %2284 = vmatpush1.msra.mxu0 0.0
  %2285 = vmatprep.mubr.f32.mxu0 0.0
  %2286 = vmatmul.mubr.f32.gmra.mrb[0].mxu0 %v2219
  %v2287 = vpop.f32.mrb[0].mxu0
  %v2288 = vadd.f32 0.0, %v2287
  %v2289 = vpop.f32.mrb[0].mxu0
  %2290 = vdwg.mxu0
  %v2291 = vadd.f32 %v2218, %v2288
  %v2292 = vxor.u32 %v2291, 2147483648
  %v2293 = vmul.f32 %v2292, 1.442695
  %v2294 = vpow.pop %v2293
  %v2295 = vadd.f32 %v2294, 1.0
  %v2296 = vrcp.pop %v2295
  %v2297 = vmul.f32 1.0, %v2296
  %v2298 = vtanh.pop %v2291
  %v2299 = vmul.f32 %v2297, %v2206
  %2301 = vrot.lane.b32.xlu0 %v2298, 64
  %v2302 = vpop.permute.xlu0 %2301
  %v2304 = vmul.f32 %v2297, %v2302
  %2306 = vrot.lane.b32.xlu0 %v2304, 32
  %v2307 = vpop.permute.xlu0 %2306
  %v2309 = vadd.f32 %v2299, %v2307
  %v2310 = vtanh.pop %v2309
  %2312 = vrot.lane.b32.xlu0 %v2310, 64
  %v2313 = vpop.permute.xlu0 %2312
  %v2315 = vmul.f32 %v2297, %v2313
  %2317 = vrot.lane.b32.xlu0 %v2315, 32
  %v2318 = vpop.permute.xlu0 %2317
  %2320 = vst.msk [vmem:[%s875] sm:$0x3] %vm140, %v2318
  %v2321 = vld [vmem:[%s5] sm:$0xff]
  %v2322 = vld [vmem:[%s5 + $0x8] sm:$0xff]
  %v2323 = vld [vmem:[%s5 + $0x10] sm:$0xff]
  %v2324 = vld [vmem:[%s5 + $0x18] sm:$0xff]
  %v2325 = vld [vmem:[%s6] sm:$0x1]
  %v2327 = vlaneseq
  %v2328 = vshrl.u32 %v2327, 7
  %v2329 = vsub.s32 0, %v2328
  %v2330 = vrot.slane %v2325, %v2329
  %v2332 = vsel %vm37, %v2318, 0
  %2334 = vmatprep.subr.mxu0 0.0
  %2335 = vmatpush1.msra.mxu0 %v2321
  %2336 = vmatprep.subr.mxu0 0.0
  %2337 = vmatpush1.msra.mxu0 %v2322
  %2338 = vmatprep.subr.mxu0 0.0
  %2339 = vmatpush1.msra.mxu0 %v2323
  %2340 = vmatprep.subr.mxu0 0.0
  %2341 = vmatpush1.msra.mxu0 %v2324
  %2342 = vmatprep.subr.mxu0 0.0
  %2343 = vmatpush1.msra.mxu0 0.0
  %2344 = vmatprep.subr.mxu0 0.0
  %2345 = vmatpush1.msra.mxu0 0.0
  %2346 = vmatprep.subr.mxu0 0.0
  %2347 = vmatpush1.msra.mxu0 0.0
  %2348 = vmatprep.subr.mxu0 0.0
  %2349 = vmatpush1.msra.mxu0 0.0
  %2350 = vmatprep.subr.mxu0 0.0
  %2351 = vmatpush1.msra.mxu0 0.0
  %2352 = vmatprep.subr.mxu0 0.0
  %2353 = vmatpush1.msra.mxu0 0.0
  %2354 = vmatprep.subr.mxu0 0.0
  %2355 = vmatpush1.msra.mxu0 0.0
  %2356 = vmatprep.subr.mxu0 0.0
  %2357 = vmatpush1.msra.mxu0 0.0
  %2358 = vmatprep.subr.mxu0 0.0
  %2359 = vmatpush1.msra.mxu0 0.0
  %2360 = vmatprep.subr.mxu0 0.0
  %2361 = vmatpush1.msra.mxu0 0.0
  %2362 = vmatprep.subr.mxu0 0.0
  %2363 = vmatpush1.msra.mxu0 0.0
  %2364 = vmatprep.subr.mxu0 0.0
  %2365 = vmatpush1.msra.mxu0 0.0
  %2366 = vmatprep.subr.mxu0 0.0
  %2367 = vmatpush1.msra.mxu0 0.0
  %2368 = vmatprep.subr.mxu0 0.0
  %2369 = vmatpush1.msra.mxu0 0.0
  %2370 = vmatprep.subr.mxu0 0.0
  %2371 = vmatpush1.msra.mxu0 0.0
  %2372 = vmatprep.subr.mxu0 0.0
  %2373 = vmatpush1.msra.mxu0 0.0
  %2374 = vmatprep.subr.mxu0 0.0
  %2375 = vmatpush1.msra.mxu0 0.0
  %2376 = vmatprep.subr.mxu0 0.0
  %2377 = vmatpush1.msra.mxu0 0.0
  %2378 = vmatprep.subr.mxu0 0.0
  %2379 = vmatpush1.msra.mxu0 0.0
  %2380 = vmatprep.subr.mxu0 0.0
  %2381 = vmatpush1.msra.mxu0 0.0
  %2382 = vmatprep.subr.mxu0 0.0
  %2383 = vmatpush1.msra.mxu0 0.0
  %2384 = vmatprep.subr.mxu0 0.0
  %2385 = vmatpush1.msra.mxu0 0.0
  %2386 = vmatprep.subr.mxu0 0.0
  %2387 = vmatpush1.msra.mxu0 0.0
  %2388 = vmatprep.subr.mxu0 0.0
  %2389 = vmatpush1.msra.mxu0 0.0
  %2390 = vmatprep.subr.mxu0 0.0
  %2391 = vmatpush1.msra.mxu0 0.0
  %2392 = vmatprep.subr.mxu0 0.0
  %2393 = vmatpush1.msra.mxu0 0.0
  %2394 = vmatprep.subr.mxu0 0.0
  %2395 = vmatpush1.msra.mxu0 0.0
  %2396 = vmatprep.subr.mxu0 0.0
  %2397 = vmatpush1.msra.mxu0 0.0
  %2398 = vmatprep.mubr.f32.mxu0 0.0
  %2399 = vmatmul.mubr.f32.gmra.mrb[0].mxu0 %v2332
  %v2400 = vpop.f32.mrb[0].mxu0
  %v2401 = vadd.f32 %v2330, %v2400
  %v2402 = vpop.f32.mrb[0].mxu0
  %2403 = vdwg.mxu0
  %v2404 = vmax.f32 %v2401, 0.0
  %v2405 = vld [vmem:[%s7] sm:$0xff]
  %v2406 = vld [vmem:[%s7 + $0x8] sm:$0xff]
  %v2407 = vld [vmem:[%s7 + $0x10] sm:$0xff]
  %v2408 = vld [vmem:[%s7 + $0x18] sm:$0xff]
  %v2409 = vld [vmem:[%s8] sm:$0x1]
  %v2411 = vlaneseq
  %v2412 = vshrl.u32 %v2411, 7
  %v2413 = vsub.s32 0, %v2412
  %v2414 = vrot.slane %v2409, %v2413
  %v2417 = vsel %vm37, %v2404, 0
  %2419 = vmatprep.subr.mxu0 0.0
  %2420 = vmatpush1.msra.mxu0 %v2405
  %2421 = vmatprep.subr.mxu0 0.0
  %2422 = vmatpush1.msra.mxu0 %v2406
  %2423 = vmatprep.subr.mxu0 0.0
  %2424 = vmatpush1.msra.mxu0 %v2407
  %2425 = vmatprep.subr.mxu0 0.0
  %2426 = vmatpush1.msra.mxu0 %v2408
  %2427 = vmatprep.subr.mxu0 0.0
  %2428 = vmatpush1.msra.mxu0 0.0
  %2429 = vmatprep.subr.mxu0 0.0
  %2430 = vmatpush1.msra.mxu0 0.0
  %2431 = vmatprep.subr.mxu0 0.0
  %2432 = vmatpush1.msra.mxu0 0.0
  %2433 = vmatprep.subr.mxu0 0.0
  %2434 = vmatpush1.msra.mxu0 0.0
  %2435 = vmatprep.subr.mxu0 0.0
  %2436 = vmatpush1.msra.mxu0 0.0
  %2437 = vmatprep.subr.mxu0 0.0
  %2438 = vmatpush1.msra.mxu0 0.0
  %2439 = vmatprep.subr.mxu0 0.0
  %2440 = vmatpush1.msra.mxu0 0.0
  %2441 = vmatprep.subr.mxu0 0.0
  %2442 = vmatpush1.msra.mxu0 0.0
  %2443 = vmatprep.subr.mxu0 0.0
  %2444 = vmatpush1.msra.mxu0 0.0
  %2445 = vmatprep.subr.mxu0 0.0
  %2446 = vmatpush1.msra.mxu0 0.0
  %2447 = vmatprep.subr.mxu0 0.0
  %2448 = vmatpush1.msra.mxu0 0.0
  %2449 = vmatprep.subr.mxu0 0.0
  %2450 = vmatpush1.msra.mxu0 0.0
  %2451 = vmatprep.subr.mxu0 0.0
  %2452 = vmatpush1.msra.mxu0 0.0
  %2453 = vmatprep.subr.mxu0 0.0
  %2454 = vmatpush1.msra.mxu0 0.0
  %2455 = vmatprep.subr.mxu0 0.0
  %2456 = vmatpush1.msra.mxu0 0.0
  %2457 = vmatprep.subr.mxu0 0.0
  %2458 = vmatpush1.msra.mxu0 0.0
  %2459 = vmatprep.subr.mxu0 0.0
  %2460 = vmatpush1.msra.mxu0 0.0
  %2461 = vmatprep.subr.mxu0 0.0
  %2462 = vmatpush1.msra.mxu0 0.0
  %2463 = vmatprep.subr.mxu0 0.0
  %2464 = vmatpush1.msra.mxu0 0.0
  %2465 = vmatprep.subr.mxu0 0.0
  %2466 = vmatpush1.msra.mxu0 0.0
  %2467 = vmatprep.subr.mxu0 0.0
  %2468 = vmatpush1.msra.mxu0 0.0
  %2469 = vmatprep.subr.mxu0 0.0
  %2470 = vmatpush1.msra.mxu0 0.0
  %2471 = vmatprep.subr.mxu0 0.0
  %2472 = vmatpush1.msra.mxu0 0.0
  %2473 = vmatprep.subr.mxu0 0.0
  %2474 = vmatpush1.msra.mxu0 0.0
  %2475 = vmatprep.subr.mxu0 0.0
  %2476 = vmatpush1.msra.mxu0 0.0
  %2477 = vmatprep.subr.mxu0 0.0
  %2478 = vmatpush1.msra.mxu0 0.0
  %2479 = vmatprep.subr.mxu0 0.0
  %2480 = vmatpush1.msra.mxu0 0.0
  %2481 = vmatprep.subr.mxu0 0.0
  %2482 = vmatpush1.msra.mxu0 0.0
  %2483 = vmatprep.mubr.f32.mxu0 0.0
  %2484 = vmatmul.mubr.f32.gmra.mrb[0].mxu0 %v2417
  %v2485 = vpop.f32.mrb[0].mxu0
  %v2486 = vadd.f32 %v2414, %v2485
  %v2487 = vpop.f32.mrb[0].mxu0
  %2488 = vdwg.mxu0
  %2489 = vst [vmem:[%s9] sm:$0x3] %v2486
  // Predicated region
  $region38: #{lstm_forecaster_forward.1} parent=0 // pred_check
    _
  $region39: #{lstm_forecaster_forward.1} parent=0 // pred_check_branch
    %2491 = sbr.rel (0) target = $region41
  $region40: #{lstm_forecaster_forward.1} parent=0 // pred_region
    _
  $region41: #{lstm_forecaster_forward.1} parent=0 // pred_fallthru
    _
  // Predicated region
  $region42: #{lstm_forecaster_forward.1} parent=0 // pred_check
    _
  $region43: #{lstm_forecaster_forward.1} parent=0 // pred_check_branch
    %2493 = sbr.rel (0) target = $region45
  $region44: #{lstm_forecaster_forward.1} parent=0 // pred_region
    _
  $region45: #{lstm_forecaster_forward.1} parent=0 // pred_fallthru
    _

</llo_original>
